<compile_context>
chip_gen: v5e
topology: v5e:2x2
jax: 0.10.0
libtpu: 0.0.40
codegen_flags: <defaults>
</compile_context>

<pallas_src>
import jax
import jax.numpy as jnp
from jax.experimental import pallas as pl
from jax.experimental.pallas import tpu as pltpu


# ----------------------------- Pallas kernel --------------------------------

def pointnet_kernel(x_ref,
                    w1, w2, w3, w4, fw1, fw2, fw3,
                    b_ref,
                    out_ref):
    """One batch block: shared per-point MLPs -> per-sample max pool -> FC head.

    x_ref:   (TB, CP, N)     bf16  input, channels zero-padded 3->CP, points on lanes
    w*:      (Cin, Cout)     bf16  BN folded; w1 padded to CP rows, fw3 padded to
                                   NC_PAD output columns (zeros)
    b_ref:   (7, 256)        f32   row i = bias of layer i, zero-padded
    out_ref: (1, TB, NC_PAD) f32   lane-dense padded logits
    """
    TB, CP, N = x_ref.shape

    # Prologue relayout in bf16 (halves the XLU / vreg traffic vs f32).
    xt = jnp.transpose(x_ref[...], (0, 2, 1))      # (TB, N, CP)
    x2 = xt.reshape(TB * N, CP)                    # (TB*N, CP)

    def mlp(a, w_ref, layer_idx, relu=True):
        c = w_ref.shape[1]
        y = jnp.dot(a, w_ref[...], preferred_element_type=jnp.float32)
        y = y + b_ref[layer_idx:layer_idx + 1, 0:c]
        if relu:
            y = jnp.maximum(y, 0.0)
        return y

    # Layer 1 on the (otherwise idle) MXU with K = CP, instead of lane-sparse
    # column slices + broadcast FMAs on the VPU.
    h = mlp(x2, w1, 0).astype(jnp.bfloat16)
    h = mlp(h, w2, 1).astype(jnp.bfloat16)
    h = mlp(h, w3, 2).astype(jnp.bfloat16)
    h = mlp(h, w4, 3)                              # keep f32 for the max pool

    # Symmetric function: per-sample global max-pool over the N points.
    c4 = w4.shape[1]
    g = jnp.max(h.reshape(TB, N, c4), axis=1)      # (TB, c4) f32
    g = g.astype(jnp.bfloat16)

    # FC classification head (last layer padded to a lane-dense NC_PAD width).
    f = mlp(g, fw1, 4).astype(jnp.bfloat16)
    f = mlp(f, fw2, 5).astype(jnp.bfloat16)
    out_ref[0] = mlp(f, fw3, 6, relu=False)        # (TB, NC_PAD) f32


# ------------------------------ Parameters -----------------------------------

def _fold_bn(w, b, gamma, beta, mean, var, eps=1e-5):
    """Fold inference-mode BatchNorm into a linear layer.

    w: (C_in, C_out);  b/gamma/beta/mean/var: (C_out,)
    y = gamma * ((x@w + b) - mean) / sqrt(var + eps) + beta
    """
    scale = gamma / jnp.sqrt(var + eps)
    return w * scale[None, :], (b - mean) * scale + beta


def init_params(key, dims=(3, 64, 64, 128, 256, 128, 64, 40)):
    """Synthetic PointNet parameters with BN pre-folded.

    Layers 0..5 are (conv/fc + BN + ReLU); the last layer is plain linear.
    Returns (weights_tuple_bf16, biases_f32[(n_layers, max_width)]).
    """
    n_layers = len(dims) - 1
    max_c = max(dims[1:])
    weights, bias_rows = [], []
    for li, (cin, cout) in enumerate(zip(dims[:-1], dims[1:])):
        key, kw, kb, kg, kbe, km, kv = jax.random.split(key, 7)
        w = jax.random.normal(kw, (cin, cout), jnp.float32) / jnp.sqrt(cin)
        b = 0.02 * jax.random.normal(kb, (cout,), jnp.float32)
        if li < n_layers - 1:  # has BatchNorm
            gamma = 1.0 + 0.1 * jax.random.normal(kg, (cout,), jnp.float32)
            beta = 0.1 * jax.random.normal(kbe, (cout,), jnp.float32)
            mean = 0.1 * jax.random.normal(km, (cout,), jnp.float32)
            var = 1.0 + 0.1 * jax.random.uniform(kv, (cout,), jnp.float32)
            w, b = _fold_bn(w, b, gamma, beta, mean, var)
        weights.append(w.astype(jnp.bfloat16))
        bias_rows.append(jnp.pad(b, (0, max_c - cout)).astype(jnp.float32))
    biases = jnp.stack(bias_rows, axis=0)  # (n_layers, max_c)
    return tuple(weights), biases


# -------------------- Generation-aware grid / VMEM sizing ---------------------

# Conservative live-activation estimate per (sample, point): bf16 layer inputs
# plus the f32 matmul outputs before downcast, with scheduling slack.
_ACT_BYTES_PER_POINT = 3072


def _device_info():
    """(tensorcores_per_chip, physical VMEM bytes per TensorCore)."""
    try:
        kind = jax.devices()[0].device_kind.lower()
    except Exception:
        return 1, 64 << 20
    if "v7" in kind:
        return 2, 64 << 20                      # 2 TCs, 64 MiB VMEM each
    if any(tag in kind for tag in ("v4", "v5", "v6")):
        return 1, 128 << 20                     # single TC, 128 MiB VMEM
    return 1, 64 << 20                          # unknown: be conservative


def _pick_tb(B, N, cores, vmem_cap, fixed_bytes):
    """Batch-block size: as large as the VMEM budget allows; split across
    TensorCores only when there is enough work to pay for it (v7x)."""
    x_bytes_per_point = 2 * 8 * 2               # double-buffered padded bf16 tile
    budget = int(0.6 * vmem_cap) - fixed_bytes
    per_point = _ACT_BYTES_PER_POINT + x_bytes_per_point
    max_points = max(N, budget // per_point)
    max_tb = max(1, max_points // N)
    if cores >= 2 and B >= 2 and B * N >= 32 * 1024:
        target = -(-B // 2)                     # grid >= 2: megacore split pays off
    else:
        target = B                              # single step: no split overhead
    return max(1, min(target, max_tb, B))


# ------------------------------ JAX wrapper ----------------------------------

def meshnet_forward(x_bcn, weights, biases):
    """x_bcn: (B, 3, N) float point cloud (PyTorch layout). Returns (B, classes)."""
    B, C, N = x_bcn.shape
    w1, w2, w3, w4, fw1, fw2, fw3 = weights
    num_classes = fw3.shape[1]

    # Pad layer-1 input channels (3 -> CP) so layer 1 runs as one MXU dot, and
    # pad the final layer's output columns so the kernel output is lane-dense.
    CP = max(8, -(-C // 8) * 8)
    NC_PAD = -(-num_classes // 128) * 128
    w1p = jnp.pad(w1, ((0, CP - C), (0, 0)))
    fw3p = jnp.pad(fw3, ((0, 0), (0, NC_PAD - num_classes)))
    kweights = (w1p, w2, w3, w4, fw1, fw2, fw3p)

    # Generation-aware block / grid sizing.
    cores, vmem_cap = _device_info()
    w_bytes = sum(int(w.size) * 2 for w in kweights)
    b_bytes = int(biases.size) * 4
    fixed_bytes = 2 * (w_bytes + b_bytes) + (1 << 20)   # weights/bias + slack
    TB = _pick_tb(B, N, cores, vmem_cap, fixed_bytes)
    G = -(-B // TB)
    B_pad = G * TB

    # Single fused wrapper prep op: channel pad (required for the MXU layer-1),
    # batch pad to a TB multiple, and the bf16 cast (halves the tile DMA).
    x_in = jnp.pad(x_bcn.astype(jnp.bfloat16),
                   ((0, B_pad - B), (0, CP - C), (0, 0)))     # (B_pad, CP, N)

    def full_spec(arr):
        zeros = (0,) * arr.ndim

        def imap(b, z=zeros):
            return z

        # Weight / bias blocks are grid-invariant (same index every step), so
        # Pallas only DMAs them once; explicit single-buffering is not needed.
        return pl.BlockSpec(arr.shape, imap)

    in_specs = [pl.BlockSpec((TB, CP, N), lambda b: (b, 0, 0))]
    in_specs += [full_spec(w) for w in kweights]
    in_specs += [full_spec(biases)]

    # VMEM budget from the actual footprint (generation-aware), with headroom.
    needed = (2 * (w_bytes + b_bytes)
              + 2 * TB * CP * N * 2               # double-buffered input tile
              + 2 * TB * NC_PAD * 4               # double-buffered output tile
              + TB * N * _ACT_BYTES_PER_POINT)    # live activations
    vmem_limit = int(min(vmem_cap - (8 << 20),
                         max(needed + (4 << 20), 32 << 20)))

    # Advisory cost estimate for XLA scheduling around the custom call.
    pt_dims = [CP, w1p.shape[1], w2.shape[1], w3.shape[1], w4.shape[1]]
    hd_dims = [w4.shape[1], fw1.shape[1], fw2.shape[1], NC_PAD]
    flops = 2 * B_pad * N * sum(a * b for a, b in zip(pt_dims[:-1], pt_dims[1:]))
    flops += 2 * B_pad * sum(a * b for a, b in zip(hd_dims[:-1], hd_dims[1:]))
    bytes_accessed = (int(x_in.size) * 2 + w_bytes + b_bytes
                      + B_pad * NC_PAD * 4)

    out = pl.pallas_call(
        pointnet_kernel,
        out_shape=jax.ShapeDtypeStruct((G, TB, NC_PAD), jnp.float32),
        grid_spec=pltpu.PrefetchScalarGridSpec(
            num_scalar_prefetch=0,
            grid=(G,),
            in_specs=in_specs,
            out_specs=pl.BlockSpec((1, TB, NC_PAD), lambda b: (b, 0, 0)),
        ),
        compiler_params=pltpu.CompilerParams(
            dimension_semantics=("parallel",),
            vmem_limit_bytes=vmem_limit,
        ),
        cost_estimate=pl.CostEstimate(
            flops=int(flops), transcendentals=0,
            bytes_accessed=int(bytes_accessed)),
    )(x_in, *kweights, biases)

    # Drop the batch / class padding.
    return out.reshape(B_pad, NC_PAD)[:B, :num_classes]


# ------------------------------ Reference ------------------------------------

def reference_forward(x_bcn, weights, biases):
    """Pure-JAX mirror of the kernel math (same bf16/f32 mixed precision)."""
    w1, w2, w3, w4, fw1, fw2, fw3 = weights
    x = jnp.transpose(x_bcn.astype(jnp.bfloat16), (0, 2, 1))   # (B, N, 3) bf16

    def lin(a, w, i, relu=True):
        c = w.shape[1]
        y = jnp.dot(a.astype(jnp.bfloat16), w,
                    preferred_element_type=jnp.float32) + biases[i, :c]
        return jnp.maximum(y, 0.0) if relu else y

    h = lin(x, w1, 0)
    h = lin(h, w2, 1)
    h = lin(h, w3, 2)
    h = lin(h, w4, 3)
    g = jnp.max(h, axis=1)                 # (B, 256)
    f = lin(g, fw1, 4)
    f = lin(f, fw2, 5)
    return lin(f, fw3, 6, relu=False)      # (B, num_classes)


if __name__ == "__main__":
    key = jax.random.PRNGKey(0)
    k_x, k_p = jax.random.split(key)

    B, C_IN, N_POINTS = 8, 3, 128
    x = jax.random.normal(k_x, (B, C_IN, N_POINTS), jnp.float32)

    weights, biases = init_params(k_p)

    fwd = jax.jit(meshnet_forward)
    pred = fwd(x, weights, biases)
    jax.block_until_ready(pred)

    ref = reference_forward(x, weights, biases)
    assert pred.shape == ref.shape == (B, 40)
    max_err = float(jnp.max(jnp.abs(pred - ref)))
    assert jnp.allclose(pred, ref, atol=1e-2, rtol=1e-2), \
        f"mismatch vs reference (max abs err = {max_err})"

    print("KERNEL_OK")
</pallas_src>

<mosaic_0001>
module attributes {stable_mosaic.version = 11 : i64} {
  func.func @pointnet_kernel(%arg0: i32, %arg1: memref<8x8x128xbf16, #tpu.memory_space<vmem>>, %arg2: memref<8x64xbf16, #tpu.memory_space<vmem>>, %arg3: memref<64x64xbf16, #tpu.memory_space<vmem>>, %arg4: memref<64x128xbf16, #tpu.memory_space<vmem>>, %arg5: memref<128x256xbf16, #tpu.memory_space<vmem>>, %arg6: memref<256x128xbf16, #tpu.memory_space<vmem>>, %arg7: memref<128x64xbf16, #tpu.memory_space<vmem>>, %arg8: memref<64x128xbf16, #tpu.memory_space<vmem>>, %arg9: memref<7x256xf32, #tpu.memory_space<vmem>>, %arg10: memref<1x8x128xf32, #tpu.memory_space<vmem>>) attributes {dimension_semantics = [#tpu.dimension_semantics<parallel>], iteration_bounds = array<i64: 1>, scalar_prefetch = 0 : i64, scratch_operands = 0 : i64, tpu.core_type = #tpu.core_type<tc>, window_params = [{transform_indices = @transform_0, window_bounds = array<i64: 8, 8, 128>}, {pipeline_mode = #tpu.pipeline_mode<synchronous>, transform_indices = @transform_1, window_bounds = array<i64: 8, 64>}, {pipeline_mode = #tpu.pipeline_mode<synchronous>, transform_indices = @transform_2, window_bounds = array<i64: 64, 64>}, {pipeline_mode = #tpu.pipeline_mode<synchronous>, transform_indices = @transform_3, window_bounds = array<i64: 64, 128>}, {pipeline_mode = #tpu.pipeline_mode<synchronous>, transform_indices = @transform_4, window_bounds = array<i64: 128, 256>}, {pipeline_mode = #tpu.pipeline_mode<synchronous>, transform_indices = @transform_5, window_bounds = array<i64: 256, 128>}, {pipeline_mode = #tpu.pipeline_mode<synchronous>, transform_indices = @transform_6, window_bounds = array<i64: 128, 64>}, {pipeline_mode = #tpu.pipeline_mode<synchronous>, transform_indices = @transform_7, window_bounds = array<i64: 64, 128>}, {pipeline_mode = #tpu.pipeline_mode<synchronous>, transform_indices = @transform_8, window_bounds = array<i64: 7, 256>}, {transform_indices = @transform_9, window_bounds = array<i64: 1, 8, 128>}]} {
    %c0 = arith.constant 0 : index
    %c0_0 = arith.constant 0 : index
    %c0_1 = arith.constant 0 : index
    %0 = vector.load %arg1[%c0, %c0_0, %c0_1] : memref<8x8x128xbf16, #tpu.memory_space<vmem>>, vector<8x8x128xbf16>
    %1 = tpu.transpose %0, [0, 2, 1] : vector<8x8x128xbf16> -> vector<8x128x8xbf16>
    %2 = vector.shape_cast %1 : vector<8x128x8xbf16> to vector<1024x8xbf16>
    %c0_2 = arith.constant 0 : index
    %c0_3 = arith.constant 0 : index
    %3 = vector.load %arg2[%c0_2, %c0_3] : memref<8x64xbf16, #tpu.memory_space<vmem>>, vector<8x64xbf16>
    %cst = arith.constant dense<0.000000e+00> : vector<1024x64xf32>
    %4 = tpu.matmul %2, %3, %cst {dimension_numbers = #tpu.dot_dimension_numbers<[1], [0], [0], [1], [0, 0, 1, 1], [], []>} : vector<1024x8xbf16>, vector<8x64xbf16>, vector<1024x64xf32> -> vector<1024x64xf32>
    %c0_4 = arith.constant 0 : index
    %c0_5 = arith.constant 0 : index
    %5 = vector.load %arg9[%c0_4, %c0_5] : memref<7x256xf32, #tpu.memory_space<vmem>>, vector<1x64xf32>
    %6 = vector.broadcast %5 : vector<1x64xf32> to vector<1024x64xf32>
    %7 = arith.addf %4, %6 : vector<1024x64xf32>
    %cst_6 = arith.constant 0.000000e+00 : f32
    %8 = vector.broadcast %cst_6 : f32 to vector<1024x64xf32>
    %9 = arith.maximumf %7, %8 : vector<1024x64xf32>
    %10 = arith.truncf %9 : vector<1024x64xf32> to vector<1024x64xbf16>
    %c0_7 = arith.constant 0 : index
    %c0_8 = arith.constant 0 : index
    %11 = vector.load %arg3[%c0_7, %c0_8] : memref<64x64xbf16, #tpu.memory_space<vmem>>, vector<64x64xbf16>
    %cst_9 = arith.constant dense<0.000000e+00> : vector<1024x64xf32>
    %12 = tpu.matmul %10, %11, %cst_9 {dimension_numbers = #tpu.dot_dimension_numbers<[1], [0], [0], [1], [0, 0, 1, 1], [], []>} : vector<1024x64xbf16>, vector<64x64xbf16>, vector<1024x64xf32> -> vector<1024x64xf32>
    %c1 = arith.constant 1 : index
    %c0_10 = arith.constant 0 : index
    %13 = vector.load %arg9[%c1, %c0_10] : memref<7x256xf32, #tpu.memory_space<vmem>>, vector<1x64xf32>
    %14 = vector.broadcast %13 : vector<1x64xf32> to vector<1024x64xf32>
    %15 = arith.addf %12, %14 : vector<1024x64xf32>
    %cst_11 = arith.constant 0.000000e+00 : f32
    %16 = vector.broadcast %cst_11 : f32 to vector<1024x64xf32>
    %17 = arith.maximumf %15, %16 : vector<1024x64xf32>
    %18 = arith.truncf %17 : vector<1024x64xf32> to vector<1024x64xbf16>
    %c0_12 = arith.constant 0 : index
    %c0_13 = arith.constant 0 : index
    %19 = vector.load %arg4[%c0_12, %c0_13] : memref<64x128xbf16, #tpu.memory_space<vmem>>, vector<64x128xbf16>
    %cst_14 = arith.constant dense<0.000000e+00> : vector<1024x128xf32>
    %20 = tpu.matmul %18, %19, %cst_14 {dimension_numbers = #tpu.dot_dimension_numbers<[1], [0], [0], [1], [0, 0, 1, 1], [], []>} : vector<1024x64xbf16>, vector<64x128xbf16>, vector<1024x128xf32> -> vector<1024x128xf32>
    %c2 = arith.constant 2 : index
    %c0_15 = arith.constant 0 : index
    %21 = vector.load %arg9[%c2, %c0_15] : memref<7x256xf32, #tpu.memory_space<vmem>>, vector<1x128xf32>
    %22 = vector.broadcast %21 : vector<1x128xf32> to vector<1024x128xf32>
    %23 = arith.addf %20, %22 : vector<1024x128xf32>
    %cst_16 = arith.constant 0.000000e+00 : f32
    %24 = vector.broadcast %cst_16 : f32 to vector<1024x128xf32>
    %25 = arith.maximumf %23, %24 : vector<1024x128xf32>
    %26 = arith.truncf %25 : vector<1024x128xf32> to vector<1024x128xbf16>
    %c0_17 = arith.constant 0 : index
    %c0_18 = arith.constant 0 : index
    %27 = vector.load %arg5[%c0_17, %c0_18] : memref<128x256xbf16, #tpu.memory_space<vmem>>, vector<128x256xbf16>
    %cst_19 = arith.constant dense<0.000000e+00> : vector<1024x256xf32>
    %28 = tpu.matmul %26, %27, %cst_19 {dimension_numbers = #tpu.dot_dimension_numbers<[1], [0], [0], [1], [0, 0, 1, 1], [], []>} : vector<1024x128xbf16>, vector<128x256xbf16>, vector<1024x256xf32> -> vector<1024x256xf32>
    %c3 = arith.constant 3 : index
    %c0_20 = arith.constant 0 : index
    %29 = vector.load %arg9[%c3, %c0_20] : memref<7x256xf32, #tpu.memory_space<vmem>>, vector<1x256xf32>
    %30 = vector.broadcast %29 : vector<1x256xf32> to vector<1024x256xf32>
    %31 = arith.addf %28, %30 : vector<1024x256xf32>
    %cst_21 = arith.constant 0.000000e+00 : f32
    %32 = vector.broadcast %cst_21 : f32 to vector<1024x256xf32>
    %33 = arith.maximumf %31, %32 : vector<1024x256xf32>
    %34 = vector.shape_cast %33 : vector<1024x256xf32> to vector<8x128x256xf32>
    %cst_22 = arith.constant dense<0xFF800000> : vector<8x256xf32>
    %35 = vector.multi_reduction <maximumf>, %34, %cst_22 [1] : vector<8x128x256xf32> to vector<8x256xf32>
    %36 = arith.truncf %35 : vector<8x256xf32> to vector<8x256xbf16>
    %c0_23 = arith.constant 0 : index
    %c0_24 = arith.constant 0 : index
    %37 = vector.load %arg6[%c0_23, %c0_24] : memref<256x128xbf16, #tpu.memory_space<vmem>>, vector<256x128xbf16>
    %cst_25 = arith.constant dense<0.000000e+00> : vector<8x128xf32>
    %38 = tpu.matmul %36, %37, %cst_25 {dimension_numbers = #tpu.dot_dimension_numbers<[1], [0], [0], [1], [0, 0, 1, 1], [], []>} : vector<8x256xbf16>, vector<256x128xbf16>, vector<8x128xf32> -> vector<8x128xf32>
    %c4 = arith.constant 4 : index
    %c0_26 = arith.constant 0 : index
    %39 = vector.load %arg9[%c4, %c0_26] : memref<7x256xf32, #tpu.memory_space<vmem>>, vector<1x128xf32>
    %40 = vector.broadcast %39 : vector<1x128xf32> to vector<8x128xf32>
    %41 = arith.addf %38, %40 : vector<8x128xf32>
    %cst_27 = arith.constant 0.000000e+00 : f32
    %42 = vector.broadcast %cst_27 : f32 to vector<8x128xf32>
    %43 = arith.maximumf %41, %42 : vector<8x128xf32>
    %44 = arith.truncf %43 : vector<8x128xf32> to vector<8x128xbf16>
    %c0_28 = arith.constant 0 : index
    %c0_29 = arith.constant 0 : index
    %45 = vector.load %arg7[%c0_28, %c0_29] : memref<128x64xbf16, #tpu.memory_space<vmem>>, vector<128x64xbf16>
    %cst_30 = arith.constant dense<0.000000e+00> : vector<8x64xf32>
    %46 = tpu.matmul %44, %45, %cst_30 {dimension_numbers = #tpu.dot_dimension_numbers<[1], [0], [0], [1], [0, 0, 1, 1], [], []>} : vector<8x128xbf16>, vector<128x64xbf16>, vector<8x64xf32> -> vector<8x64xf32>
    %c5 = arith.constant 5 : index
    %c0_31 = arith.constant 0 : index
    %47 = vector.load %arg9[%c5, %c0_31] : memref<7x256xf32, #tpu.memory_space<vmem>>, vector<1x64xf32>
    %48 = vector.broadcast %47 : vector<1x64xf32> to vector<8x64xf32>
    %49 = arith.addf %46, %48 : vector<8x64xf32>
    %cst_32 = arith.constant 0.000000e+00 : f32
    %50 = vector.broadcast %cst_32 : f32 to vector<8x64xf32>
    %51 = arith.maximumf %49, %50 : vector<8x64xf32>
    %52 = arith.truncf %51 : vector<8x64xf32> to vector<8x64xbf16>
    %c0_33 = arith.constant 0 : index
    %c0_34 = arith.constant 0 : index
    %53 = vector.load %arg8[%c0_33, %c0_34] : memref<64x128xbf16, #tpu.memory_space<vmem>>, vector<64x128xbf16>
    %cst_35 = arith.constant dense<0.000000e+00> : vector<8x128xf32>
    %54 = tpu.matmul %52, %53, %cst_35 {dimension_numbers = #tpu.dot_dimension_numbers<[1], [0], [0], [1], [0, 0, 1, 1], [], []>} : vector<8x64xbf16>, vector<64x128xbf16>, vector<8x128xf32> -> vector<8x128xf32>
    %c6 = arith.constant 6 : index
    %c0_36 = arith.constant 0 : index
    %55 = vector.load %arg9[%c6, %c0_36] : memref<7x256xf32, #tpu.memory_space<vmem>>, vector<1x128xf32>
    %56 = vector.broadcast %55 : vector<1x128xf32> to vector<8x128xf32>
    %57 = arith.addf %54, %56 : vector<8x128xf32>
    %c0_37 = arith.constant 0 : index
    %c0_38 = arith.constant 0 : index
    %c0_39 = arith.constant 0 : index
    %58 = vector.load %arg10[%c0_37, %c0_38, %c0_39] : memref<1x8x128xf32, #tpu.memory_space<vmem>>, vector<1x8x128xf32>
    %59 = vector.shape_cast %58 : vector<1x8x128xf32> to vector<8x128xf32>
    %60 = vector.shape_cast %57 : vector<8x128xf32> to vector<1x8x128xf32>
    tpu.vector_store %arg10[%c0_37, %c0_38, %c0_39], %60 {strides = array<i32>} : memref<1x8x128xf32, #tpu.memory_space<vmem>>, vector<1x8x128xf32>,
    return
  }
  func.func @transform_0(%arg0: i32) -> (i32, i32, i32) {
    %c0_i32 = arith.constant 0 : i32
    %c0_i32_0 = arith.constant 0 : i32
    %c0_i32_1 = arith.constant 0 : i32
    return %arg0, %c0_i32, %c0_i32_0 : i32, i32, i32
  }
  func.func @transform_1(%arg0: i32) -> (i32, i32) {
    %c0_i32 = arith.constant 0 : i32
    %c0_i32_0 = arith.constant 0 : i32
    %c0_i32_1 = arith.constant 0 : i32
    return %c0_i32, %c0_i32_0 : i32, i32
  }
  func.func @transform_2(%arg0: i32) -> (i32, i32) {
    %c0_i32 = arith.constant 0 : i32
    %c0_i32_0 = arith.constant 0 : i32
    %c0_i32_1 = arith.constant 0 : i32
    return %c0_i32, %c0_i32_0 : i32, i32
  }
  func.func @transform_3(%arg0: i32) -> (i32, i32) {
    %c0_i32 = arith.constant 0 : i32
    %c0_i32_0 = arith.constant 0 : i32
    %c0_i32_1 = arith.constant 0 : i32
    return %c0_i32, %c0_i32_0 : i32, i32
  }
  func.func @transform_4(%arg0: i32) -> (i32, i32) {
    %c0_i32 = arith.constant 0 : i32
    %c0_i32_0 = arith.constant 0 : i32
    %c0_i32_1 = arith.constant 0 : i32
    return %c0_i32, %c0_i32_0 : i32, i32
  }
  func.func @transform_5(%arg0: i32) -> (i32, i32) {
    %c0_i32 = arith.constant 0 : i32
    %c0_i32_0 = arith.constant 0 : i32
    %c0_i32_1 = arith.constant 0 : i32
    return %c0_i32, %c0_i32_0 : i32, i32
  }
  func.func @transform_6(%arg0: i32) -> (i32, i32) {
    %c0_i32 = arith.constant 0 : i32
    %c0_i32_0 = arith.constant 0 : i32
    %c0_i32_1 = arith.constant 0 : i32
    return %c0_i32, %c0_i32_0 : i32, i32
  }
  func.func @transform_7(%arg0: i32) -> (i32, i32) {
    %c0_i32 = arith.constant 0 : i32
    %c0_i32_0 = arith.constant 0 : i32
    %c0_i32_1 = arith.constant 0 : i32
    return %c0_i32, %c0_i32_0 : i32, i32
  }
  func.func @transform_8(%arg0: i32) -> (i32, i32) {
    %c0_i32 = arith.constant 0 : i32
    %c0_i32_0 = arith.constant 0 : i32
    %c0_i32_1 = arith.constant 0 : i32
    return %c0_i32, %c0_i32_0 : i32, i32
  }
  func.func @transform_9(%arg0: i32) -> (i32, i32, i32) {
    %c0_i32 = arith.constant 0 : i32
    %c0_i32_0 = arith.constant 0 : i32
    %c0_i32_1 = arith.constant 0 : i32
    return %arg0, %c0_i32, %c0_i32_0 : i32, i32, i32
  }
}

</mosaic_0001>

<llo_original>
// kernel: meshnet_forward.1
$region0: #{meshnet_forward.1}
  #allocation0 [shape = 'u32[]', space=smem, size = 0x4, offset = 0x4, fixed_abs, tag = 'smem constant byte address 0x4 - core index']
  #allocation1 [shape = 'u32[72,128]{1,0:T(1,128)}', space=vmem, size = 0x9000, scoped, tag = 'internal scratch']
  %s0 = inlined_call_operand.vmem [shape: bf16[8,8,128], index: 0, kind: input, shape index: {}]
  %s1 = inlined_call_operand.vmem [shape: bf16[8,64], index: 1, kind: input, shape index: {}]
  %s2 = inlined_call_operand.vmem [shape: bf16[64,64], index: 2, kind: input, shape index: {}]
  %s3 = inlined_call_operand.vmem [shape: bf16[64,128], index: 3, kind: input, shape index: {}]
  %s4 = inlined_call_operand.vmem [shape: bf16[128,256], index: 4, kind: input, shape index: {}]
  %s5 = inlined_call_operand.hbm [shape: bf16[256,128], index: 5, kind: input, shape index: {}]
  %s6 = inlined_call_operand.vmem [shape: bf16[128,64], index: 6, kind: input, shape index: {}]
  %s7 = inlined_call_operand.vmem [shape: bf16[64,128], index: 7, kind: input, shape index: {}]
  %s8 = inlined_call_operand.vmem [shape: f32[7,256], index: 8, kind: input, shape index: {}]
  %s9 = inlined_call_operand.hbm [shape: f32[1,8,128], index: 9, kind: output, shape index: {}]
  %s10 = sld [smem:[#allocation0]]
  $region50: #{meshnet_forward.1} parent=0
    _
  %s12 = ssub.s32 1, %s10
  %s13 = scalar_select 0, %s12, %s10
  $region1: #{meshnet_forward.1} parent=0
    #allocation2 [shape = 'u8[65536]{0}', space=vmem, size = 0x10000, scoped, tag = 'input window, operand 5, single buffered']
    #allocation3 [shape = 's32[1]{0}', space=sflag, size = 0x4, scoped, tag = 'scoped memory for meshnet_forward.1']
    #allocation4 [shape = 's32[1]{0}', space=sflag, size = 0x4, scoped, tag = 'scoped memory for meshnet_forward.1']
    #allocation5 [shape = 'u8[4096]{0}', space=vmem, size = 0x1000, scoped, tag = 'output window, operand 0, single buffered']
    %14 = vsyncpa [#allocation3], 0
    %15 = vsyncpa [#allocation4], 0
    // Predicated region
    $region2: #{meshnet_forward.1} parent=1 // pred_check
      _
    $region3: #{meshnet_forward.1} parent=1 // pred_check_branch
      %17 = sbr.rel (0) target = $region5
    $region4: #{meshnet_forward.1} parent=1 // pred_region
      _
    $region5: #{meshnet_forward.1} parent=1 // pred_fallthru
      _
    // Predicated region
    $region6: #{meshnet_forward.1} parent=1 // pred_check
      _
    $region7: #{meshnet_forward.1} parent=1 // pred_check_branch
      %19 = sbr.rel (0) target = $region9
    $region8: #{meshnet_forward.1} parent=1 // pred_region
      _
    $region9: #{meshnet_forward.1} parent=1 // pred_fallthru
      _
    // Predicated region
    $region10: #{meshnet_forward.1} parent=1 // pred_check
      _
    $region11: #{meshnet_forward.1} parent=1 // pred_check_branch
      %21 = sbr.rel (0) target = $region13
    $region12: #{meshnet_forward.1} parent=1 // pred_region
      _
    $region13: #{meshnet_forward.1} parent=1 // pred_fallthru
      _
    // Predicated region
    $region14: #{meshnet_forward.1} parent=1 // pred_check
      _
    $region15: #{meshnet_forward.1} parent=1 // pred_check_branch
      %23 = sbr.rel (0) target = $region17
    $region16: #{meshnet_forward.1} parent=1 // pred_region
      _
    $region17: #{meshnet_forward.1} parent=1 // pred_fallthru
      _
    // Predicated region
    $region18: #{meshnet_forward.1} parent=1 // pred_check
      _
    $region19: #{meshnet_forward.1} parent=1 // pred_check_branch
      %25 = sbr.rel (0) target = $region21
    $region20: #{meshnet_forward.1} parent=1 // pred_region
      _
    $region21: #{meshnet_forward.1} parent=1 // pred_fallthru
      _
    // Predicated region
    $region22: #{meshnet_forward.1} parent=1 // pred_check
      _
    $region23: #{meshnet_forward.1} parent=1 // pred_check_branch
      %27 = sbr.rel (0) target = $region25
    $region24: #{meshnet_forward.1} parent=1 // pred_region
      %29 = vsyncadd [#allocation3], 0
      %s30 = sshll.u32 %s5, 4
      %s31 = int_to_ptr.hbm [resolvable:$true] %s30
      %s32 = sshll.u32 [#allocation2], 4
      %s33 = int_to_ptr.vmem [resolvable:$true] %s32
      %38 = dma.hbm_to_vmem [thread:$0]  %s31, 2048, %s33, [#allocation3], 64, 64, 4
    $region25: #{meshnet_forward.1} parent=1 // pred_fallthru
      _
    // Predicated region
    $region26: #{meshnet_forward.1} parent=1 // pred_check
      _
    $region27: #{meshnet_forward.1} parent=1 // pred_check_branch
      %40 = sbr.rel (0) target = $region29
    $region28: #{meshnet_forward.1} parent=1 // pred_region
      _
    $region29: #{meshnet_forward.1} parent=1 // pred_fallthru
      _
    // Predicated region
    $region30: #{meshnet_forward.1} parent=1 // pred_check
      _
    $region31: #{meshnet_forward.1} parent=1 // pred_check_branch
      %42 = sbr.rel (0) target = $region33
    $region32: #{meshnet_forward.1} parent=1 // pred_region
      _
    $region33: #{meshnet_forward.1} parent=1 // pred_fallthru
      _
    // Predicated region
    $region34: #{meshnet_forward.1} parent=1 // pred_check
      _
    $region35: #{meshnet_forward.1} parent=1 // pred_check_branch
      %44 = sbr.rel (0) target = $region37
    $region36: #{meshnet_forward.1} parent=1 // pred_region
      _
    $region37: #{meshnet_forward.1} parent=1 // pred_fallthru
      _
    // Predicated region
    $region38: #{meshnet_forward.1} parent=1 // pred_check
      _
    $region39: #{meshnet_forward.1} parent=1 // pred_check_branch
      %46 = sbr.rel (0) target = $region41
    $region40: #{meshnet_forward.1} parent=1 // pred_region
      %48 = dma.done [#allocation3], 2048
    $region41: #{meshnet_forward.1} parent=1 // pred_fallthru
      _
    %v50 = vld [vmem:[%s0] sm:$0xf]
    %v51 = vld [vmem:[%s0 + $0x4] sm:$0xf]
    %v52 = vld [vmem:[%s0 + $0x8] sm:$0xf]
    %v53 = vld [vmem:[%s0 + $0xc] sm:$0xf]
    %v54 = vld [vmem:[%s0 + $0x10] sm:$0xf]
    %v55 = vld [vmem:[%s0 + $0x14] sm:$0xf]
    %v56 = vld [vmem:[%s0 + $0x18] sm:$0xf]
    %v57 = vld [vmem:[%s0 + $0x1c] sm:$0xf]
    %58 = vxpose.xlu0.c.b16.start [1/8] %v50, 128
    %59 = vxpose.xlu0.c.b16.cont [2/8] 0, 128
    %60 = vxpose.xlu0.c.b16.cont [3/8] 0, 128
    %61 = vxpose.xlu0.c.b16.cont [4/8] 0, 128
    %62 = vxpose.xlu0.c.b16.cont [5/8] 0, 128
    %63 = vxpose.xlu0.c.b16.cont [6/8] 0, 128
    %64 = vxpose.xlu0.c.b16.cont [7/8] 0, 128
    %65 = vxpose.xlu0.c.b16.end [8/8] 0, 128
    %v66 = vpop.trf.xlu0
    %v67 = vpop.trf.xlu0
    %v68 = vpop.trf.xlu0
    %v69 = vpop.trf.xlu0
    %v70 = vpop.trf.xlu0
    %v71 = vpop.trf.xlu0
    %v72 = vpop.trf.xlu0
    %v73 = vpop.trf.xlu0
    %74 = vxpose.xlu0.c.b16.start [1/8] %v51, 128
    %75 = vxpose.xlu0.c.b16.cont [2/8] 0, 128
    %76 = vxpose.xlu0.c.b16.cont [3/8] 0, 128
    %77 = vxpose.xlu0.c.b16.cont [4/8] 0, 128
    %78 = vxpose.xlu0.c.b16.cont [5/8] 0, 128
    %79 = vxpose.xlu0.c.b16.cont [6/8] 0, 128
    %80 = vxpose.xlu0.c.b16.cont [7/8] 0, 128
    %81 = vxpose.xlu0.c.b16.end [8/8] 0, 128
    %v82 = vpop.trf.xlu0
    %v83 = vpop.trf.xlu0
    %v84 = vpop.trf.xlu0
    %v85 = vpop.trf.xlu0
    %v86 = vpop.trf.xlu0
    %v87 = vpop.trf.xlu0
    %v88 = vpop.trf.xlu0
    %v89 = vpop.trf.xlu0
    %90 = vxpose.xlu0.c.b16.start [1/8] %v52, 128
    %91 = vxpose.xlu0.c.b16.cont [2/8] 0, 128
    %92 = vxpose.xlu0.c.b16.cont [3/8] 0, 128
    %93 = vxpose.xlu0.c.b16.cont [4/8] 0, 128
    %94 = vxpose.xlu0.c.b16.cont [5/8] 0, 128
    %95 = vxpose.xlu0.c.b16.cont [6/8] 0, 128
    %96 = vxpose.xlu0.c.b16.cont [7/8] 0, 128
    %97 = vxpose.xlu0.c.b16.end [8/8] 0, 128
    %v98 = vpop.trf.xlu0
    %v99 = vpop.trf.xlu0
    %v100 = vpop.trf.xlu0
    %v101 = vpop.trf.xlu0
    %v102 = vpop.trf.xlu0
    %v103 = vpop.trf.xlu0
    %v104 = vpop.trf.xlu0
    %v105 = vpop.trf.xlu0
    %106 = vxpose.xlu0.c.b16.start [1/8] %v53, 128
    %107 = vxpose.xlu0.c.b16.cont [2/8] 0, 128
    %108 = vxpose.xlu0.c.b16.cont [3/8] 0, 128
    %109 = vxpose.xlu0.c.b16.cont [4/8] 0, 128
    %110 = vxpose.xlu0.c.b16.cont [5/8] 0, 128
    %111 = vxpose.xlu0.c.b16.cont [6/8] 0, 128
    %112 = vxpose.xlu0.c.b16.cont [7/8] 0, 128
    %113 = vxpose.xlu0.c.b16.end [8/8] 0, 128
    %v114 = vpop.trf.xlu0
    %v115 = vpop.trf.xlu0
    %v116 = vpop.trf.xlu0
    %v117 = vpop.trf.xlu0
    %v118 = vpop.trf.xlu0
    %v119 = vpop.trf.xlu0
    %v120 = vpop.trf.xlu0
    %v121 = vpop.trf.xlu0
    %122 = vxpose.xlu0.c.b16.start [1/8] %v54, 128
    %123 = vxpose.xlu0.c.b16.cont [2/8] 0, 128
    %124 = vxpose.xlu0.c.b16.cont [3/8] 0, 128
    %125 = vxpose.xlu0.c.b16.cont [4/8] 0, 128
    %126 = vxpose.xlu0.c.b16.cont [5/8] 0, 128
    %127 = vxpose.xlu0.c.b16.cont [6/8] 0, 128
    %128 = vxpose.xlu0.c.b16.cont [7/8] 0, 128
    %129 = vxpose.xlu0.c.b16.end [8/8] 0, 128
    %v130 = vpop.trf.xlu0
    %v131 = vpop.trf.xlu0
    %v132 = vpop.trf.xlu0
    %v133 = vpop.trf.xlu0
    %v134 = vpop.trf.xlu0
    %v135 = vpop.trf.xlu0
    %v136 = vpop.trf.xlu0
    %v137 = vpop.trf.xlu0
    %138 = vxpose.xlu0.c.b16.start [1/8] %v55, 128
    %139 = vxpose.xlu0.c.b16.cont [2/8] 0, 128
    %140 = vxpose.xlu0.c.b16.cont [3/8] 0, 128
    %141 = vxpose.xlu0.c.b16.cont [4/8] 0, 128
    %142 = vxpose.xlu0.c.b16.cont [5/8] 0, 128
    %143 = vxpose.xlu0.c.b16.cont [6/8] 0, 128
    %144 = vxpose.xlu0.c.b16.cont [7/8] 0, 128
    %145 = vxpose.xlu0.c.b16.end [8/8] 0, 128
    %v146 = vpop.trf.xlu0
    %v147 = vpop.trf.xlu0
    %v148 = vpop.trf.xlu0
    %v149 = vpop.trf.xlu0
    %v150 = vpop.trf.xlu0
    %v151 = vpop.trf.xlu0
    %v152 = vpop.trf.xlu0
    %v153 = vpop.trf.xlu0
    %154 = vxpose.xlu0.c.b16.start [1/8] %v56, 128
    %155 = vxpose.xlu0.c.b16.cont [2/8] 0, 128
    %156 = vxpose.xlu0.c.b16.cont [3/8] 0, 128
    %157 = vxpose.xlu0.c.b16.cont [4/8] 0, 128
    %158 = vxpose.xlu0.c.b16.cont [5/8] 0, 128
    %159 = vxpose.xlu0.c.b16.cont [6/8] 0, 128
    %160 = vxpose.xlu0.c.b16.cont [7/8] 0, 128
    %161 = vxpose.xlu0.c.b16.end [8/8] 0, 128
    %v162 = vpop.trf.xlu0
    %v163 = vpop.trf.xlu0
    %v164 = vpop.trf.xlu0
    %v165 = vpop.trf.xlu0
    %v166 = vpop.trf.xlu0
    %v167 = vpop.trf.xlu0
    %v168 = vpop.trf.xlu0
    %v169 = vpop.trf.xlu0
    %170 = vxpose.xlu0.c.b16.start [1/8] %v57, 128
    %171 = vxpose.xlu0.c.b16.cont [2/8] 0, 128
    %172 = vxpose.xlu0.c.b16.cont [3/8] 0, 128
    %173 = vxpose.xlu0.c.b16.cont [4/8] 0, 128
    %174 = vxpose.xlu0.c.b16.cont [5/8] 0, 128
    %175 = vxpose.xlu0.c.b16.cont [6/8] 0, 128
    %176 = vxpose.xlu0.c.b16.cont [7/8] 0, 128
    %177 = vxpose.xlu0.c.b16.end [8/8] 0, 128
    %v178 = vpop.trf.xlu0
    %v179 = vpop.trf.xlu0
    %v180 = vpop.trf.xlu0
    %v181 = vpop.trf.xlu0
    %v182 = vpop.trf.xlu0
    %v183 = vpop.trf.xlu0
    %v184 = vpop.trf.xlu0
    %v185 = vpop.trf.xlu0
    %v186 = vld [vmem:[%s1] sm:$0xf]
    %v187 = vld [vmem:[%s8] ss:$0 sm:$0xff]
    %vm188 = vcmask 64512
    %v190 = vsel %vm188, %v66, 0
    %v193 = vsel %vm188, %v67, 0
    %v196 = vsel %vm188, %v68, 0
    %v199 = vsel %vm188, %v69, 0
    %v202 = vsel %vm188, %v70, 0
    %v205 = vsel %vm188, %v71, 0
    %v208 = vsel %vm188, %v72, 0
    %v211 = vsel %vm188, %v73, 0
    %v214 = vsel %vm188, %v82, 0
    %v217 = vsel %vm188, %v83, 0
    %v220 = vsel %vm188, %v84, 0
    %v223 = vsel %vm188, %v85, 0
    %v226 = vsel %vm188, %v86, 0
    %v229 = vsel %vm188, %v87, 0
    %v232 = vsel %vm188, %v88, 0
    %v235 = vsel %vm188, %v89, 0
    %v238 = vsel %vm188, %v98, 0
    %v241 = vsel %vm188, %v99, 0
    %v244 = vsel %vm188, %v100, 0
    %v247 = vsel %vm188, %v101, 0
    %v250 = vsel %vm188, %v102, 0
    %v253 = vsel %vm188, %v103, 0
    %v256 = vsel %vm188, %v104, 0
    %v259 = vsel %vm188, %v105, 0
    %v262 = vsel %vm188, %v114, 0
    %v265 = vsel %vm188, %v115, 0
    %v268 = vsel %vm188, %v116, 0
    %v271 = vsel %vm188, %v117, 0
    %v274 = vsel %vm188, %v118, 0
    %v277 = vsel %vm188, %v119, 0
    %v280 = vsel %vm188, %v120, 0
    %v283 = vsel %vm188, %v121, 0
    %v286 = vsel %vm188, %v130, 0
    %v289 = vsel %vm188, %v131, 0
    %v292 = vsel %vm188, %v132, 0
    %v295 = vsel %vm188, %v133, 0
    %v298 = vsel %vm188, %v134, 0
    %v301 = vsel %vm188, %v135, 0
    %v304 = vsel %vm188, %v136, 0
    %v307 = vsel %vm188, %v137, 0
    %v310 = vsel %vm188, %v146, 0
    %v313 = vsel %vm188, %v147, 0
    %v316 = vsel %vm188, %v148, 0
    %v319 = vsel %vm188, %v149, 0
    %v322 = vsel %vm188, %v150, 0
    %v325 = vsel %vm188, %v151, 0
    %v328 = vsel %vm188, %v152, 0
    %v331 = vsel %vm188, %v153, 0
    %v334 = vsel %vm188, %v162, 0
    %v337 = vsel %vm188, %v163, 0
    %v340 = vsel %vm188, %v164, 0
    %v343 = vsel %vm188, %v165, 0
    %v346 = vsel %vm188, %v166, 0
    %v349 = vsel %vm188, %v167, 0
    %v352 = vsel %vm188, %v168, 0
    %v355 = vsel %vm188, %v169, 0
    %v358 = vsel %vm188, %v178, 0
    %v361 = vsel %vm188, %v179, 0
    %v364 = vsel %vm188, %v180, 0
    %v367 = vsel %vm188, %v181, 0
    %v370 = vsel %vm188, %v182, 0
    %v373 = vsel %vm188, %v183, 0
    %v376 = vsel %vm188, %v184, 0
    %v379 = vsel %vm188, %v185, 0
    %vm381 = vcmask 1043456
    %v383 = vsel %vm381, %v186, 0
    %385 = vmatpush.bf16.msra.mxu0 0
    %386 = vmatpush.bf16.msra.mxu0 0
    %387 = vmatpush.bf16.msra.mxu0 0
    %388 = vmatpush.bf16.msra.mxu0 0
    %389 = vmatpush.bf16.msra.mxu0 0
    %390 = vmatpush.bf16.msra.mxu0 0
    %391 = vmatpush.bf16.msra.mxu0 0
    %392 = vmatpush.bf16.msra.mxu0 %v383
    %393 = vmatmul.bf16.gmra.mxu0 %v190
    %v394 = vpop.f32.mrf.mxu0
    %v395 = vadd.f32 %v187, %v394
    %v396 = vpop.f32.mrf.mxu0
    %v397 = vadd.f32 %v187, %v396
    %398 = vmatmul.bf16.gmra.mxu0 %v193
    %v399 = vpop.f32.mrf.mxu0
    %v400 = vadd.f32 %v187, %v399
    %v401 = vpop.f32.mrf.mxu0
    %v402 = vadd.f32 %v187, %v401
    %403 = vmatmul.bf16.gmra.mxu0 %v196
    %v404 = vpop.f32.mrf.mxu0
    %v405 = vadd.f32 %v187, %v404
    %v406 = vpop.f32.mrf.mxu0
    %v407 = vadd.f32 %v187, %v406
    %408 = vmatmul.bf16.gmra.mxu0 %v199
    %v409 = vpop.f32.mrf.mxu0
    %v410 = vadd.f32 %v187, %v409
    %v411 = vpop.f32.mrf.mxu0
    %v412 = vadd.f32 %v187, %v411
    %413 = vmatmul.bf16.gmra.mxu0 %v202
    %v414 = vpop.f32.mrf.mxu0
    %v415 = vadd.f32 %v187, %v414
    %v416 = vpop.f32.mrf.mxu0
    %v417 = vadd.f32 %v187, %v416
    %418 = vmatmul.bf16.gmra.mxu0 %v205
    %v419 = vpop.f32.mrf.mxu0
    %v420 = vadd.f32 %v187, %v419
    %v421 = vpop.f32.mrf.mxu0
    %v422 = vadd.f32 %v187, %v421
    %423 = vmatmul.bf16.gmra.mxu0 %v208
    %v424 = vpop.f32.mrf.mxu0
    %v425 = vadd.f32 %v187, %v424
    %v426 = vpop.f32.mrf.mxu0
    %v427 = vadd.f32 %v187, %v426
    %428 = vmatmul.bf16.gmra.mxu0 %v211
    %v429 = vpop.f32.mrf.mxu0
    %v430 = vadd.f32 %v187, %v429
    %v431 = vpop.f32.mrf.mxu0
    %v432 = vadd.f32 %v187, %v431
    %433 = vmatmul.bf16.gmra.mxu0 %v214
    %v434 = vpop.f32.mrf.mxu0
    %v435 = vadd.f32 %v187, %v434
    %v436 = vpop.f32.mrf.mxu0
    %v437 = vadd.f32 %v187, %v436
    %438 = vmatmul.bf16.gmra.mxu0 %v217
    %v439 = vpop.f32.mrf.mxu0
    %v440 = vadd.f32 %v187, %v439
    %v441 = vpop.f32.mrf.mxu0
    %v442 = vadd.f32 %v187, %v441
    %443 = vmatmul.bf16.gmra.mxu0 %v220
    %v444 = vpop.f32.mrf.mxu0
    %v445 = vadd.f32 %v187, %v444
    %v446 = vpop.f32.mrf.mxu0
    %v447 = vadd.f32 %v187, %v446
    %448 = vmatmul.bf16.gmra.mxu0 %v223
    %v449 = vpop.f32.mrf.mxu0
    %v450 = vadd.f32 %v187, %v449
    %v451 = vpop.f32.mrf.mxu0
    %v452 = vadd.f32 %v187, %v451
    %453 = vmatmul.bf16.gmra.mxu0 %v226
    %v454 = vpop.f32.mrf.mxu0
    %v455 = vadd.f32 %v187, %v454
    %v456 = vpop.f32.mrf.mxu0
    %v457 = vadd.f32 %v187, %v456
    %458 = vmatmul.bf16.gmra.mxu0 %v229
    %v459 = vpop.f32.mrf.mxu0
    %v460 = vadd.f32 %v187, %v459
    %v461 = vpop.f32.mrf.mxu0
    %v462 = vadd.f32 %v187, %v461
    %463 = vmatmul.bf16.gmra.mxu0 %v232
    %v464 = vpop.f32.mrf.mxu0
    %v465 = vadd.f32 %v187, %v464
    %v466 = vpop.f32.mrf.mxu0
    %v467 = vadd.f32 %v187, %v466
    %468 = vmatmul.bf16.gmra.mxu0 %v235
    %v469 = vpop.f32.mrf.mxu0
    %v470 = vadd.f32 %v187, %v469
    %v471 = vpop.f32.mrf.mxu0
    %v472 = vadd.f32 %v187, %v471
    %473 = vmatmul.bf16.gmra.mxu0 %v238
    %v474 = vpop.f32.mrf.mxu0
    %v475 = vadd.f32 %v187, %v474
    %v476 = vpop.f32.mrf.mxu0
    %v477 = vadd.f32 %v187, %v476
    %478 = vmatmul.bf16.gmra.mxu0 %v241
    %v479 = vpop.f32.mrf.mxu0
    %v480 = vadd.f32 %v187, %v479
    %v481 = vpop.f32.mrf.mxu0
    %v482 = vadd.f32 %v187, %v481
    %483 = vmatmul.bf16.gmra.mxu0 %v244
    %v484 = vpop.f32.mrf.mxu0
    %v485 = vadd.f32 %v187, %v484
    %v486 = vpop.f32.mrf.mxu0
    %v487 = vadd.f32 %v187, %v486
    %488 = vmatmul.bf16.gmra.mxu0 %v247
    %v489 = vpop.f32.mrf.mxu0
    %v490 = vadd.f32 %v187, %v489
    %v491 = vpop.f32.mrf.mxu0
    %v492 = vadd.f32 %v187, %v491
    %493 = vmatmul.bf16.gmra.mxu0 %v250
    %v494 = vpop.f32.mrf.mxu0
    %v495 = vadd.f32 %v187, %v494
    %v496 = vpop.f32.mrf.mxu0
    %v497 = vadd.f32 %v187, %v496
    %498 = vmatmul.bf16.gmra.mxu0 %v253
    %v499 = vpop.f32.mrf.mxu0
    %v500 = vadd.f32 %v187, %v499
    %v501 = vpop.f32.mrf.mxu0
    %v502 = vadd.f32 %v187, %v501
    %503 = vmatmul.bf16.gmra.mxu0 %v256
    %v504 = vpop.f32.mrf.mxu0
    %v505 = vadd.f32 %v187, %v504
    %v506 = vpop.f32.mrf.mxu0
    %v507 = vadd.f32 %v187, %v506
    %508 = vmatmul.bf16.gmra.mxu0 %v259
    %v509 = vpop.f32.mrf.mxu0
    %v510 = vadd.f32 %v187, %v509
    %v511 = vpop.f32.mrf.mxu0
    %v512 = vadd.f32 %v187, %v511
    %513 = vmatmul.bf16.gmra.mxu0 %v262
    %v514 = vpop.f32.mrf.mxu0
    %v515 = vadd.f32 %v187, %v514
    %v516 = vpop.f32.mrf.mxu0
    %v517 = vadd.f32 %v187, %v516
    %518 = vmatmul.bf16.gmra.mxu0 %v265
    %v519 = vpop.f32.mrf.mxu0
    %v520 = vadd.f32 %v187, %v519
    %v521 = vpop.f32.mrf.mxu0
    %v522 = vadd.f32 %v187, %v521
    %523 = vmatmul.bf16.gmra.mxu0 %v268
    %v524 = vpop.f32.mrf.mxu0
    %v525 = vadd.f32 %v187, %v524
    %v526 = vpop.f32.mrf.mxu0
    %v527 = vadd.f32 %v187, %v526
    %528 = vmatmul.bf16.gmra.mxu0 %v271
    %v529 = vpop.f32.mrf.mxu0
    %v530 = vadd.f32 %v187, %v529
    %v531 = vpop.f32.mrf.mxu0
    %v532 = vadd.f32 %v187, %v531
    %533 = vmatmul.bf16.gmra.mxu0 %v274
    %v534 = vpop.f32.mrf.mxu0
    %v535 = vadd.f32 %v187, %v534
    %v536 = vpop.f32.mrf.mxu0
    %v537 = vadd.f32 %v187, %v536
    %538 = vmatmul.bf16.gmra.mxu0 %v277
    %v539 = vpop.f32.mrf.mxu0
    %v540 = vadd.f32 %v187, %v539
    %v541 = vpop.f32.mrf.mxu0
    %v542 = vadd.f32 %v187, %v541
    %543 = vmatmul.bf16.gmra.mxu0 %v280
    %v544 = vpop.f32.mrf.mxu0
    %v545 = vadd.f32 %v187, %v544
    %v546 = vpop.f32.mrf.mxu0
    %v547 = vadd.f32 %v187, %v546
    %548 = vmatmul.bf16.gmra.mxu0 %v283
    %v549 = vpop.f32.mrf.mxu0
    %v550 = vadd.f32 %v187, %v549
    %v551 = vpop.f32.mrf.mxu0
    %v552 = vadd.f32 %v187, %v551
    %553 = vmatmul.bf16.gmra.mxu0 %v286
    %v554 = vpop.f32.mrf.mxu0
    %v555 = vadd.f32 %v187, %v554
    %v556 = vpop.f32.mrf.mxu0
    %v557 = vadd.f32 %v187, %v556
    %558 = vmatmul.bf16.gmra.mxu0 %v289
    %v559 = vpop.f32.mrf.mxu0
    %v560 = vadd.f32 %v187, %v559
    %v561 = vpop.f32.mrf.mxu0
    %v562 = vadd.f32 %v187, %v561
    %563 = vmatmul.bf16.gmra.mxu0 %v292
    %v564 = vpop.f32.mrf.mxu0
    %v565 = vadd.f32 %v187, %v564
    %v566 = vpop.f32.mrf.mxu0
    %v567 = vadd.f32 %v187, %v566
    %568 = vmatmul.bf16.gmra.mxu0 %v295
    %v569 = vpop.f32.mrf.mxu0
    %v570 = vadd.f32 %v187, %v569
    %v571 = vpop.f32.mrf.mxu0
    %v572 = vadd.f32 %v187, %v571
    %573 = vmatmul.bf16.gmra.mxu0 %v298
    %v574 = vpop.f32.mrf.mxu0
    %v575 = vadd.f32 %v187, %v574
    %v576 = vpop.f32.mrf.mxu0
    %v577 = vadd.f32 %v187, %v576
    %578 = vmatmul.bf16.gmra.mxu0 %v301
    %v579 = vpop.f32.mrf.mxu0
    %v580 = vadd.f32 %v187, %v579
    %v581 = vpop.f32.mrf.mxu0
    %v582 = vadd.f32 %v187, %v581
    %583 = vmatmul.bf16.gmra.mxu0 %v304
    %v584 = vpop.f32.mrf.mxu0
    %v585 = vadd.f32 %v187, %v584
    %v586 = vpop.f32.mrf.mxu0
    %v587 = vadd.f32 %v187, %v586
    %588 = vmatmul.bf16.gmra.mxu0 %v307
    %v589 = vpop.f32.mrf.mxu0
    %v590 = vadd.f32 %v187, %v589
    %v591 = vpop.f32.mrf.mxu0
    %v592 = vadd.f32 %v187, %v591
    %593 = vmatmul.bf16.gmra.mxu0 %v310
    %v594 = vpop.f32.mrf.mxu0
    %v595 = vadd.f32 %v187, %v594
    %v596 = vpop.f32.mrf.mxu0
    %v597 = vadd.f32 %v187, %v596
    %598 = vmatmul.bf16.gmra.mxu0 %v313
    %v599 = vpop.f32.mrf.mxu0
    %v600 = vadd.f32 %v187, %v599
    %v601 = vpop.f32.mrf.mxu0
    %v602 = vadd.f32 %v187, %v601
    %603 = vmatmul.bf16.gmra.mxu0 %v316
    %v604 = vpop.f32.mrf.mxu0
    %v605 = vadd.f32 %v187, %v604
    %v606 = vpop.f32.mrf.mxu0
    %v607 = vadd.f32 %v187, %v606
    %608 = vmatmul.bf16.gmra.mxu0 %v319
    %v609 = vpop.f32.mrf.mxu0
    %v610 = vadd.f32 %v187, %v609
    %v611 = vpop.f32.mrf.mxu0
    %v612 = vadd.f32 %v187, %v611
    %613 = vmatmul.bf16.gmra.mxu0 %v322
    %v614 = vpop.f32.mrf.mxu0
    %v615 = vadd.f32 %v187, %v614
    %v616 = vpop.f32.mrf.mxu0
    %v617 = vadd.f32 %v187, %v616
    %618 = vmatmul.bf16.gmra.mxu0 %v325
    %v619 = vpop.f32.mrf.mxu0
    %v620 = vadd.f32 %v187, %v619
    %v621 = vpop.f32.mrf.mxu0
    %v622 = vadd.f32 %v187, %v621
    %623 = vmatmul.bf16.gmra.mxu0 %v328
    %v624 = vpop.f32.mrf.mxu0
    %v625 = vadd.f32 %v187, %v624
    %v626 = vpop.f32.mrf.mxu0
    %v627 = vadd.f32 %v187, %v626
    %628 = vmatmul.bf16.gmra.mxu0 %v331
    %v629 = vpop.f32.mrf.mxu0
    %v630 = vadd.f32 %v187, %v629
    %v631 = vpop.f32.mrf.mxu0
    %v632 = vadd.f32 %v187, %v631
    %633 = vmatmul.bf16.gmra.mxu0 %v334
    %v634 = vpop.f32.mrf.mxu0
    %v635 = vadd.f32 %v187, %v634
    %v636 = vpop.f32.mrf.mxu0
    %v637 = vadd.f32 %v187, %v636
    %638 = vmatmul.bf16.gmra.mxu0 %v337
    %v639 = vpop.f32.mrf.mxu0
    %v640 = vadd.f32 %v187, %v639
    %v641 = vpop.f32.mrf.mxu0
    %v642 = vadd.f32 %v187, %v641
    %643 = vmatmul.bf16.gmra.mxu0 %v340
    %v644 = vpop.f32.mrf.mxu0
    %v645 = vadd.f32 %v187, %v644
    %v646 = vpop.f32.mrf.mxu0
    %v647 = vadd.f32 %v187, %v646
    %648 = vmatmul.bf16.gmra.mxu0 %v343
    %v649 = vpop.f32.mrf.mxu0
    %v650 = vadd.f32 %v187, %v649
    %v651 = vpop.f32.mrf.mxu0
    %v652 = vadd.f32 %v187, %v651
    %653 = vmatmul.bf16.gmra.mxu0 %v346
    %v654 = vpop.f32.mrf.mxu0
    %v655 = vadd.f32 %v187, %v654
    %v656 = vpop.f32.mrf.mxu0
    %v657 = vadd.f32 %v187, %v656
    %658 = vmatmul.bf16.gmra.mxu0 %v349
    %v659 = vpop.f32.mrf.mxu0
    %v660 = vadd.f32 %v187, %v659
    %v661 = vpop.f32.mrf.mxu0
    %v662 = vadd.f32 %v187, %v661
    %663 = vmatmul.bf16.gmra.mxu0 %v352
    %v664 = vpop.f32.mrf.mxu0
    %v665 = vadd.f32 %v187, %v664
    %v666 = vpop.f32.mrf.mxu0
    %v667 = vadd.f32 %v187, %v666
    %668 = vmatmul.bf16.gmra.mxu0 %v355
    %v669 = vpop.f32.mrf.mxu0
    %v670 = vadd.f32 %v187, %v669
    %v671 = vpop.f32.mrf.mxu0
    %v672 = vadd.f32 %v187, %v671
    %673 = vmatmul.bf16.gmra.mxu0 %v358
    %v674 = vpop.f32.mrf.mxu0
    %v675 = vadd.f32 %v187, %v674
    %v676 = vpop.f32.mrf.mxu0
    %v677 = vadd.f32 %v187, %v676
    %678 = vmatmul.bf16.gmra.mxu0 %v361
    %v679 = vpop.f32.mrf.mxu0
    %v680 = vadd.f32 %v187, %v679
    %v681 = vpop.f32.mrf.mxu0
    %v682 = vadd.f32 %v187, %v681
    %683 = vmatmul.bf16.gmra.mxu0 %v364
    %v684 = vpop.f32.mrf.mxu0
    %v685 = vadd.f32 %v187, %v684
    %v686 = vpop.f32.mrf.mxu0
    %v687 = vadd.f32 %v187, %v686
    %688 = vmatmul.bf16.gmra.mxu0 %v367
    %v689 = vpop.f32.mrf.mxu0
    %v690 = vadd.f32 %v187, %v689
    %v691 = vpop.f32.mrf.mxu0
    %v692 = vadd.f32 %v187, %v691
    %693 = vmatmul.bf16.gmra.mxu0 %v370
    %v694 = vpop.f32.mrf.mxu0
    %v695 = vadd.f32 %v187, %v694
    %v696 = vpop.f32.mrf.mxu0
    %v697 = vadd.f32 %v187, %v696
    %698 = vmatmul.bf16.gmra.mxu0 %v373
    %v699 = vpop.f32.mrf.mxu0
    %v700 = vadd.f32 %v187, %v699
    %v701 = vpop.f32.mrf.mxu0
    %v702 = vadd.f32 %v187, %v701
    %703 = vmatmul.bf16.gmra.mxu0 %v376
    %v704 = vpop.f32.mrf.mxu0
    %v705 = vadd.f32 %v187, %v704
    %v706 = vpop.f32.mrf.mxu0
    %v707 = vadd.f32 %v187, %v706
    %708 = vmatmul.bf16.gmra.mxu0 %v379
    %v709 = vpop.f32.mrf.mxu0
    %v710 = vadd.f32 %v187, %v709
    %v711 = vpop.f32.mrf.mxu0
    %v712 = vadd.f32 %v187, %v711
    %713 = vdwg.mxu0
    %v714 = vmax.f32 %v395, 0.0
    %v715 = vmax.f32 %v397, 0.0
    %v716 = vmax.f32 %v400, 0.0
    %v717 = vmax.f32 %v402, 0.0
    %v718 = vmax.f32 %v405, 0.0
    %v719 = vmax.f32 %v407, 0.0
    %v720 = vmax.f32 %v410, 0.0
    %v721 = vmax.f32 %v412, 0.0
    %v722 = vmax.f32 %v415, 0.0
    %v723 = vmax.f32 %v417, 0.0
    %v724 = vmax.f32 %v420, 0.0
    %v725 = vmax.f32 %v422, 0.0
    %v726 = vmax.f32 %v425, 0.0
    %v727 = vmax.f32 %v427, 0.0
    %v728 = vmax.f32 %v430, 0.0
    %v729 = vmax.f32 %v432, 0.0
    %v730 = vmax.f32 %v435, 0.0
    %v731 = vmax.f32 %v437, 0.0
    %v732 = vmax.f32 %v440, 0.0
    %v733 = vmax.f32 %v442, 0.0
    %v734 = vmax.f32 %v445, 0.0
    %v735 = vmax.f32 %v447, 0.0
    %v736 = vmax.f32 %v450, 0.0
    %v737 = vmax.f32 %v452, 0.0
    %v738 = vmax.f32 %v455, 0.0
    %v739 = vmax.f32 %v457, 0.0
    %v740 = vmax.f32 %v460, 0.0
    %v741 = vmax.f32 %v462, 0.0
    %v742 = vmax.f32 %v465, 0.0
    %v743 = vmax.f32 %v467, 0.0
    %v744 = vmax.f32 %v470, 0.0
    %v745 = vmax.f32 %v472, 0.0
    %v746 = vmax.f32 %v475, 0.0
    %v747 = vmax.f32 %v477, 0.0
    %v748 = vmax.f32 %v480, 0.0
    %v749 = vmax.f32 %v482, 0.0
    %v750 = vmax.f32 %v485, 0.0
    %v751 = vmax.f32 %v487, 0.0
    %v752 = vmax.f32 %v490, 0.0
    %v753 = vmax.f32 %v492, 0.0
    %v754 = vmax.f32 %v495, 0.0
    %v755 = vmax.f32 %v497, 0.0
    %v756 = vmax.f32 %v500, 0.0
    %v757 = vmax.f32 %v502, 0.0
    %v758 = vmax.f32 %v505, 0.0
    %v759 = vmax.f32 %v507, 0.0
    %v760 = vmax.f32 %v510, 0.0
    %v761 = vmax.f32 %v512, 0.0
    %v762 = vmax.f32 %v515, 0.0
    %v763 = vmax.f32 %v517, 0.0
    %v764 = vmax.f32 %v520, 0.0
    %v765 = vmax.f32 %v522, 0.0
    %v766 = vmax.f32 %v525, 0.0
    %v767 = vmax.f32 %v527, 0.0
    %v768 = vmax.f32 %v530, 0.0
    %v769 = vmax.f32 %v532, 0.0
    %v770 = vmax.f32 %v535, 0.0
    %v771 = vmax.f32 %v537, 0.0
    %v772 = vmax.f32 %v540, 0.0
    %v773 = vmax.f32 %v542, 0.0
    %v774 = vmax.f32 %v545, 0.0
    %v775 = vmax.f32 %v547, 0.0
    %v776 = vmax.f32 %v550, 0.0
    %v777 = vmax.f32 %v552, 0.0
    %v778 = vmax.f32 %v555, 0.0
    %v779 = vmax.f32 %v557, 0.0
    %v780 = vmax.f32 %v560, 0.0
    %v781 = vmax.f32 %v562, 0.0
    %v782 = vmax.f32 %v565, 0.0
    %v783 = vmax.f32 %v567, 0.0
    %v784 = vmax.f32 %v570, 0.0
    %v785 = vmax.f32 %v572, 0.0
    %v786 = vmax.f32 %v575, 0.0
    %v787 = vmax.f32 %v577, 0.0
    %v788 = vmax.f32 %v580, 0.0
    %v789 = vmax.f32 %v582, 0.0
    %v790 = vmax.f32 %v585, 0.0
    %v791 = vmax.f32 %v587, 0.0
    %v792 = vmax.f32 %v590, 0.0
    %v793 = vmax.f32 %v592, 0.0
    %v794 = vmax.f32 %v595, 0.0
    %v795 = vmax.f32 %v597, 0.0
    %v796 = vmax.f32 %v600, 0.0
    %v797 = vmax.f32 %v602, 0.0
    %v798 = vmax.f32 %v605, 0.0
    %v799 = vmax.f32 %v607, 0.0
    %v800 = vmax.f32 %v610, 0.0
    %v801 = vmax.f32 %v612, 0.0
    %v802 = vmax.f32 %v615, 0.0
    %v803 = vmax.f32 %v617, 0.0
    %v804 = vmax.f32 %v620, 0.0
    %v805 = vmax.f32 %v622, 0.0
    %v806 = vmax.f32 %v625, 0.0
    %v807 = vmax.f32 %v627, 0.0
    %v808 = vmax.f32 %v630, 0.0
    %v809 = vmax.f32 %v632, 0.0
    %v810 = vmax.f32 %v635, 0.0
    %v811 = vmax.f32 %v637, 0.0
    %v812 = vmax.f32 %v640, 0.0
    %v813 = vmax.f32 %v642, 0.0
    %v814 = vmax.f32 %v645, 0.0
    %v815 = vmax.f32 %v647, 0.0
    %v816 = vmax.f32 %v650, 0.0
    %v817 = vmax.f32 %v652, 0.0
    %v818 = vmax.f32 %v655, 0.0
    %v819 = vmax.f32 %v657, 0.0
    %v820 = vmax.f32 %v660, 0.0
    %v821 = vmax.f32 %v662, 0.0
    %v822 = vmax.f32 %v665, 0.0
    %v823 = vmax.f32 %v667, 0.0
    %v824 = vmax.f32 %v670, 0.0
    %v825 = vmax.f32 %v672, 0.0
    %v826 = vmax.f32 %v675, 0.0
    %v827 = vmax.f32 %v677, 0.0
    %v828 = vmax.f32 %v680, 0.0
    %v829 = vmax.f32 %v682, 0.0
    %v830 = vmax.f32 %v685, 0.0
    %v831 = vmax.f32 %v687, 0.0
    %v832 = vmax.f32 %v690, 0.0
    %v833 = vmax.f32 %v692, 0.0
    %v834 = vmax.f32 %v695, 0.0
    %v835 = vmax.f32 %v697, 0.0
    %v836 = vmax.f32 %v700, 0.0
    %v837 = vmax.f32 %v702, 0.0
    %v838 = vmax.f32 %v705, 0.0
    %v839 = vmax.f32 %v707, 0.0
    %v840 = vmax.f32 %v710, 0.0
    %v841 = vmax.f32 %v712, 0.0
    %v842 = vpack.c.bf16 %v715, %v714
    %v843 = vpack.c.bf16 %v717, %v716
    %v844 = vpack.c.bf16 %v719, %v718
    %v845 = vpack.c.bf16 %v721, %v720
    %v846 = vpack.c.bf16 %v723, %v722
    %v847 = vpack.c.bf16 %v725, %v724
    %v848 = vpack.c.bf16 %v727, %v726
    %v849 = vpack.c.bf16 %v729, %v728
    %v850 = vpack.c.bf16 %v731, %v730
    %v851 = vpack.c.bf16 %v733, %v732
    %v852 = vpack.c.bf16 %v735, %v734
    %v853 = vpack.c.bf16 %v737, %v736
    %v854 = vpack.c.bf16 %v739, %v738
    %v855 = vpack.c.bf16 %v741, %v740
    %v856 = vpack.c.bf16 %v743, %v742
    %v857 = vpack.c.bf16 %v745, %v744
    %v858 = vpack.c.bf16 %v747, %v746
    %v859 = vpack.c.bf16 %v749, %v748
    %v860 = vpack.c.bf16 %v751, %v750
    %v861 = vpack.c.bf16 %v753, %v752
    %v862 = vpack.c.bf16 %v755, %v754
    %v863 = vpack.c.bf16 %v757, %v756
    %v864 = vpack.c.bf16 %v759, %v758
    %v865 = vpack.c.bf16 %v761, %v760
    %v866 = vpack.c.bf16 %v763, %v762
    %v867 = vpack.c.bf16 %v765, %v764
    %v868 = vpack.c.bf16 %v767, %v766
    %v869 = vpack.c.bf16 %v769, %v768
    %v870 = vpack.c.bf16 %v771, %v770
    %v871 = vpack.c.bf16 %v773, %v772
    %v872 = vpack.c.bf16 %v775, %v774
    %v873 = vpack.c.bf16 %v777, %v776
    %v874 = vpack.c.bf16 %v779, %v778
    %v875 = vpack.c.bf16 %v781, %v780
    %v876 = vpack.c.bf16 %v783, %v782
    %v877 = vpack.c.bf16 %v785, %v784
    %v878 = vpack.c.bf16 %v787, %v786
    %v879 = vpack.c.bf16 %v789, %v788
    %v880 = vpack.c.bf16 %v791, %v790
    %v881 = vpack.c.bf16 %v793, %v792
    %v882 = vpack.c.bf16 %v795, %v794
    %v883 = vpack.c.bf16 %v797, %v796
    %v884 = vpack.c.bf16 %v799, %v798
    %v885 = vpack.c.bf16 %v801, %v800
    %v886 = vpack.c.bf16 %v803, %v802
    %v887 = vpack.c.bf16 %v805, %v804
    %v888 = vpack.c.bf16 %v807, %v806
    %v889 = vpack.c.bf16 %v809, %v808
    %v890 = vpack.c.bf16 %v811, %v810
    %v891 = vpack.c.bf16 %v813, %v812
    %v892 = vpack.c.bf16 %v815, %v814
    %v893 = vpack.c.bf16 %v817, %v816
    %v894 = vpack.c.bf16 %v819, %v818
    %v895 = vpack.c.bf16 %v821, %v820
    %v896 = vpack.c.bf16 %v823, %v822
    %v897 = vpack.c.bf16 %v825, %v824
    %v898 = vpack.c.bf16 %v827, %v826
    %v899 = vpack.c.bf16 %v829, %v828
    %v900 = vpack.c.bf16 %v831, %v830
    %v901 = vpack.c.bf16 %v833, %v832
    %v902 = vpack.c.bf16 %v835, %v834
    %v903 = vpack.c.bf16 %v837, %v836
    %v904 = vpack.c.bf16 %v839, %v838
    %v905 = vpack.c.bf16 %v841, %v840
    %v906 = vld [vmem:[%s2] sm:$0xf]
    %v907 = vld [vmem:[%s2 + $0x4] sm:$0xf]
    %v908 = vld [vmem:[%s2 + $0x8] sm:$0xf]
    %v909 = vld [vmem:[%s2 + $0xc] sm:$0xf]
    %v910 = vld [vmem:[%s2 + $0x10] sm:$0xf]
    %v911 = vld [vmem:[%s2 + $0x14] sm:$0xf]
    %v912 = vld [vmem:[%s2 + $0x18] sm:$0xf]
    %v913 = vld [vmem:[%s2 + $0x1c] sm:$0xf]
    %v914 = vld [vmem:[%s8 + $0x1] ss:$0 sm:$0xff]
    %v923 = vunpack.c.l.b16 %v906
    %v924 = vunpack.c.l.b16 %v907
    %v925 = vunpack.c.l.b16 %v908
    %v926 = vunpack.c.l.b16 %v909
    %v927 = vunpack.c.l.b16 %v910
    %v928 = vunpack.c.l.b16 %v911
    %v929 = vunpack.c.l.b16 %v912
    %v930 = vunpack.c.l.b16 %v913
    %v931 = vpack.c.b16 %v924, %v923
    %v932 = vpack.c.b16 %v926, %v925
    %v933 = vpack.c.b16 %v928, %v927
    %v934 = vpack.c.b16 %v930, %v929
    %vm939 = vcmask 523264
    %v941 = vsel %vm939, %v842, 0
    %v944 = vsel %vm939, %v843, 0
    %v947 = vsel %vm939, %v844, 0
    %v950 = vsel %vm939, %v845, 0
    %v953 = vsel %vm939, %v846, 0
    %v956 = vsel %vm939, %v847, 0
    %v959 = vsel %vm939, %v848, 0
    %v962 = vsel %vm939, %v849, 0
    %v965 = vsel %vm939, %v850, 0
    %v968 = vsel %vm939, %v851, 0
    %v971 = vsel %vm939, %v852, 0
    %v974 = vsel %vm939, %v853, 0
    %v977 = vsel %vm939, %v854, 0
    %v980 = vsel %vm939, %v855, 0
    %v983 = vsel %vm939, %v856, 0
    %v986 = vsel %vm939, %v857, 0
    %v989 = vsel %vm939, %v858, 0
    %v992 = vsel %vm939, %v859, 0
    %v995 = vsel %vm939, %v860, 0
    %v998 = vsel %vm939, %v861, 0
    %v1001 = vsel %vm939, %v862, 0
    %v1004 = vsel %vm939, %v863, 0
    %v1007 = vsel %vm939, %v864, 0
    %v1010 = vsel %vm939, %v865, 0
    %v1013 = vsel %vm939, %v866, 0
    %v1016 = vsel %vm939, %v867, 0
    %v1019 = vsel %vm939, %v868, 0
    %v1022 = vsel %vm939, %v869, 0
    %v1025 = vsel %vm939, %v870, 0
    %v1028 = vsel %vm939, %v871, 0
    %v1031 = vsel %vm939, %v872, 0
    %v1034 = vsel %vm939, %v873, 0
    %v1037 = vsel %vm939, %v874, 0
    %v1040 = vsel %vm939, %v875, 0
    %v1043 = vsel %vm939, %v876, 0
    %v1046 = vsel %vm939, %v877, 0
    %v1049 = vsel %vm939, %v878, 0
    %v1052 = vsel %vm939, %v879, 0
    %v1055 = vsel %vm939, %v880, 0
    %v1058 = vsel %vm939, %v881, 0
    %v1061 = vsel %vm939, %v882, 0
    %v1064 = vsel %vm939, %v883, 0
    %v1067 = vsel %vm939, %v884, 0
    %v1070 = vsel %vm939, %v885, 0
    %v1073 = vsel %vm939, %v886, 0
    %v1076 = vsel %vm939, %v887, 0
    %v1079 = vsel %vm939, %v888, 0
    %v1082 = vsel %vm939, %v889, 0
    %v1085 = vsel %vm939, %v890, 0
    %v1088 = vsel %vm939, %v891, 0
    %v1091 = vsel %vm939, %v892, 0
    %v1094 = vsel %vm939, %v893, 0
    %v1097 = vsel %vm939, %v894, 0
    %v1100 = vsel %vm939, %v895, 0
    %v1103 = vsel %vm939, %v896, 0
    %v1106 = vsel %vm939, %v897, 0
    %v1109 = vsel %vm939, %v898, 0
    %v1112 = vsel %vm939, %v899, 0
    %v1115 = vsel %vm939, %v900, 0
    %v1118 = vsel %vm939, %v901, 0
    %v1121 = vsel %vm939, %v902, 0
    %v1124 = vsel %vm939, %v903, 0
    %v1127 = vsel %vm939, %v904, 0
    %v1130 = vsel %vm939, %v905, 0
    %1132 = vmatpush.bf16.msra.mxu0 0
    %1133 = vmatpush.bf16.msra.mxu0 0
    %1134 = vmatpush.bf16.msra.mxu0 0
    %1135 = vmatpush.bf16.msra.mxu0 0
    %1136 = vmatpush.bf16.msra.mxu0 %v934
    %1137 = vmatpush.bf16.msra.mxu0 %v933
    %1138 = vmatpush.bf16.msra.mxu0 %v932
    %1139 = vmatpush.bf16.msra.mxu0 %v931
    %1140 = vmatmul.bf16.gmra.mxu0 %v941
    %v1141 = vpop.f32.mrf.mxu0
    %v1142 = vadd.f32 %v914, %v1141
    %v1143 = vpop.f32.mrf.mxu0
    %v1144 = vadd.f32 %v914, %v1143
    %1145 = vmatmul.bf16.gmra.mxu0 %v944
    %v1146 = vpop.f32.mrf.mxu0
    %v1147 = vadd.f32 %v914, %v1146
    %v1148 = vpop.f32.mrf.mxu0
    %v1149 = vadd.f32 %v914, %v1148
    %1150 = vmatmul.bf16.gmra.mxu0 %v947
    %v1151 = vpop.f32.mrf.mxu0
    %v1152 = vadd.f32 %v914, %v1151
    %v1153 = vpop.f32.mrf.mxu0
    %v1154 = vadd.f32 %v914, %v1153
    %1155 = vmatmul.bf16.gmra.mxu0 %v950
    %v1156 = vpop.f32.mrf.mxu0
    %v1157 = vadd.f32 %v914, %v1156
    %v1158 = vpop.f32.mrf.mxu0
    %v1159 = vadd.f32 %v914, %v1158
    %1160 = vmatmul.bf16.gmra.mxu0 %v953
    %v1161 = vpop.f32.mrf.mxu0
    %v1162 = vadd.f32 %v914, %v1161
    %v1163 = vpop.f32.mrf.mxu0
    %v1164 = vadd.f32 %v914, %v1163
    %1165 = vmatmul.bf16.gmra.mxu0 %v956
    %v1166 = vpop.f32.mrf.mxu0
    %v1167 = vadd.f32 %v914, %v1166
    %v1168 = vpop.f32.mrf.mxu0
    %v1169 = vadd.f32 %v914, %v1168
    %1170 = vmatmul.bf16.gmra.mxu0 %v959
    %v1171 = vpop.f32.mrf.mxu0
    %v1172 = vadd.f32 %v914, %v1171
    %v1173 = vpop.f32.mrf.mxu0
    %v1174 = vadd.f32 %v914, %v1173
    %1175 = vmatmul.bf16.gmra.mxu0 %v962
    %v1176 = vpop.f32.mrf.mxu0
    %v1177 = vadd.f32 %v914, %v1176
    %v1178 = vpop.f32.mrf.mxu0
    %v1179 = vadd.f32 %v914, %v1178
    %1180 = vmatmul.bf16.gmra.mxu0 %v965
    %v1181 = vpop.f32.mrf.mxu0
    %v1182 = vadd.f32 %v914, %v1181
    %v1183 = vpop.f32.mrf.mxu0
    %v1184 = vadd.f32 %v914, %v1183
    %1185 = vmatmul.bf16.gmra.mxu0 %v968
    %v1186 = vpop.f32.mrf.mxu0
    %v1187 = vadd.f32 %v914, %v1186
    %v1188 = vpop.f32.mrf.mxu0
    %v1189 = vadd.f32 %v914, %v1188
    %1190 = vmatmul.bf16.gmra.mxu0 %v971
    %v1191 = vpop.f32.mrf.mxu0
    %v1192 = vadd.f32 %v914, %v1191
    %v1193 = vpop.f32.mrf.mxu0
    %v1194 = vadd.f32 %v914, %v1193
    %1195 = vmatmul.bf16.gmra.mxu0 %v974
    %v1196 = vpop.f32.mrf.mxu0
    %v1197 = vadd.f32 %v914, %v1196
    %v1198 = vpop.f32.mrf.mxu0
    %v1199 = vadd.f32 %v914, %v1198
    %1200 = vmatmul.bf16.gmra.mxu0 %v977
    %v1201 = vpop.f32.mrf.mxu0
    %v1202 = vadd.f32 %v914, %v1201
    %v1203 = vpop.f32.mrf.mxu0
    %v1204 = vadd.f32 %v914, %v1203
    %1205 = vmatmul.bf16.gmra.mxu0 %v980
    %v1206 = vpop.f32.mrf.mxu0
    %v1207 = vadd.f32 %v914, %v1206
    %v1208 = vpop.f32.mrf.mxu0
    %v1209 = vadd.f32 %v914, %v1208
    %1210 = vmatmul.bf16.gmra.mxu0 %v983
    %v1211 = vpop.f32.mrf.mxu0
    %v1212 = vadd.f32 %v914, %v1211
    %v1213 = vpop.f32.mrf.mxu0
    %v1214 = vadd.f32 %v914, %v1213
    %1215 = vmatmul.bf16.gmra.mxu0 %v986
    %v1216 = vpop.f32.mrf.mxu0
    %v1217 = vadd.f32 %v914, %v1216
    %v1218 = vpop.f32.mrf.mxu0
    %v1219 = vadd.f32 %v914, %v1218
    %1220 = vmatmul.bf16.gmra.mxu0 %v989
    %v1221 = vpop.f32.mrf.mxu0
    %v1222 = vadd.f32 %v914, %v1221
    %v1223 = vpop.f32.mrf.mxu0
    %v1224 = vadd.f32 %v914, %v1223
    %1225 = vmatmul.bf16.gmra.mxu0 %v992
    %v1226 = vpop.f32.mrf.mxu0
    %v1227 = vadd.f32 %v914, %v1226
    %v1228 = vpop.f32.mrf.mxu0
    %v1229 = vadd.f32 %v914, %v1228
    %1230 = vmatmul.bf16.gmra.mxu0 %v995
    %v1231 = vpop.f32.mrf.mxu0
    %v1232 = vadd.f32 %v914, %v1231
    %v1233 = vpop.f32.mrf.mxu0
    %v1234 = vadd.f32 %v914, %v1233
    %1235 = vmatmul.bf16.gmra.mxu0 %v998
    %v1236 = vpop.f32.mrf.mxu0
    %v1237 = vadd.f32 %v914, %v1236
    %v1238 = vpop.f32.mrf.mxu0
    %v1239 = vadd.f32 %v914, %v1238
    %1240 = vmatmul.bf16.gmra.mxu0 %v1001
    %v1241 = vpop.f32.mrf.mxu0
    %v1242 = vadd.f32 %v914, %v1241
    %v1243 = vpop.f32.mrf.mxu0
    %v1244 = vadd.f32 %v914, %v1243
    %1245 = vmatmul.bf16.gmra.mxu0 %v1004
    %v1246 = vpop.f32.mrf.mxu0
    %v1247 = vadd.f32 %v914, %v1246
    %v1248 = vpop.f32.mrf.mxu0
    %v1249 = vadd.f32 %v914, %v1248
    %1250 = vmatmul.bf16.gmra.mxu0 %v1007
    %v1251 = vpop.f32.mrf.mxu0
    %v1252 = vadd.f32 %v914, %v1251
    %v1253 = vpop.f32.mrf.mxu0
    %v1254 = vadd.f32 %v914, %v1253
    %1255 = vmatmul.bf16.gmra.mxu0 %v1010
    %v1256 = vpop.f32.mrf.mxu0
    %v1257 = vadd.f32 %v914, %v1256
    %v1258 = vpop.f32.mrf.mxu0
    %v1259 = vadd.f32 %v914, %v1258
    %1260 = vmatmul.bf16.gmra.mxu0 %v1013
    %v1261 = vpop.f32.mrf.mxu0
    %v1262 = vadd.f32 %v914, %v1261
    %v1263 = vpop.f32.mrf.mxu0
    %v1264 = vadd.f32 %v914, %v1263
    %1265 = vmatmul.bf16.gmra.mxu0 %v1016
    %v1266 = vpop.f32.mrf.mxu0
    %v1267 = vadd.f32 %v914, %v1266
    %v1268 = vpop.f32.mrf.mxu0
    %v1269 = vadd.f32 %v914, %v1268
    %1270 = vmatmul.bf16.gmra.mxu0 %v1019
    %v1271 = vpop.f32.mrf.mxu0
    %v1272 = vadd.f32 %v914, %v1271
    %v1273 = vpop.f32.mrf.mxu0
    %v1274 = vadd.f32 %v914, %v1273
    %1275 = vmatmul.bf16.gmra.mxu0 %v1022
    %v1276 = vpop.f32.mrf.mxu0
    %v1277 = vadd.f32 %v914, %v1276
    %v1278 = vpop.f32.mrf.mxu0
    %v1279 = vadd.f32 %v914, %v1278
    %1280 = vmatmul.bf16.gmra.mxu0 %v1025
    %v1281 = vpop.f32.mrf.mxu0
    %v1282 = vadd.f32 %v914, %v1281
    %v1283 = vpop.f32.mrf.mxu0
    %v1284 = vadd.f32 %v914, %v1283
    %1285 = vmatmul.bf16.gmra.mxu0 %v1028
    %v1286 = vpop.f32.mrf.mxu0
    %v1287 = vadd.f32 %v914, %v1286
    %v1288 = vpop.f32.mrf.mxu0
    %v1289 = vadd.f32 %v914, %v1288
    %1290 = vmatmul.bf16.gmra.mxu0 %v1031
    %v1291 = vpop.f32.mrf.mxu0
    %v1292 = vadd.f32 %v914, %v1291
    %v1293 = vpop.f32.mrf.mxu0
    %v1294 = vadd.f32 %v914, %v1293
    %1295 = vmatmul.bf16.gmra.mxu0 %v1034
    %v1296 = vpop.f32.mrf.mxu0
    %v1297 = vadd.f32 %v914, %v1296
    %v1298 = vpop.f32.mrf.mxu0
    %v1299 = vadd.f32 %v914, %v1298
    %1300 = vmatmul.bf16.gmra.mxu0 %v1037
    %v1301 = vpop.f32.mrf.mxu0
    %v1302 = vadd.f32 %v914, %v1301
    %v1303 = vpop.f32.mrf.mxu0
    %v1304 = vadd.f32 %v914, %v1303
    %1305 = vmatmul.bf16.gmra.mxu0 %v1040
    %v1306 = vpop.f32.mrf.mxu0
    %v1307 = vadd.f32 %v914, %v1306
    %v1308 = vpop.f32.mrf.mxu0
    %v1309 = vadd.f32 %v914, %v1308
    %1310 = vmatmul.bf16.gmra.mxu0 %v1043
    %v1311 = vpop.f32.mrf.mxu0
    %v1312 = vadd.f32 %v914, %v1311
    %v1313 = vpop.f32.mrf.mxu0
    %v1314 = vadd.f32 %v914, %v1313
    %1315 = vmatmul.bf16.gmra.mxu0 %v1046
    %v1316 = vpop.f32.mrf.mxu0
    %v1317 = vadd.f32 %v914, %v1316
    %v1318 = vpop.f32.mrf.mxu0
    %v1319 = vadd.f32 %v914, %v1318
    %1320 = vmatmul.bf16.gmra.mxu0 %v1049
    %v1321 = vpop.f32.mrf.mxu0
    %v1322 = vadd.f32 %v914, %v1321
    %v1323 = vpop.f32.mrf.mxu0
    %v1324 = vadd.f32 %v914, %v1323
    %1325 = vmatmul.bf16.gmra.mxu0 %v1052
    %v1326 = vpop.f32.mrf.mxu0
    %v1327 = vadd.f32 %v914, %v1326
    %v1328 = vpop.f32.mrf.mxu0
    %v1329 = vadd.f32 %v914, %v1328
    %1330 = vmatmul.bf16.gmra.mxu0 %v1055
    %v1331 = vpop.f32.mrf.mxu0
    %v1332 = vadd.f32 %v914, %v1331
    %v1333 = vpop.f32.mrf.mxu0
    %v1334 = vadd.f32 %v914, %v1333
    %1335 = vmatmul.bf16.gmra.mxu0 %v1058
    %v1336 = vpop.f32.mrf.mxu0
    %v1337 = vadd.f32 %v914, %v1336
    %v1338 = vpop.f32.mrf.mxu0
    %v1339 = vadd.f32 %v914, %v1338
    %1340 = vmatmul.bf16.gmra.mxu0 %v1061
    %v1341 = vpop.f32.mrf.mxu0
    %v1342 = vadd.f32 %v914, %v1341
    %v1343 = vpop.f32.mrf.mxu0
    %v1344 = vadd.f32 %v914, %v1343
    %1345 = vmatmul.bf16.gmra.mxu0 %v1064
    %v1346 = vpop.f32.mrf.mxu0
    %v1347 = vadd.f32 %v914, %v1346
    %v1348 = vpop.f32.mrf.mxu0
    %v1349 = vadd.f32 %v914, %v1348
    %1350 = vmatmul.bf16.gmra.mxu0 %v1067
    %v1351 = vpop.f32.mrf.mxu0
    %v1352 = vadd.f32 %v914, %v1351
    %v1353 = vpop.f32.mrf.mxu0
    %v1354 = vadd.f32 %v914, %v1353
    %1355 = vmatmul.bf16.gmra.mxu0 %v1070
    %v1356 = vpop.f32.mrf.mxu0
    %v1357 = vadd.f32 %v914, %v1356
    %v1358 = vpop.f32.mrf.mxu0
    %v1359 = vadd.f32 %v914, %v1358
    %1360 = vmatmul.bf16.gmra.mxu0 %v1073
    %v1361 = vpop.f32.mrf.mxu0
    %v1362 = vadd.f32 %v914, %v1361
    %v1363 = vpop.f32.mrf.mxu0
    %v1364 = vadd.f32 %v914, %v1363
    %1365 = vmatmul.bf16.gmra.mxu0 %v1076
    %v1366 = vpop.f32.mrf.mxu0
    %v1367 = vadd.f32 %v914, %v1366
    %v1368 = vpop.f32.mrf.mxu0
    %v1369 = vadd.f32 %v914, %v1368
    %1370 = vmatmul.bf16.gmra.mxu0 %v1079
    %v1371 = vpop.f32.mrf.mxu0
    %v1372 = vadd.f32 %v914, %v1371
    %v1373 = vpop.f32.mrf.mxu0
    %v1374 = vadd.f32 %v914, %v1373
    %1375 = vmatmul.bf16.gmra.mxu0 %v1082
    %v1376 = vpop.f32.mrf.mxu0
    %v1377 = vadd.f32 %v914, %v1376
    %v1378 = vpop.f32.mrf.mxu0
    %v1379 = vadd.f32 %v914, %v1378
    %1380 = vmatmul.bf16.gmra.mxu0 %v1085
    %v1381 = vpop.f32.mrf.mxu0
    %v1382 = vadd.f32 %v914, %v1381
    %v1383 = vpop.f32.mrf.mxu0
    %v1384 = vadd.f32 %v914, %v1383
    %1385 = vmatmul.bf16.gmra.mxu0 %v1088
    %v1386 = vpop.f32.mrf.mxu0
    %v1387 = vadd.f32 %v914, %v1386
    %v1388 = vpop.f32.mrf.mxu0
    %v1389 = vadd.f32 %v914, %v1388
    %1390 = vmatmul.bf16.gmra.mxu0 %v1091
    %v1391 = vpop.f32.mrf.mxu0
    %v1392 = vadd.f32 %v914, %v1391
    %v1393 = vpop.f32.mrf.mxu0
    %v1394 = vadd.f32 %v914, %v1393
    %1395 = vmatmul.bf16.gmra.mxu0 %v1094
    %v1396 = vpop.f32.mrf.mxu0
    %v1397 = vadd.f32 %v914, %v1396
    %v1398 = vpop.f32.mrf.mxu0
    %v1399 = vadd.f32 %v914, %v1398
    %1400 = vmatmul.bf16.gmra.mxu0 %v1097
    %v1401 = vpop.f32.mrf.mxu0
    %v1402 = vadd.f32 %v914, %v1401
    %v1403 = vpop.f32.mrf.mxu0
    %v1404 = vadd.f32 %v914, %v1403
    %1405 = vmatmul.bf16.gmra.mxu0 %v1100
    %v1406 = vpop.f32.mrf.mxu0
    %v1407 = vadd.f32 %v914, %v1406
    %v1408 = vpop.f32.mrf.mxu0
    %v1409 = vadd.f32 %v914, %v1408
    %1410 = vmatmul.bf16.gmra.mxu0 %v1103
    %v1411 = vpop.f32.mrf.mxu0
    %v1412 = vadd.f32 %v914, %v1411
    %v1413 = vpop.f32.mrf.mxu0
    %v1414 = vadd.f32 %v914, %v1413
    %1415 = vmatmul.bf16.gmra.mxu0 %v1106
    %v1416 = vpop.f32.mrf.mxu0
    %v1417 = vadd.f32 %v914, %v1416
    %v1418 = vpop.f32.mrf.mxu0
    %v1419 = vadd.f32 %v914, %v1418
    %1420 = vmatmul.bf16.gmra.mxu0 %v1109
    %v1421 = vpop.f32.mrf.mxu0
    %v1422 = vadd.f32 %v914, %v1421
    %v1423 = vpop.f32.mrf.mxu0
    %v1424 = vadd.f32 %v914, %v1423
    %1425 = vmatmul.bf16.gmra.mxu0 %v1112
    %v1426 = vpop.f32.mrf.mxu0
    %v1427 = vadd.f32 %v914, %v1426
    %v1428 = vpop.f32.mrf.mxu0
    %v1429 = vadd.f32 %v914, %v1428
    %1430 = vmatmul.bf16.gmra.mxu0 %v1115
    %v1431 = vpop.f32.mrf.mxu0
    %v1432 = vadd.f32 %v914, %v1431
    %v1433 = vpop.f32.mrf.mxu0
    %v1434 = vadd.f32 %v914, %v1433
    %1435 = vmatmul.bf16.gmra.mxu0 %v1118
    %v1436 = vpop.f32.mrf.mxu0
    %v1437 = vadd.f32 %v914, %v1436
    %v1438 = vpop.f32.mrf.mxu0
    %v1439 = vadd.f32 %v914, %v1438
    %1440 = vmatmul.bf16.gmra.mxu0 %v1121
    %v1441 = vpop.f32.mrf.mxu0
    %v1442 = vadd.f32 %v914, %v1441
    %v1443 = vpop.f32.mrf.mxu0
    %v1444 = vadd.f32 %v914, %v1443
    %1445 = vmatmul.bf16.gmra.mxu0 %v1124
    %v1446 = vpop.f32.mrf.mxu0
    %v1447 = vadd.f32 %v914, %v1446
    %v1448 = vpop.f32.mrf.mxu0
    %v1449 = vadd.f32 %v914, %v1448
    %1450 = vmatmul.bf16.gmra.mxu0 %v1127
    %v1451 = vpop.f32.mrf.mxu0
    %v1452 = vadd.f32 %v914, %v1451
    %v1453 = vpop.f32.mrf.mxu0
    %v1454 = vadd.f32 %v914, %v1453
    %1455 = vmatmul.bf16.gmra.mxu0 %v1130
    %v1456 = vpop.f32.mrf.mxu0
    %v1457 = vadd.f32 %v914, %v1456
    %v1458 = vpop.f32.mrf.mxu0
    %v1459 = vadd.f32 %v914, %v1458
    %1460 = vdwg.mxu0
    %v1461 = vmax.f32 %v1142, 0.0
    %v1462 = vmax.f32 %v1144, 0.0
    %v1463 = vmax.f32 %v1147, 0.0
    %v1464 = vmax.f32 %v1149, 0.0
    %v1465 = vmax.f32 %v1152, 0.0
    %v1466 = vmax.f32 %v1154, 0.0
    %v1467 = vmax.f32 %v1157, 0.0
    %v1468 = vmax.f32 %v1159, 0.0
    %v1469 = vmax.f32 %v1162, 0.0
    %v1470 = vmax.f32 %v1164, 0.0
    %v1471 = vmax.f32 %v1167, 0.0
    %v1472 = vmax.f32 %v1169, 0.0
    %v1473 = vmax.f32 %v1172, 0.0
    %v1474 = vmax.f32 %v1174, 0.0
    %v1475 = vmax.f32 %v1177, 0.0
    %v1476 = vmax.f32 %v1179, 0.0
    %v1477 = vmax.f32 %v1182, 0.0
    %v1478 = vmax.f32 %v1184, 0.0
    %v1479 = vmax.f32 %v1187, 0.0
    %v1480 = vmax.f32 %v1189, 0.0
    %v1481 = vmax.f32 %v1192, 0.0
    %v1482 = vmax.f32 %v1194, 0.0
    %v1483 = vmax.f32 %v1197, 0.0
    %v1484 = vmax.f32 %v1199, 0.0
    %v1485 = vmax.f32 %v1202, 0.0
    %v1486 = vmax.f32 %v1204, 0.0
    %v1487 = vmax.f32 %v1207, 0.0
    %v1488 = vmax.f32 %v1209, 0.0
    %v1489 = vmax.f32 %v1212, 0.0
    %v1490 = vmax.f32 %v1214, 0.0
    %v1491 = vmax.f32 %v1217, 0.0
    %v1492 = vmax.f32 %v1219, 0.0
    %v1493 = vmax.f32 %v1222, 0.0
    %v1494 = vmax.f32 %v1224, 0.0
    %v1495 = vmax.f32 %v1227, 0.0
    %v1496 = vmax.f32 %v1229, 0.0
    %v1497 = vmax.f32 %v1232, 0.0
    %v1498 = vmax.f32 %v1234, 0.0
    %v1499 = vmax.f32 %v1237, 0.0
    %v1500 = vmax.f32 %v1239, 0.0
    %v1501 = vmax.f32 %v1242, 0.0
    %v1502 = vmax.f32 %v1244, 0.0
    %v1503 = vmax.f32 %v1247, 0.0
    %v1504 = vmax.f32 %v1249, 0.0
    %v1505 = vmax.f32 %v1252, 0.0
    %v1506 = vmax.f32 %v1254, 0.0
    %v1507 = vmax.f32 %v1257, 0.0
    %v1508 = vmax.f32 %v1259, 0.0
    %v1509 = vmax.f32 %v1262, 0.0
    %v1510 = vmax.f32 %v1264, 0.0
    %v1511 = vmax.f32 %v1267, 0.0
    %v1512 = vmax.f32 %v1269, 0.0
    %v1513 = vmax.f32 %v1272, 0.0
    %v1514 = vmax.f32 %v1274, 0.0
    %v1515 = vmax.f32 %v1277, 0.0
    %v1516 = vmax.f32 %v1279, 0.0
    %v1517 = vmax.f32 %v1282, 0.0
    %v1518 = vmax.f32 %v1284, 0.0
    %v1519 = vmax.f32 %v1287, 0.0
    %v1520 = vmax.f32 %v1289, 0.0
    %v1521 = vmax.f32 %v1292, 0.0
    %v1522 = vmax.f32 %v1294, 0.0
    %v1523 = vmax.f32 %v1297, 0.0
    %v1524 = vmax.f32 %v1299, 0.0
    %v1525 = vmax.f32 %v1302, 0.0
    %v1526 = vmax.f32 %v1304, 0.0
    %v1527 = vmax.f32 %v1307, 0.0
    %v1528 = vmax.f32 %v1309, 0.0
    %v1529 = vmax.f32 %v1312, 0.0
    %v1530 = vmax.f32 %v1314, 0.0
    %v1531 = vmax.f32 %v1317, 0.0
    %v1532 = vmax.f32 %v1319, 0.0
    %v1533 = vmax.f32 %v1322, 0.0
    %v1534 = vmax.f32 %v1324, 0.0
    %v1535 = vmax.f32 %v1327, 0.0
    %v1536 = vmax.f32 %v1329, 0.0
    %v1537 = vmax.f32 %v1332, 0.0
    %v1538 = vmax.f32 %v1334, 0.0
    %v1539 = vmax.f32 %v1337, 0.0
    %v1540 = vmax.f32 %v1339, 0.0
    %v1541 = vmax.f32 %v1342, 0.0
    %v1542 = vmax.f32 %v1344, 0.0
    %v1543 = vmax.f32 %v1347, 0.0
    %v1544 = vmax.f32 %v1349, 0.0
    %v1545 = vmax.f32 %v1352, 0.0
    %v1546 = vmax.f32 %v1354, 0.0
    %v1547 = vmax.f32 %v1357, 0.0
    %v1548 = vmax.f32 %v1359, 0.0
    %v1549 = vmax.f32 %v1362, 0.0
    %v1550 = vmax.f32 %v1364, 0.0
    %v1551 = vmax.f32 %v1367, 0.0
    %v1552 = vmax.f32 %v1369, 0.0
    %v1553 = vmax.f32 %v1372, 0.0
    %v1554 = vmax.f32 %v1374, 0.0
    %v1555 = vmax.f32 %v1377, 0.0
    %v1556 = vmax.f32 %v1379, 0.0
    %v1557 = vmax.f32 %v1382, 0.0
    %v1558 = vmax.f32 %v1384, 0.0
    %v1559 = vmax.f32 %v1387, 0.0
    %v1560 = vmax.f32 %v1389, 0.0
    %v1561 = vmax.f32 %v1392, 0.0
    %v1562 = vmax.f32 %v1394, 0.0
    %v1563 = vmax.f32 %v1397, 0.0
    %v1564 = vmax.f32 %v1399, 0.0
    %v1565 = vmax.f32 %v1402, 0.0
    %v1566 = vmax.f32 %v1404, 0.0
    %v1567 = vmax.f32 %v1407, 0.0
    %v1568 = vmax.f32 %v1409, 0.0
    %v1569 = vmax.f32 %v1412, 0.0
    %v1570 = vmax.f32 %v1414, 0.0
    %v1571 = vmax.f32 %v1417, 0.0
    %v1572 = vmax.f32 %v1419, 0.0
    %v1573 = vmax.f32 %v1422, 0.0
    %v1574 = vmax.f32 %v1424, 0.0
    %v1575 = vmax.f32 %v1427, 0.0
    %v1576 = vmax.f32 %v1429, 0.0
    %v1577 = vmax.f32 %v1432, 0.0
    %v1578 = vmax.f32 %v1434, 0.0
    %v1579 = vmax.f32 %v1437, 0.0
    %v1580 = vmax.f32 %v1439, 0.0
    %v1581 = vmax.f32 %v1442, 0.0
    %v1582 = vmax.f32 %v1444, 0.0
    %v1583 = vmax.f32 %v1447, 0.0
    %v1584 = vmax.f32 %v1449, 0.0
    %v1585 = vmax.f32 %v1452, 0.0
    %v1586 = vmax.f32 %v1454, 0.0
    %v1587 = vmax.f32 %v1457, 0.0
    %v1588 = vmax.f32 %v1459, 0.0
    %v1589 = vpack.c.bf16 %v1462, %v1461
    %v1590 = vpack.c.bf16 %v1464, %v1463
    %v1591 = vpack.c.bf16 %v1466, %v1465
    %v1592 = vpack.c.bf16 %v1468, %v1467
    %v1593 = vpack.c.bf16 %v1470, %v1469
    %v1594 = vpack.c.bf16 %v1472, %v1471
    %v1595 = vpack.c.bf16 %v1474, %v1473
    %v1596 = vpack.c.bf16 %v1476, %v1475
    %v1597 = vpack.c.bf16 %v1478, %v1477
    %v1598 = vpack.c.bf16 %v1480, %v1479
    %v1599 = vpack.c.bf16 %v1482, %v1481
    %v1600 = vpack.c.bf16 %v1484, %v1483
    %v1601 = vpack.c.bf16 %v1486, %v1485
    %v1602 = vpack.c.bf16 %v1488, %v1487
    %v1603 = vpack.c.bf16 %v1490, %v1489
    %v1604 = vpack.c.bf16 %v1492, %v1491
    %v1605 = vpack.c.bf16 %v1494, %v1493
    %v1606 = vpack.c.bf16 %v1496, %v1495
    %v1607 = vpack.c.bf16 %v1498, %v1497
    %v1608 = vpack.c.bf16 %v1500, %v1499
    %v1609 = vpack.c.bf16 %v1502, %v1501
    %v1610 = vpack.c.bf16 %v1504, %v1503
    %v1611 = vpack.c.bf16 %v1506, %v1505
    %v1612 = vpack.c.bf16 %v1508, %v1507
    %v1613 = vpack.c.bf16 %v1510, %v1509
    %v1614 = vpack.c.bf16 %v1512, %v1511
    %v1615 = vpack.c.bf16 %v1514, %v1513
    %v1616 = vpack.c.bf16 %v1516, %v1515
    %v1617 = vpack.c.bf16 %v1518, %v1517
    %v1618 = vpack.c.bf16 %v1520, %v1519
    %v1619 = vpack.c.bf16 %v1522, %v1521
    %v1620 = vpack.c.bf16 %v1524, %v1523
    %v1621 = vpack.c.bf16 %v1526, %v1525
    %v1622 = vpack.c.bf16 %v1528, %v1527
    %v1623 = vpack.c.bf16 %v1530, %v1529
    %v1624 = vpack.c.bf16 %v1532, %v1531
    %v1625 = vpack.c.bf16 %v1534, %v1533
    %v1626 = vpack.c.bf16 %v1536, %v1535
    %v1627 = vpack.c.bf16 %v1538, %v1537
    %v1628 = vpack.c.bf16 %v1540, %v1539
    %v1629 = vpack.c.bf16 %v1542, %v1541
    %v1630 = vpack.c.bf16 %v1544, %v1543
    %v1631 = vpack.c.bf16 %v1546, %v1545
    %v1632 = vpack.c.bf16 %v1548, %v1547
    %v1633 = vpack.c.bf16 %v1550, %v1549
    %v1634 = vpack.c.bf16 %v1552, %v1551
    %v1635 = vpack.c.bf16 %v1554, %v1553
    %v1636 = vpack.c.bf16 %v1556, %v1555
    %v1637 = vpack.c.bf16 %v1558, %v1557
    %v1638 = vpack.c.bf16 %v1560, %v1559
    %v1639 = vpack.c.bf16 %v1562, %v1561
    %v1640 = vpack.c.bf16 %v1564, %v1563
    %v1641 = vpack.c.bf16 %v1566, %v1565
    %v1642 = vpack.c.bf16 %v1568, %v1567
    %v1643 = vpack.c.bf16 %v1570, %v1569
    %v1644 = vpack.c.bf16 %v1572, %v1571
    %v1645 = vpack.c.bf16 %v1574, %v1573
    %v1646 = vpack.c.bf16 %v1576, %v1575
    %v1647 = vpack.c.bf16 %v1578, %v1577
    %v1648 = vpack.c.bf16 %v1580, %v1579
    %v1649 = vpack.c.bf16 %v1582, %v1581
    %v1650 = vpack.c.bf16 %v1584, %v1583
    %v1651 = vpack.c.bf16 %v1586, %v1585
    %v1652 = vpack.c.bf16 %v1588, %v1587
    %v1653 = vld [vmem:[%s3] sm:$0xf]
    %v1654 = vld [vmem:[%s3 + $0x4] sm:$0xf]
    %v1655 = vld [vmem:[%s3 + $0x8] sm:$0xf]
    %v1656 = vld [vmem:[%s3 + $0xc] sm:$0xf]
    %v1657 = vld [vmem:[%s3 + $0x10] sm:$0xf]
    %v1658 = vld [vmem:[%s3 + $0x14] sm:$0xf]
    %v1659 = vld [vmem:[%s3 + $0x18] sm:$0xf]
    %v1660 = vld [vmem:[%s3 + $0x1c] sm:$0xf]
    %v1661 = vld [vmem:[%s8 + $0x2] ss:$0 sm:$0xff]
    %v1670 = vunpack.c.l.b16 %v1653
    %v1671 = vunpack.c.l.b16 %v1654
    %v1672 = vunpack.c.l.b16 %v1655
    %v1673 = vunpack.c.l.b16 %v1656
    %v1674 = vunpack.c.l.b16 %v1657
    %v1675 = vunpack.c.l.b16 %v1658
    %v1676 = vunpack.c.l.b16 %v1659
    %v1677 = vunpack.c.l.b16 %v1660
    %v1678 = vpack.c.b16 %v1671, %v1670
    %v1679 = vpack.c.b16 %v1673, %v1672
    %v1680 = vpack.c.b16 %v1675, %v1674
    %v1681 = vpack.c.b16 %v1677, %v1676
    %v1687 = vsel %vm939, %v1589, 0
    %v1690 = vsel %vm939, %v1590, 0
    %v1693 = vsel %vm939, %v1591, 0
    %v1696 = vsel %vm939, %v1592, 0
    %v1699 = vsel %vm939, %v1593, 0
    %v1702 = vsel %vm939, %v1594, 0
    %v1705 = vsel %vm939, %v1595, 0
    %v1708 = vsel %vm939, %v1596, 0
    %v1711 = vsel %vm939, %v1597, 0
    %v1714 = vsel %vm939, %v1598, 0
    %v1717 = vsel %vm939, %v1599, 0
    %v1720 = vsel %vm939, %v1600, 0
    %v1723 = vsel %vm939, %v1601, 0
    %v1726 = vsel %vm939, %v1602, 0
    %v1729 = vsel %vm939, %v1603, 0
    %v1732 = vsel %vm939, %v1604, 0
    %v1735 = vsel %vm939, %v1605, 0
    %v1738 = vsel %vm939, %v1606, 0
    %v1741 = vsel %vm939, %v1607, 0
    %v1744 = vsel %vm939, %v1608, 0
    %v1747 = vsel %vm939, %v1609, 0
    %v1750 = vsel %vm939, %v1610, 0
    %v1753 = vsel %vm939, %v1611, 0
    %v1756 = vsel %vm939, %v1612, 0
    %v1759 = vsel %vm939, %v1613, 0
    %v1762 = vsel %vm939, %v1614, 0
    %v1765 = vsel %vm939, %v1615, 0
    %v1768 = vsel %vm939, %v1616, 0
    %v1771 = vsel %vm939, %v1617, 0
    %v1774 = vsel %vm939, %v1618, 0
    %v1777 = vsel %vm939, %v1619, 0
    %v1780 = vsel %vm939, %v1620, 0
    %v1783 = vsel %vm939, %v1621, 0
    %v1786 = vsel %vm939, %v1622, 0
    %v1789 = vsel %vm939, %v1623, 0
    %v1792 = vsel %vm939, %v1624, 0
    %v1795 = vsel %vm939, %v1625, 0
    %v1798 = vsel %vm939, %v1626, 0
    %v1801 = vsel %vm939, %v1627, 0
    %v1804 = vsel %vm939, %v1628, 0
    %v1807 = vsel %vm939, %v1629, 0
    %v1810 = vsel %vm939, %v1630, 0
    %v1813 = vsel %vm939, %v1631, 0
    %v1816 = vsel %vm939, %v1632, 0
    %v1819 = vsel %vm939, %v1633, 0
    %v1822 = vsel %vm939, %v1634, 0
    %v1825 = vsel %vm939, %v1635, 0
    %v1828 = vsel %vm939, %v1636, 0
    %v1831 = vsel %vm939, %v1637, 0
    %v1834 = vsel %vm939, %v1638, 0
    %v1837 = vsel %vm939, %v1639, 0
    %v1840 = vsel %vm939, %v1640, 0
    %v1843 = vsel %vm939, %v1641, 0
    %v1846 = vsel %vm939, %v1642, 0
    %v1849 = vsel %vm939, %v1643, 0
    %v1852 = vsel %vm939, %v1644, 0
    %v1855 = vsel %vm939, %v1645, 0
    %v1858 = vsel %vm939, %v1646, 0
    %v1861 = vsel %vm939, %v1647, 0
    %v1864 = vsel %vm939, %v1648, 0
    %v1867 = vsel %vm939, %v1649, 0
    %v1870 = vsel %vm939, %v1650, 0
    %v1873 = vsel %vm939, %v1651, 0
    %v1876 = vsel %vm939, %v1652, 0
    %1878 = vmatpush.bf16.msra.mxu0 0
    %1879 = vmatpush.bf16.msra.mxu0 0
    %1880 = vmatpush.bf16.msra.mxu0 0
    %1881 = vmatpush.bf16.msra.mxu0 0
    %1882 = vmatpush.bf16.msra.mxu0 %v1681
    %1883 = vmatpush.bf16.msra.mxu0 %v1680
    %1884 = vmatpush.bf16.msra.mxu0 %v1679
    %1885 = vmatpush.bf16.msra.mxu0 %v1678
    %1886 = vmatmul.bf16.gmra.mxu0 %v1687
    %v1887 = vpop.f32.mrf.mxu0
    %v1888 = vadd.f32 %v1661, %v1887
    %v1889 = vpop.f32.mrf.mxu0
    %v1890 = vadd.f32 %v1661, %v1889
    %1891 = vmatmul.bf16.gmra.mxu0 %v1690
    %v1892 = vpop.f32.mrf.mxu0
    %v1893 = vadd.f32 %v1661, %v1892
    %v1894 = vpop.f32.mrf.mxu0
    %v1895 = vadd.f32 %v1661, %v1894
    %1896 = vmatmul.bf16.gmra.mxu0 %v1693
    %v1897 = vpop.f32.mrf.mxu0
    %v1898 = vadd.f32 %v1661, %v1897
    %v1899 = vpop.f32.mrf.mxu0
    %v1900 = vadd.f32 %v1661, %v1899
    %1901 = vmatmul.bf16.gmra.mxu0 %v1696
    %v1902 = vpop.f32.mrf.mxu0
    %v1903 = vadd.f32 %v1661, %v1902
    %v1904 = vpop.f32.mrf.mxu0
    %v1905 = vadd.f32 %v1661, %v1904
    %1906 = vmatmul.bf16.gmra.mxu0 %v1699
    %v1907 = vpop.f32.mrf.mxu0
    %v1908 = vadd.f32 %v1661, %v1907
    %v1909 = vpop.f32.mrf.mxu0
    %v1910 = vadd.f32 %v1661, %v1909
    %1911 = vmatmul.bf16.gmra.mxu0 %v1702
    %v1912 = vpop.f32.mrf.mxu0
    %v1913 = vadd.f32 %v1661, %v1912
    %v1914 = vpop.f32.mrf.mxu0
    %v1915 = vadd.f32 %v1661, %v1914
    %1916 = vmatmul.bf16.gmra.mxu0 %v1705
    %v1917 = vpop.f32.mrf.mxu0
    %v1918 = vadd.f32 %v1661, %v1917
    %v1919 = vpop.f32.mrf.mxu0
    %v1920 = vadd.f32 %v1661, %v1919
    %1921 = vmatmul.bf16.gmra.mxu0 %v1708
    %v1922 = vpop.f32.mrf.mxu0
    %v1923 = vadd.f32 %v1661, %v1922
    %v1924 = vpop.f32.mrf.mxu0
    %v1925 = vadd.f32 %v1661, %v1924
    %1926 = vmatmul.bf16.gmra.mxu0 %v1711
    %v1927 = vpop.f32.mrf.mxu0
    %v1928 = vadd.f32 %v1661, %v1927
    %v1929 = vpop.f32.mrf.mxu0
    %v1930 = vadd.f32 %v1661, %v1929
    %1931 = vmatmul.bf16.gmra.mxu0 %v1714
    %v1932 = vpop.f32.mrf.mxu0
    %v1933 = vadd.f32 %v1661, %v1932
    %v1934 = vpop.f32.mrf.mxu0
    %v1935 = vadd.f32 %v1661, %v1934
    %1936 = vmatmul.bf16.gmra.mxu0 %v1717
    %v1937 = vpop.f32.mrf.mxu0
    %v1938 = vadd.f32 %v1661, %v1937
    %v1939 = vpop.f32.mrf.mxu0
    %v1940 = vadd.f32 %v1661, %v1939
    %1941 = vmatmul.bf16.gmra.mxu0 %v1720
    %v1942 = vpop.f32.mrf.mxu0
    %v1943 = vadd.f32 %v1661, %v1942
    %v1944 = vpop.f32.mrf.mxu0
    %v1945 = vadd.f32 %v1661, %v1944
    %1946 = vmatmul.bf16.gmra.mxu0 %v1723
    %v1947 = vpop.f32.mrf.mxu0
    %v1948 = vadd.f32 %v1661, %v1947
    %v1949 = vpop.f32.mrf.mxu0
    %v1950 = vadd.f32 %v1661, %v1949
    %1951 = vmatmul.bf16.gmra.mxu0 %v1726
    %v1952 = vpop.f32.mrf.mxu0
    %v1953 = vadd.f32 %v1661, %v1952
    %v1954 = vpop.f32.mrf.mxu0
    %v1955 = vadd.f32 %v1661, %v1954
    %1956 = vmatmul.bf16.gmra.mxu0 %v1729
    %v1957 = vpop.f32.mrf.mxu0
    %v1958 = vadd.f32 %v1661, %v1957
    %v1959 = vpop.f32.mrf.mxu0
    %v1960 = vadd.f32 %v1661, %v1959
    %1961 = vmatmul.bf16.gmra.mxu0 %v1732
    %v1962 = vpop.f32.mrf.mxu0
    %v1963 = vadd.f32 %v1661, %v1962
    %v1964 = vpop.f32.mrf.mxu0
    %v1965 = vadd.f32 %v1661, %v1964
    %1966 = vmatmul.bf16.gmra.mxu0 %v1735
    %v1967 = vpop.f32.mrf.mxu0
    %v1968 = vadd.f32 %v1661, %v1967
    %v1969 = vpop.f32.mrf.mxu0
    %v1970 = vadd.f32 %v1661, %v1969
    %1971 = vmatmul.bf16.gmra.mxu0 %v1738
    %v1972 = vpop.f32.mrf.mxu0
    %v1973 = vadd.f32 %v1661, %v1972
    %v1974 = vpop.f32.mrf.mxu0
    %v1975 = vadd.f32 %v1661, %v1974
    %1976 = vmatmul.bf16.gmra.mxu0 %v1741
    %v1977 = vpop.f32.mrf.mxu0
    %v1978 = vadd.f32 %v1661, %v1977
    %v1979 = vpop.f32.mrf.mxu0
    %v1980 = vadd.f32 %v1661, %v1979
    %1981 = vmatmul.bf16.gmra.mxu0 %v1744
    %v1982 = vpop.f32.mrf.mxu0
    %v1983 = vadd.f32 %v1661, %v1982
    %v1984 = vpop.f32.mrf.mxu0
    %v1985 = vadd.f32 %v1661, %v1984
    %1986 = vmatmul.bf16.gmra.mxu0 %v1747
    %v1987 = vpop.f32.mrf.mxu0
    %v1988 = vadd.f32 %v1661, %v1987
    %v1989 = vpop.f32.mrf.mxu0
    %v1990 = vadd.f32 %v1661, %v1989
    %1991 = vmatmul.bf16.gmra.mxu0 %v1750
    %v1992 = vpop.f32.mrf.mxu0
    %v1993 = vadd.f32 %v1661, %v1992
    %v1994 = vpop.f32.mrf.mxu0
    %v1995 = vadd.f32 %v1661, %v1994
    %1996 = vmatmul.bf16.gmra.mxu0 %v1753
    %v1997 = vpop.f32.mrf.mxu0
    %v1998 = vadd.f32 %v1661, %v1997
    %v1999 = vpop.f32.mrf.mxu0
    %v2000 = vadd.f32 %v1661, %v1999
    %2001 = vmatmul.bf16.gmra.mxu0 %v1756
    %v2002 = vpop.f32.mrf.mxu0
    %v2003 = vadd.f32 %v1661, %v2002
    %v2004 = vpop.f32.mrf.mxu0
    %v2005 = vadd.f32 %v1661, %v2004
    %2006 = vmatmul.bf16.gmra.mxu0 %v1759
    %v2007 = vpop.f32.mrf.mxu0
    %v2008 = vadd.f32 %v1661, %v2007
    %v2009 = vpop.f32.mrf.mxu0
    %v2010 = vadd.f32 %v1661, %v2009
    %2011 = vmatmul.bf16.gmra.mxu0 %v1762
    %v2012 = vpop.f32.mrf.mxu0
    %v2013 = vadd.f32 %v1661, %v2012
    %v2014 = vpop.f32.mrf.mxu0
    %v2015 = vadd.f32 %v1661, %v2014
    %2016 = vmatmul.bf16.gmra.mxu0 %v1765
    %v2017 = vpop.f32.mrf.mxu0
    %v2018 = vadd.f32 %v1661, %v2017
    %v2019 = vpop.f32.mrf.mxu0
    %v2020 = vadd.f32 %v1661, %v2019
    %2021 = vmatmul.bf16.gmra.mxu0 %v1768
    %v2022 = vpop.f32.mrf.mxu0
    %v2023 = vadd.f32 %v1661, %v2022
    %v2024 = vpop.f32.mrf.mxu0
    %v2025 = vadd.f32 %v1661, %v2024
    %2026 = vmatmul.bf16.gmra.mxu0 %v1771
    %v2027 = vpop.f32.mrf.mxu0
    %v2028 = vadd.f32 %v1661, %v2027
    %v2029 = vpop.f32.mrf.mxu0
    %v2030 = vadd.f32 %v1661, %v2029
    %2031 = vmatmul.bf16.gmra.mxu0 %v1774
    %v2032 = vpop.f32.mrf.mxu0
    %v2033 = vadd.f32 %v1661, %v2032
    %v2034 = vpop.f32.mrf.mxu0
    %v2035 = vadd.f32 %v1661, %v2034
    %2036 = vmatmul.bf16.gmra.mxu0 %v1777
    %v2037 = vpop.f32.mrf.mxu0
    %v2038 = vadd.f32 %v1661, %v2037
    %v2039 = vpop.f32.mrf.mxu0
    %v2040 = vadd.f32 %v1661, %v2039
    %2041 = vmatmul.bf16.gmra.mxu0 %v1780
    %v2042 = vpop.f32.mrf.mxu0
    %v2043 = vadd.f32 %v1661, %v2042
    %v2044 = vpop.f32.mrf.mxu0
    %v2045 = vadd.f32 %v1661, %v2044
    %2046 = vmatmul.bf16.gmra.mxu0 %v1783
    %v2047 = vpop.f32.mrf.mxu0
    %v2048 = vadd.f32 %v1661, %v2047
    %v2049 = vpop.f32.mrf.mxu0
    %v2050 = vadd.f32 %v1661, %v2049
    %2051 = vmatmul.bf16.gmra.mxu0 %v1786
    %v2052 = vpop.f32.mrf.mxu0
    %v2053 = vadd.f32 %v1661, %v2052
    %v2054 = vpop.f32.mrf.mxu0
    %v2055 = vadd.f32 %v1661, %v2054
    %2056 = vmatmul.bf16.gmra.mxu0 %v1789
    %v2057 = vpop.f32.mrf.mxu0
    %v2058 = vadd.f32 %v1661, %v2057
    %v2059 = vpop.f32.mrf.mxu0
    %v2060 = vadd.f32 %v1661, %v2059
    %2061 = vmatmul.bf16.gmra.mxu0 %v1792
    %v2062 = vpop.f32.mrf.mxu0
    %v2063 = vadd.f32 %v1661, %v2062
    %v2064 = vpop.f32.mrf.mxu0
    %v2065 = vadd.f32 %v1661, %v2064
    %2066 = vmatmul.bf16.gmra.mxu0 %v1795
    %v2067 = vpop.f32.mrf.mxu0
    %v2068 = vadd.f32 %v1661, %v2067
    %v2069 = vpop.f32.mrf.mxu0
    %v2070 = vadd.f32 %v1661, %v2069
    %2071 = vmatmul.bf16.gmra.mxu0 %v1798
    %v2072 = vpop.f32.mrf.mxu0
    %v2073 = vadd.f32 %v1661, %v2072
    %v2074 = vpop.f32.mrf.mxu0
    %v2075 = vadd.f32 %v1661, %v2074
    %2076 = vmatmul.bf16.gmra.mxu0 %v1801
    %v2077 = vpop.f32.mrf.mxu0
    %v2078 = vadd.f32 %v1661, %v2077
    %v2079 = vpop.f32.mrf.mxu0
    %v2080 = vadd.f32 %v1661, %v2079
    %2081 = vmatmul.bf16.gmra.mxu0 %v1804
    %v2082 = vpop.f32.mrf.mxu0
    %v2083 = vadd.f32 %v1661, %v2082
    %v2084 = vpop.f32.mrf.mxu0
    %v2085 = vadd.f32 %v1661, %v2084
    %2086 = vmatmul.bf16.gmra.mxu0 %v1807
    %v2087 = vpop.f32.mrf.mxu0
    %v2088 = vadd.f32 %v1661, %v2087
    %v2089 = vpop.f32.mrf.mxu0
    %v2090 = vadd.f32 %v1661, %v2089
    %2091 = vmatmul.bf16.gmra.mxu0 %v1810
    %v2092 = vpop.f32.mrf.mxu0
    %v2093 = vadd.f32 %v1661, %v2092
    %v2094 = vpop.f32.mrf.mxu0
    %v2095 = vadd.f32 %v1661, %v2094
    %2096 = vmatmul.bf16.gmra.mxu0 %v1813
    %v2097 = vpop.f32.mrf.mxu0
    %v2098 = vadd.f32 %v1661, %v2097
    %v2099 = vpop.f32.mrf.mxu0
    %v2100 = vadd.f32 %v1661, %v2099
    %2101 = vmatmul.bf16.gmra.mxu0 %v1816
    %v2102 = vpop.f32.mrf.mxu0
    %v2103 = vadd.f32 %v1661, %v2102
    %v2104 = vpop.f32.mrf.mxu0
    %v2105 = vadd.f32 %v1661, %v2104
    %2106 = vmatmul.bf16.gmra.mxu0 %v1819
    %v2107 = vpop.f32.mrf.mxu0
    %v2108 = vadd.f32 %v1661, %v2107
    %v2109 = vpop.f32.mrf.mxu0
    %v2110 = vadd.f32 %v1661, %v2109
    %2111 = vmatmul.bf16.gmra.mxu0 %v1822
    %v2112 = vpop.f32.mrf.mxu0
    %v2113 = vadd.f32 %v1661, %v2112
    %v2114 = vpop.f32.mrf.mxu0
    %v2115 = vadd.f32 %v1661, %v2114
    %2116 = vmatmul.bf16.gmra.mxu0 %v1825
    %v2117 = vpop.f32.mrf.mxu0
    %v2118 = vadd.f32 %v1661, %v2117
    %v2119 = vpop.f32.mrf.mxu0
    %v2120 = vadd.f32 %v1661, %v2119
    %2121 = vmatmul.bf16.gmra.mxu0 %v1828
    %v2122 = vpop.f32.mrf.mxu0
    %v2123 = vadd.f32 %v1661, %v2122
    %v2124 = vpop.f32.mrf.mxu0
    %v2125 = vadd.f32 %v1661, %v2124
    %2126 = vmatmul.bf16.gmra.mxu0 %v1831
    %v2127 = vpop.f32.mrf.mxu0
    %v2128 = vadd.f32 %v1661, %v2127
    %v2129 = vpop.f32.mrf.mxu0
    %v2130 = vadd.f32 %v1661, %v2129
    %2131 = vmatmul.bf16.gmra.mxu0 %v1834
    %v2132 = vpop.f32.mrf.mxu0
    %v2133 = vadd.f32 %v1661, %v2132
    %v2134 = vpop.f32.mrf.mxu0
    %v2135 = vadd.f32 %v1661, %v2134
    %2136 = vmatmul.bf16.gmra.mxu0 %v1837
    %v2137 = vpop.f32.mrf.mxu0
    %v2138 = vadd.f32 %v1661, %v2137
    %v2139 = vpop.f32.mrf.mxu0
    %v2140 = vadd.f32 %v1661, %v2139
    %2141 = vmatmul.bf16.gmra.mxu0 %v1840
    %v2142 = vpop.f32.mrf.mxu0
    %v2143 = vadd.f32 %v1661, %v2142
    %v2144 = vpop.f32.mrf.mxu0
    %v2145 = vadd.f32 %v1661, %v2144
    %2146 = vmatmul.bf16.gmra.mxu0 %v1843
    %v2147 = vpop.f32.mrf.mxu0
    %v2148 = vadd.f32 %v1661, %v2147
    %v2149 = vpop.f32.mrf.mxu0
    %v2150 = vadd.f32 %v1661, %v2149
    %2151 = vmatmul.bf16.gmra.mxu0 %v1846
    %v2152 = vpop.f32.mrf.mxu0
    %v2153 = vadd.f32 %v1661, %v2152
    %v2154 = vpop.f32.mrf.mxu0
    %v2155 = vadd.f32 %v1661, %v2154
    %2156 = vmatmul.bf16.gmra.mxu0 %v1849
    %v2157 = vpop.f32.mrf.mxu0
    %v2158 = vadd.f32 %v1661, %v2157
    %v2159 = vpop.f32.mrf.mxu0
    %v2160 = vadd.f32 %v1661, %v2159
    %2161 = vmatmul.bf16.gmra.mxu0 %v1852
    %v2162 = vpop.f32.mrf.mxu0
    %v2163 = vadd.f32 %v1661, %v2162
    %v2164 = vpop.f32.mrf.mxu0
    %v2165 = vadd.f32 %v1661, %v2164
    %2166 = vmatmul.bf16.gmra.mxu0 %v1855
    %v2167 = vpop.f32.mrf.mxu0
    %v2168 = vadd.f32 %v1661, %v2167
    %v2169 = vpop.f32.mrf.mxu0
    %v2170 = vadd.f32 %v1661, %v2169
    %2171 = vmatmul.bf16.gmra.mxu0 %v1858
    %v2172 = vpop.f32.mrf.mxu0
    %v2173 = vadd.f32 %v1661, %v2172
    %v2174 = vpop.f32.mrf.mxu0
    %v2175 = vadd.f32 %v1661, %v2174
    %2176 = vmatmul.bf16.gmra.mxu0 %v1861
    %v2177 = vpop.f32.mrf.mxu0
    %v2178 = vadd.f32 %v1661, %v2177
    %v2179 = vpop.f32.mrf.mxu0
    %v2180 = vadd.f32 %v1661, %v2179
    %2181 = vmatmul.bf16.gmra.mxu0 %v1864
    %v2182 = vpop.f32.mrf.mxu0
    %v2183 = vadd.f32 %v1661, %v2182
    %v2184 = vpop.f32.mrf.mxu0
    %v2185 = vadd.f32 %v1661, %v2184
    %2186 = vmatmul.bf16.gmra.mxu0 %v1867
    %v2187 = vpop.f32.mrf.mxu0
    %v2188 = vadd.f32 %v1661, %v2187
    %v2189 = vpop.f32.mrf.mxu0
    %v2190 = vadd.f32 %v1661, %v2189
    %2191 = vmatmul.bf16.gmra.mxu0 %v1870
    %v2192 = vpop.f32.mrf.mxu0
    %v2193 = vadd.f32 %v1661, %v2192
    %v2194 = vpop.f32.mrf.mxu0
    %v2195 = vadd.f32 %v1661, %v2194
    %2196 = vmatmul.bf16.gmra.mxu0 %v1873
    %v2197 = vpop.f32.mrf.mxu0
    %v2198 = vadd.f32 %v1661, %v2197
    %v2199 = vpop.f32.mrf.mxu0
    %v2200 = vadd.f32 %v1661, %v2199
    %2201 = vmatmul.bf16.gmra.mxu0 %v1876
    %v2202 = vpop.f32.mrf.mxu0
    %v2203 = vadd.f32 %v1661, %v2202
    %v2204 = vpop.f32.mrf.mxu0
    %v2205 = vadd.f32 %v1661, %v2204
    %2206 = vdwg.mxu0
    %v2207 = vmax.f32 %v1888, 0.0
    %v2208 = vmax.f32 %v1890, 0.0
    %v2209 = vmax.f32 %v1893, 0.0
    %v2210 = vmax.f32 %v1895, 0.0
    %v2211 = vmax.f32 %v1898, 0.0
    %v2212 = vmax.f32 %v1900, 0.0
    %v2213 = vmax.f32 %v1903, 0.0
    %v2214 = vmax.f32 %v1905, 0.0
    %v2215 = vmax.f32 %v1908, 0.0
    %v2216 = vmax.f32 %v1910, 0.0
    %v2217 = vmax.f32 %v1913, 0.0
    %v2218 = vmax.f32 %v1915, 0.0
    %v2219 = vmax.f32 %v1918, 0.0
    %v2220 = vmax.f32 %v1920, 0.0
    %v2221 = vmax.f32 %v1923, 0.0
    %v2222 = vmax.f32 %v1925, 0.0
    %v2223 = vmax.f32 %v1928, 0.0
    %v2224 = vmax.f32 %v1930, 0.0
    %v2225 = vmax.f32 %v1933, 0.0
    %v2226 = vmax.f32 %v1935, 0.0
    %v2227 = vmax.f32 %v1938, 0.0
    %v2228 = vmax.f32 %v1940, 0.0
    %v2229 = vmax.f32 %v1943, 0.0
    %v2230 = vmax.f32 %v1945, 0.0
    %v2231 = vmax.f32 %v1948, 0.0
    %v2232 = vmax.f32 %v1950, 0.0
    %v2233 = vmax.f32 %v1953, 0.0
    %v2234 = vmax.f32 %v1955, 0.0
    %v2235 = vmax.f32 %v1958, 0.0
    %v2236 = vmax.f32 %v1960, 0.0
    %v2237 = vmax.f32 %v1963, 0.0
    %v2238 = vmax.f32 %v1965, 0.0
    %v2239 = vmax.f32 %v1968, 0.0
    %v2240 = vmax.f32 %v1970, 0.0
    %v2241 = vmax.f32 %v1973, 0.0
    %v2242 = vmax.f32 %v1975, 0.0
    %v2243 = vmax.f32 %v1978, 0.0
    %v2244 = vmax.f32 %v1980, 0.0
    %v2245 = vmax.f32 %v1983, 0.0
    %v2246 = vmax.f32 %v1985, 0.0
    %v2247 = vmax.f32 %v1988, 0.0
    %v2248 = vmax.f32 %v1990, 0.0
    %v2249 = vmax.f32 %v1993, 0.0
    %v2250 = vmax.f32 %v1995, 0.0
    %v2251 = vmax.f32 %v1998, 0.0
    %v2252 = vmax.f32 %v2000, 0.0
    %v2253 = vmax.f32 %v2003, 0.0
    %v2254 = vmax.f32 %v2005, 0.0
    %v2255 = vmax.f32 %v2008, 0.0
    %v2256 = vmax.f32 %v2010, 0.0
    %v2257 = vmax.f32 %v2013, 0.0
    %v2258 = vmax.f32 %v2015, 0.0
    %v2259 = vmax.f32 %v2018, 0.0
    %v2260 = vmax.f32 %v2020, 0.0
    %v2261 = vmax.f32 %v2023, 0.0
    %v2262 = vmax.f32 %v2025, 0.0
    %v2263 = vmax.f32 %v2028, 0.0
    %v2264 = vmax.f32 %v2030, 0.0
    %v2265 = vmax.f32 %v2033, 0.0
    %v2266 = vmax.f32 %v2035, 0.0
    %v2267 = vmax.f32 %v2038, 0.0
    %v2268 = vmax.f32 %v2040, 0.0
    %v2269 = vmax.f32 %v2043, 0.0
    %v2270 = vmax.f32 %v2045, 0.0
    %v2271 = vmax.f32 %v2048, 0.0
    %v2272 = vmax.f32 %v2050, 0.0
    %v2273 = vmax.f32 %v2053, 0.0
    %v2274 = vmax.f32 %v2055, 0.0
    %v2275 = vmax.f32 %v2058, 0.0
    %v2276 = vmax.f32 %v2060, 0.0
    %v2277 = vmax.f32 %v2063, 0.0
    %v2278 = vmax.f32 %v2065, 0.0
    %v2279 = vmax.f32 %v2068, 0.0
    %v2280 = vmax.f32 %v2070, 0.0
    %v2281 = vmax.f32 %v2073, 0.0
    %v2282 = vmax.f32 %v2075, 0.0
    %v2283 = vmax.f32 %v2078, 0.0
    %v2284 = vmax.f32 %v2080, 0.0
    %v2285 = vmax.f32 %v2083, 0.0
    %v2286 = vmax.f32 %v2085, 0.0
    %v2287 = vmax.f32 %v2088, 0.0
    %v2288 = vmax.f32 %v2090, 0.0
    %v2289 = vmax.f32 %v2093, 0.0
    %v2290 = vmax.f32 %v2095, 0.0
    %v2291 = vmax.f32 %v2098, 0.0
    %v2292 = vmax.f32 %v2100, 0.0
    %v2293 = vmax.f32 %v2103, 0.0
    %v2294 = vmax.f32 %v2105, 0.0
    %v2295 = vmax.f32 %v2108, 0.0
    %v2296 = vmax.f32 %v2110, 0.0
    %v2297 = vmax.f32 %v2113, 0.0
    %v2298 = vmax.f32 %v2115, 0.0
    %v2299 = vmax.f32 %v2118, 0.0
    %v2300 = vmax.f32 %v2120, 0.0
    %v2301 = vmax.f32 %v2123, 0.0
    %v2302 = vmax.f32 %v2125, 0.0
    %v2303 = vmax.f32 %v2128, 0.0
    %v2304 = vmax.f32 %v2130, 0.0
    %v2305 = vmax.f32 %v2133, 0.0
    %v2306 = vmax.f32 %v2135, 0.0
    %v2307 = vmax.f32 %v2138, 0.0
    %v2308 = vmax.f32 %v2140, 0.0
    %v2309 = vmax.f32 %v2143, 0.0
    %v2310 = vmax.f32 %v2145, 0.0
    %v2311 = vmax.f32 %v2148, 0.0
    %v2312 = vmax.f32 %v2150, 0.0
    %v2313 = vmax.f32 %v2153, 0.0
    %v2314 = vmax.f32 %v2155, 0.0
    %v2315 = vmax.f32 %v2158, 0.0
    %v2316 = vmax.f32 %v2160, 0.0
    %v2317 = vmax.f32 %v2163, 0.0
    %v2318 = vmax.f32 %v2165, 0.0
    %v2319 = vmax.f32 %v2168, 0.0
    %v2320 = vmax.f32 %v2170, 0.0
    %v2321 = vmax.f32 %v2173, 0.0
    %v2322 = vmax.f32 %v2175, 0.0
    %v2323 = vmax.f32 %v2178, 0.0
    %v2324 = vmax.f32 %v2180, 0.0
    %v2325 = vmax.f32 %v2183, 0.0
    %v2326 = vmax.f32 %v2185, 0.0
    %v2327 = vmax.f32 %v2188, 0.0
    %v2328 = vmax.f32 %v2190, 0.0
    %v2329 = vmax.f32 %v2193, 0.0
    %v2330 = vmax.f32 %v2195, 0.0
    %v2331 = vmax.f32 %v2198, 0.0
    %v2332 = vmax.f32 %v2200, 0.0
    %v2333 = vmax.f32 %v2203, 0.0
    %v2334 = vmax.f32 %v2205, 0.0
    %v2335 = vpack.c.bf16 %v2208, %v2207
    %v2336 = vpack.c.bf16 %v2210, %v2209
    %v2337 = vpack.c.bf16 %v2212, %v2211
    %v2338 = vpack.c.bf16 %v2214, %v2213
    %v2339 = vpack.c.bf16 %v2216, %v2215
    %v2340 = vpack.c.bf16 %v2218, %v2217
    %v2341 = vpack.c.bf16 %v2220, %v2219
    %v2342 = vpack.c.bf16 %v2222, %v2221
    %v2343 = vpack.c.bf16 %v2224, %v2223
    %v2344 = vpack.c.bf16 %v2226, %v2225
    %v2345 = vpack.c.bf16 %v2228, %v2227
    %v2346 = vpack.c.bf16 %v2230, %v2229
    %v2347 = vpack.c.bf16 %v2232, %v2231
    %v2348 = vpack.c.bf16 %v2234, %v2233
    %v2349 = vpack.c.bf16 %v2236, %v2235
    %v2350 = vpack.c.bf16 %v2238, %v2237
    %v2351 = vpack.c.bf16 %v2240, %v2239
    %v2352 = vpack.c.bf16 %v2242, %v2241
    %v2353 = vpack.c.bf16 %v2244, %v2243
    %v2354 = vpack.c.bf16 %v2246, %v2245
    %v2355 = vpack.c.bf16 %v2248, %v2247
    %v2356 = vpack.c.bf16 %v2250, %v2249
    %v2357 = vpack.c.bf16 %v2252, %v2251
    %v2358 = vpack.c.bf16 %v2254, %v2253
    %v2359 = vpack.c.bf16 %v2256, %v2255
    %v2360 = vpack.c.bf16 %v2258, %v2257
    %v2361 = vpack.c.bf16 %v2260, %v2259
    %v2362 = vpack.c.bf16 %v2262, %v2261
    %v2363 = vpack.c.bf16 %v2264, %v2263
    %v2364 = vpack.c.bf16 %v2266, %v2265
    %v2365 = vpack.c.bf16 %v2268, %v2267
    %v2366 = vpack.c.bf16 %v2270, %v2269
    %v2367 = vpack.c.bf16 %v2272, %v2271
    %v2368 = vpack.c.bf16 %v2274, %v2273
    %v2369 = vpack.c.bf16 %v2276, %v2275
    %v2370 = vpack.c.bf16 %v2278, %v2277
    %v2371 = vpack.c.bf16 %v2280, %v2279
    %v2372 = vpack.c.bf16 %v2282, %v2281
    %v2373 = vpack.c.bf16 %v2284, %v2283
    %v2374 = vpack.c.bf16 %v2286, %v2285
    %v2375 = vpack.c.bf16 %v2288, %v2287
    %v2376 = vpack.c.bf16 %v2290, %v2289
    %v2377 = vpack.c.bf16 %v2292, %v2291
    %v2378 = vpack.c.bf16 %v2294, %v2293
    %v2379 = vpack.c.bf16 %v2296, %v2295
    %v2380 = vpack.c.bf16 %v2298, %v2297
    %v2381 = vpack.c.bf16 %v2300, %v2299
    %v2382 = vpack.c.bf16 %v2302, %v2301
    %v2383 = vpack.c.bf16 %v2304, %v2303
    %v2384 = vpack.c.bf16 %v2306, %v2305
    %v2385 = vpack.c.bf16 %v2308, %v2307
    %v2386 = vpack.c.bf16 %v2310, %v2309
    %v2387 = vpack.c.bf16 %v2312, %v2311
    %v2388 = vpack.c.bf16 %v2314, %v2313
    %v2389 = vpack.c.bf16 %v2316, %v2315
    %v2390 = vpack.c.bf16 %v2318, %v2317
    %v2391 = vpack.c.bf16 %v2320, %v2319
    %v2392 = vpack.c.bf16 %v2322, %v2321
    %v2393 = vpack.c.bf16 %v2324, %v2323
    %v2394 = vpack.c.bf16 %v2326, %v2325
    %v2395 = vpack.c.bf16 %v2328, %v2327
    %v2396 = vpack.c.bf16 %v2330, %v2329
    %v2397 = vpack.c.bf16 %v2332, %v2331
    %v2398 = vpack.c.bf16 %v2334, %v2333
    %v2399 = vld [vmem:[%s4] sm:$0xff]
    %v2400 = vld [vmem:[%s4 + $0x8] sm:$0xff]
    %v2401 = vld [vmem:[%s4 + $0x10] sm:$0xff]
    %v2402 = vld [vmem:[%s4 + $0x18] sm:$0xff]
    %v2403 = vld [vmem:[%s4 + $0x20] sm:$0xff]
    %v2404 = vld [vmem:[%s4 + $0x28] sm:$0xff]
    %v2405 = vld [vmem:[%s4 + $0x30] sm:$0xff]
    %v2406 = vld [vmem:[%s4 + $0x38] sm:$0xff]
    %v2407 = vld [vmem:[%s4 + $0x40] sm:$0xff]
    %v2408 = vld [vmem:[%s4 + $0x48] sm:$0xff]
    %v2409 = vld [vmem:[%s4 + $0x50] sm:$0xff]
    %v2410 = vld [vmem:[%s4 + $0x58] sm:$0xff]
    %v2411 = vld [vmem:[%s4 + $0x60] sm:$0xff]
    %v2412 = vld [vmem:[%s4 + $0x68] sm:$0xff]
    %v2413 = vld [vmem:[%s4 + $0x70] sm:$0xff]
    %v2414 = vld [vmem:[%s4 + $0x78] sm:$0xff]
    %s2415 = scalar_lea.vmem %s8, 3
    %v2416 = vld [vmem:[%s2415] ss:$8 sm:$0x3]
    %v2418 = vperm.slane %v2416, 0
    %v2419 = vperm.slane %v2416, 1
    %v2438 = vunpack.c.l.b16 %v2399
    %v2439 = vunpack.c.h.b16 %v2399
    %v2440 = vunpack.c.l.b16 %v2400
    %v2441 = vunpack.c.h.b16 %v2400
    %v2442 = vunpack.c.l.b16 %v2401
    %v2443 = vunpack.c.h.b16 %v2401
    %v2444 = vunpack.c.l.b16 %v2402
    %v2445 = vunpack.c.h.b16 %v2402
    %v2446 = vunpack.c.l.b16 %v2403
    %v2447 = vunpack.c.h.b16 %v2403
    %v2448 = vunpack.c.l.b16 %v2404
    %v2449 = vunpack.c.h.b16 %v2404
    %v2450 = vunpack.c.l.b16 %v2405
    %v2451 = vunpack.c.h.b16 %v2405
    %v2452 = vunpack.c.l.b16 %v2406
    %v2453 = vunpack.c.h.b16 %v2406
    %v2454 = vunpack.c.l.b16 %v2407
    %v2455 = vunpack.c.h.b16 %v2407
    %v2456 = vunpack.c.l.b16 %v2408
    %v2457 = vunpack.c.h.b16 %v2408
    %v2458 = vunpack.c.l.b16 %v2409
    %v2459 = vunpack.c.h.b16 %v2409
    %v2460 = vunpack.c.l.b16 %v2410
    %v2461 = vunpack.c.h.b16 %v2410
    %v2462 = vunpack.c.l.b16 %v2411
    %v2463 = vunpack.c.h.b16 %v2411
    %v2464 = vunpack.c.l.b16 %v2412
    %v2465 = vunpack.c.h.b16 %v2412
    %v2466 = vunpack.c.l.b16 %v2413
    %v2467 = vunpack.c.h.b16 %v2413
    %v2468 = vunpack.c.l.b16 %v2414
    %v2469 = vunpack.c.h.b16 %v2414
    %v2470 = vpack.c.b16 %v2440, %v2438
    %v2471 = vpack.c.b16 %v2441, %v2439
    %v2472 = vpack.c.b16 %v2444, %v2442
    %v2473 = vpack.c.b16 %v2445, %v2443
    %v2474 = vpack.c.b16 %v2448, %v2446
    %v2475 = vpack.c.b16 %v2449, %v2447
    %v2476 = vpack.c.b16 %v2452, %v2450
    %v2477 = vpack.c.b16 %v2453, %v2451
    %v2478 = vpack.c.b16 %v2456, %v2454
    %v2479 = vpack.c.b16 %v2457, %v2455
    %v2480 = vpack.c.b16 %v2460, %v2458
    %v2481 = vpack.c.b16 %v2461, %v2459
    %v2482 = vpack.c.b16 %v2464, %v2462
    %v2483 = vpack.c.b16 %v2465, %v2463
    %v2484 = vpack.c.b16 %v2468, %v2466
    %v2485 = vpack.c.b16 %v2469, %v2467
    %2502 = vmatpush.bf16.msra.mxu0 %v2484
    %2503 = vmatpush.bf16.msra.mxu0 %v2482
    %2504 = vmatpush.bf16.msra.mxu0 %v2480
    %2505 = vmatpush.bf16.msra.mxu0 %v2478
    %2506 = vmatpush.bf16.msra.mxu0 %v2476
    %2507 = vmatpush.bf16.msra.mxu0 %v2474
    %2508 = vmatpush.bf16.msra.mxu0 %v2472
    %2509 = vmatpush.bf16.msra.mxu0 %v2470
    %2510 = vmatmul.bf16.gmra.mxu0 %v2335
    %v2511 = vpop.f32.mrf.mxu0
    %v2512 = vadd.f32 %v2418, %v2511
    %v2513 = vpop.f32.mrf.mxu0
    %v2514 = vadd.f32 %v2418, %v2513
    %2515 = vmatmul.bf16.gmra.mxu0 %v2336
    %v2516 = vpop.f32.mrf.mxu0
    %v2517 = vadd.f32 %v2418, %v2516
    %v2518 = vpop.f32.mrf.mxu0
    %v2519 = vadd.f32 %v2418, %v2518
    %2520 = vmatmul.bf16.gmra.mxu0 %v2337
    %v2521 = vpop.f32.mrf.mxu0
    %v2522 = vadd.f32 %v2418, %v2521
    %v2523 = vpop.f32.mrf.mxu0
    %v2524 = vadd.f32 %v2418, %v2523
    %2525 = vmatmul.bf16.gmra.mxu0 %v2338
    %v2526 = vpop.f32.mrf.mxu0
    %v2527 = vadd.f32 %v2418, %v2526
    %v2528 = vpop.f32.mrf.mxu0
    %v2529 = vadd.f32 %v2418, %v2528
    %2530 = vmatmul.bf16.gmra.mxu0 %v2339
    %v2531 = vpop.f32.mrf.mxu0
    %v2532 = vadd.f32 %v2418, %v2531
    %v2533 = vpop.f32.mrf.mxu0
    %v2534 = vadd.f32 %v2418, %v2533
    %2535 = vmatmul.bf16.gmra.mxu0 %v2340
    %v2536 = vpop.f32.mrf.mxu0
    %v2537 = vadd.f32 %v2418, %v2536
    %v2538 = vpop.f32.mrf.mxu0
    %v2539 = vadd.f32 %v2418, %v2538
    %2540 = vmatmul.bf16.gmra.mxu0 %v2341
    %v2541 = vpop.f32.mrf.mxu0
    %v2542 = vadd.f32 %v2418, %v2541
    %v2543 = vpop.f32.mrf.mxu0
    %v2544 = vadd.f32 %v2418, %v2543
    %2545 = vmatmul.bf16.gmra.mxu0 %v2342
    %v2546 = vpop.f32.mrf.mxu0
    %v2547 = vadd.f32 %v2418, %v2546
    %v2548 = vpop.f32.mrf.mxu0
    %v2549 = vadd.f32 %v2418, %v2548
    %2550 = vmatmul.bf16.gmra.mxu0 %v2343
    %v2551 = vpop.f32.mrf.mxu0
    %v2552 = vadd.f32 %v2418, %v2551
    %v2553 = vpop.f32.mrf.mxu0
    %v2554 = vadd.f32 %v2418, %v2553
    %2555 = vmatmul.bf16.gmra.mxu0 %v2344
    %v2556 = vpop.f32.mrf.mxu0
    %v2557 = vadd.f32 %v2418, %v2556
    %v2558 = vpop.f32.mrf.mxu0
    %v2559 = vadd.f32 %v2418, %v2558
    %2560 = vmatmul.bf16.gmra.mxu0 %v2345
    %v2561 = vpop.f32.mrf.mxu0
    %v2562 = vadd.f32 %v2418, %v2561
    %v2563 = vpop.f32.mrf.mxu0
    %v2564 = vadd.f32 %v2418, %v2563
    %2565 = vmatmul.bf16.gmra.mxu0 %v2346
    %v2566 = vpop.f32.mrf.mxu0
    %v2567 = vadd.f32 %v2418, %v2566
    %v2568 = vpop.f32.mrf.mxu0
    %v2569 = vadd.f32 %v2418, %v2568
    %2570 = vmatmul.bf16.gmra.mxu0 %v2347
    %v2571 = vpop.f32.mrf.mxu0
    %v2572 = vadd.f32 %v2418, %v2571
    %v2573 = vpop.f32.mrf.mxu0
    %v2574 = vadd.f32 %v2418, %v2573
    %2575 = vmatmul.bf16.gmra.mxu0 %v2348
    %v2576 = vpop.f32.mrf.mxu0
    %v2577 = vadd.f32 %v2418, %v2576
    %v2578 = vpop.f32.mrf.mxu0
    %v2579 = vadd.f32 %v2418, %v2578
    %2580 = vmatmul.bf16.gmra.mxu0 %v2349
    %v2581 = vpop.f32.mrf.mxu0
    %v2582 = vadd.f32 %v2418, %v2581
    %v2583 = vpop.f32.mrf.mxu0
    %v2584 = vadd.f32 %v2418, %v2583
    %2585 = vmatmul.bf16.gmra.mxu0 %v2350
    %v2586 = vpop.f32.mrf.mxu0
    %v2587 = vadd.f32 %v2418, %v2586
    %v2588 = vpop.f32.mrf.mxu0
    %v2589 = vadd.f32 %v2418, %v2588
    %2590 = vmatmul.bf16.gmra.mxu0 %v2351
    %v2591 = vpop.f32.mrf.mxu0
    %v2592 = vadd.f32 %v2418, %v2591
    %v2593 = vpop.f32.mrf.mxu0
    %v2594 = vadd.f32 %v2418, %v2593
    %2595 = vmatmul.bf16.gmra.mxu0 %v2352
    %v2596 = vpop.f32.mrf.mxu0
    %v2597 = vadd.f32 %v2418, %v2596
    %v2598 = vpop.f32.mrf.mxu0
    %v2599 = vadd.f32 %v2418, %v2598
    %2600 = vmatmul.bf16.gmra.mxu0 %v2353
    %v2601 = vpop.f32.mrf.mxu0
    %v2602 = vadd.f32 %v2418, %v2601
    %v2603 = vpop.f32.mrf.mxu0
    %v2604 = vadd.f32 %v2418, %v2603
    %2605 = vmatmul.bf16.gmra.mxu0 %v2354
    %v2606 = vpop.f32.mrf.mxu0
    %v2607 = vadd.f32 %v2418, %v2606
    %v2608 = vpop.f32.mrf.mxu0
    %v2609 = vadd.f32 %v2418, %v2608
    %2610 = vmatmul.bf16.gmra.mxu0 %v2355
    %v2611 = vpop.f32.mrf.mxu0
    %v2612 = vadd.f32 %v2418, %v2611
    %v2613 = vpop.f32.mrf.mxu0
    %v2614 = vadd.f32 %v2418, %v2613
    %2615 = vmatmul.bf16.gmra.mxu0 %v2356
    %v2616 = vpop.f32.mrf.mxu0
    %v2617 = vadd.f32 %v2418, %v2616
    %v2618 = vpop.f32.mrf.mxu0
    %v2619 = vadd.f32 %v2418, %v2618
    %2620 = vmatmul.bf16.gmra.mxu0 %v2357
    %v2621 = vpop.f32.mrf.mxu0
    %v2622 = vadd.f32 %v2418, %v2621
    %v2623 = vpop.f32.mrf.mxu0
    %v2624 = vadd.f32 %v2418, %v2623
    %2625 = vmatmul.bf16.gmra.mxu0 %v2358
    %v2626 = vpop.f32.mrf.mxu0
    %v2627 = vadd.f32 %v2418, %v2626
    %v2628 = vpop.f32.mrf.mxu0
    %v2629 = vadd.f32 %v2418, %v2628
    %2630 = vmatmul.bf16.gmra.mxu0 %v2359
    %v2631 = vpop.f32.mrf.mxu0
    %v2632 = vadd.f32 %v2418, %v2631
    %v2633 = vpop.f32.mrf.mxu0
    %v2634 = vadd.f32 %v2418, %v2633
    %2635 = vmatmul.bf16.gmra.mxu0 %v2360
    %v2636 = vpop.f32.mrf.mxu0
    %v2637 = vadd.f32 %v2418, %v2636
    %v2638 = vpop.f32.mrf.mxu0
    %v2639 = vadd.f32 %v2418, %v2638
    %2640 = vmatmul.bf16.gmra.mxu0 %v2361
    %v2641 = vpop.f32.mrf.mxu0
    %v2642 = vadd.f32 %v2418, %v2641
    %v2643 = vpop.f32.mrf.mxu0
    %v2644 = vadd.f32 %v2418, %v2643
    %2645 = vmatmul.bf16.gmra.mxu0 %v2362
    %v2646 = vpop.f32.mrf.mxu0
    %v2647 = vadd.f32 %v2418, %v2646
    %v2648 = vpop.f32.mrf.mxu0
    %v2649 = vadd.f32 %v2418, %v2648
    %2650 = vmatmul.bf16.gmra.mxu0 %v2363
    %v2651 = vpop.f32.mrf.mxu0
    %v2652 = vadd.f32 %v2418, %v2651
    %v2653 = vpop.f32.mrf.mxu0
    %v2654 = vadd.f32 %v2418, %v2653
    %2655 = vmatmul.bf16.gmra.mxu0 %v2364
    %v2656 = vpop.f32.mrf.mxu0
    %v2657 = vadd.f32 %v2418, %v2656
    %v2658 = vpop.f32.mrf.mxu0
    %v2659 = vadd.f32 %v2418, %v2658
    %2660 = vmatmul.bf16.gmra.mxu0 %v2365
    %v2661 = vpop.f32.mrf.mxu0
    %v2662 = vadd.f32 %v2418, %v2661
    %v2663 = vpop.f32.mrf.mxu0
    %v2664 = vadd.f32 %v2418, %v2663
    %2665 = vmatmul.bf16.gmra.mxu0 %v2366
    %v2666 = vpop.f32.mrf.mxu0
    %v2667 = vadd.f32 %v2418, %v2666
    %v2668 = vpop.f32.mrf.mxu0
    %v2669 = vadd.f32 %v2418, %v2668
    %2670 = vmatmul.bf16.gmra.mxu0 %v2367
    %v2671 = vpop.f32.mrf.mxu0
    %v2672 = vadd.f32 %v2418, %v2671
    %v2673 = vpop.f32.mrf.mxu0
    %v2674 = vadd.f32 %v2418, %v2673
    %2675 = vmatmul.bf16.gmra.mxu0 %v2368
    %v2676 = vpop.f32.mrf.mxu0
    %v2677 = vadd.f32 %v2418, %v2676
    %v2678 = vpop.f32.mrf.mxu0
    %v2679 = vadd.f32 %v2418, %v2678
    %2680 = vmatmul.bf16.gmra.mxu0 %v2369
    %v2681 = vpop.f32.mrf.mxu0
    %v2682 = vadd.f32 %v2418, %v2681
    %v2683 = vpop.f32.mrf.mxu0
    %v2684 = vadd.f32 %v2418, %v2683
    %2685 = vmatmul.bf16.gmra.mxu0 %v2370
    %v2686 = vpop.f32.mrf.mxu0
    %v2687 = vadd.f32 %v2418, %v2686
    %v2688 = vpop.f32.mrf.mxu0
    %v2689 = vadd.f32 %v2418, %v2688
    %2690 = vmatmul.bf16.gmra.mxu0 %v2371
    %v2691 = vpop.f32.mrf.mxu0
    %v2692 = vadd.f32 %v2418, %v2691
    %v2693 = vpop.f32.mrf.mxu0
    %v2694 = vadd.f32 %v2418, %v2693
    %2695 = vmatmul.bf16.gmra.mxu0 %v2372
    %v2696 = vpop.f32.mrf.mxu0
    %v2697 = vadd.f32 %v2418, %v2696
    %v2698 = vpop.f32.mrf.mxu0
    %v2699 = vadd.f32 %v2418, %v2698
    %2700 = vmatmul.bf16.gmra.mxu0 %v2373
    %v2701 = vpop.f32.mrf.mxu0
    %v2702 = vadd.f32 %v2418, %v2701
    %v2703 = vpop.f32.mrf.mxu0
    %v2704 = vadd.f32 %v2418, %v2703
    %2705 = vmatmul.bf16.gmra.mxu0 %v2374
    %v2706 = vpop.f32.mrf.mxu0
    %v2707 = vadd.f32 %v2418, %v2706
    %v2708 = vpop.f32.mrf.mxu0
    %v2709 = vadd.f32 %v2418, %v2708
    %2710 = vmatmul.bf16.gmra.mxu0 %v2375
    %v2711 = vpop.f32.mrf.mxu0
    %v2712 = vadd.f32 %v2418, %v2711
    %v2713 = vpop.f32.mrf.mxu0
    %v2714 = vadd.f32 %v2418, %v2713
    %2715 = vmatmul.bf16.gmra.mxu0 %v2376
    %v2716 = vpop.f32.mrf.mxu0
    %v2717 = vadd.f32 %v2418, %v2716
    %v2718 = vpop.f32.mrf.mxu0
    %v2719 = vadd.f32 %v2418, %v2718
    %2720 = vmatmul.bf16.gmra.mxu0 %v2377
    %v2721 = vpop.f32.mrf.mxu0
    %v2722 = vadd.f32 %v2418, %v2721
    %v2723 = vpop.f32.mrf.mxu0
    %v2724 = vadd.f32 %v2418, %v2723
    %2725 = vmatmul.bf16.gmra.mxu0 %v2378
    %v2726 = vpop.f32.mrf.mxu0
    %v2727 = vadd.f32 %v2418, %v2726
    %v2728 = vpop.f32.mrf.mxu0
    %v2729 = vadd.f32 %v2418, %v2728
    %2730 = vmatmul.bf16.gmra.mxu0 %v2379
    %v2731 = vpop.f32.mrf.mxu0
    %v2732 = vadd.f32 %v2418, %v2731
    %v2733 = vpop.f32.mrf.mxu0
    %v2734 = vadd.f32 %v2418, %v2733
    %2735 = vmatmul.bf16.gmra.mxu0 %v2380
    %v2736 = vpop.f32.mrf.mxu0
    %v2737 = vadd.f32 %v2418, %v2736
    %v2738 = vpop.f32.mrf.mxu0
    %v2739 = vadd.f32 %v2418, %v2738
    %2740 = vmatmul.bf16.gmra.mxu0 %v2381
    %v2741 = vpop.f32.mrf.mxu0
    %v2742 = vadd.f32 %v2418, %v2741
    %v2743 = vpop.f32.mrf.mxu0
    %v2744 = vadd.f32 %v2418, %v2743
    %2745 = vmatmul.bf16.gmra.mxu0 %v2382
    %v2746 = vpop.f32.mrf.mxu0
    %v2747 = vadd.f32 %v2418, %v2746
    %v2748 = vpop.f32.mrf.mxu0
    %v2749 = vadd.f32 %v2418, %v2748
    %2750 = vmatmul.bf16.gmra.mxu0 %v2383
    %v2751 = vpop.f32.mrf.mxu0
    %v2752 = vadd.f32 %v2418, %v2751
    %v2753 = vpop.f32.mrf.mxu0
    %v2754 = vadd.f32 %v2418, %v2753
    %2755 = vmatmul.bf16.gmra.mxu0 %v2384
    %v2756 = vpop.f32.mrf.mxu0
    %v2757 = vadd.f32 %v2418, %v2756
    %v2758 = vpop.f32.mrf.mxu0
    %v2759 = vadd.f32 %v2418, %v2758
    %2760 = vmatmul.bf16.gmra.mxu0 %v2385
    %v2761 = vpop.f32.mrf.mxu0
    %v2762 = vadd.f32 %v2418, %v2761
    %v2763 = vpop.f32.mrf.mxu0
    %v2764 = vadd.f32 %v2418, %v2763
    %2765 = vmatmul.bf16.gmra.mxu0 %v2386
    %v2766 = vpop.f32.mrf.mxu0
    %v2767 = vadd.f32 %v2418, %v2766
    %v2768 = vpop.f32.mrf.mxu0
    %v2769 = vadd.f32 %v2418, %v2768
    %2770 = vmatmul.bf16.gmra.mxu0 %v2387
    %v2771 = vpop.f32.mrf.mxu0
    %v2772 = vadd.f32 %v2418, %v2771
    %v2773 = vpop.f32.mrf.mxu0
    %v2774 = vadd.f32 %v2418, %v2773
    %2775 = vmatmul.bf16.gmra.mxu0 %v2388
    %v2776 = vpop.f32.mrf.mxu0
    %v2777 = vadd.f32 %v2418, %v2776
    %v2778 = vpop.f32.mrf.mxu0
    %v2779 = vadd.f32 %v2418, %v2778
    %2780 = vmatmul.bf16.gmra.mxu0 %v2389
    %v2781 = vpop.f32.mrf.mxu0
    %v2782 = vadd.f32 %v2418, %v2781
    %v2783 = vpop.f32.mrf.mxu0
    %v2784 = vadd.f32 %v2418, %v2783
    %2785 = vmatmul.bf16.gmra.mxu0 %v2390
    %v2786 = vpop.f32.mrf.mxu0
    %v2787 = vadd.f32 %v2418, %v2786
    %v2788 = vpop.f32.mrf.mxu0
    %v2789 = vadd.f32 %v2418, %v2788
    %2790 = vmatmul.bf16.gmra.mxu0 %v2391
    %v2791 = vpop.f32.mrf.mxu0
    %v2792 = vadd.f32 %v2418, %v2791
    %v2793 = vpop.f32.mrf.mxu0
    %v2794 = vadd.f32 %v2418, %v2793
    %2795 = vmatmul.bf16.gmra.mxu0 %v2392
    %v2796 = vpop.f32.mrf.mxu0
    %v2797 = vadd.f32 %v2418, %v2796
    %v2798 = vpop.f32.mrf.mxu0
    %v2799 = vadd.f32 %v2418, %v2798
    %2800 = vmatmul.bf16.gmra.mxu0 %v2393
    %v2801 = vpop.f32.mrf.mxu0
    %v2802 = vadd.f32 %v2418, %v2801
    %v2803 = vpop.f32.mrf.mxu0
    %v2804 = vadd.f32 %v2418, %v2803
    %2805 = vmatmul.bf16.gmra.mxu0 %v2394
    %v2806 = vpop.f32.mrf.mxu0
    %v2807 = vadd.f32 %v2418, %v2806
    %v2808 = vpop.f32.mrf.mxu0
    %v2809 = vadd.f32 %v2418, %v2808
    %2810 = vmatmul.bf16.gmra.mxu0 %v2395
    %v2811 = vpop.f32.mrf.mxu0
    %v2812 = vadd.f32 %v2418, %v2811
    %v2813 = vpop.f32.mrf.mxu0
    %v2814 = vadd.f32 %v2418, %v2813
    %2815 = vmatmul.bf16.gmra.mxu0 %v2396
    %v2816 = vpop.f32.mrf.mxu0
    %v2817 = vadd.f32 %v2418, %v2816
    %v2818 = vpop.f32.mrf.mxu0
    %v2819 = vadd.f32 %v2418, %v2818
    %2820 = vmatmul.bf16.gmra.mxu0 %v2397
    %v2821 = vpop.f32.mrf.mxu0
    %v2822 = vadd.f32 %v2418, %v2821
    %v2823 = vpop.f32.mrf.mxu0
    %v2824 = vadd.f32 %v2418, %v2823
    %2825 = vmatmul.bf16.gmra.mxu0 %v2398
    %v2826 = vpop.f32.mrf.mxu0
    %v2827 = vadd.f32 %v2418, %v2826
    %v2828 = vpop.f32.mrf.mxu0
    %v2829 = vadd.f32 %v2418, %v2828
    %2830 = vdwg.mxu0
    %2831 = vmatpush.bf16.msra.mxu0 %v2485
    %2832 = vmatpush.bf16.msra.mxu0 %v2483
    %2833 = vmatpush.bf16.msra.mxu0 %v2481
    %2834 = vmatpush.bf16.msra.mxu0 %v2479
    %2835 = vmatpush.bf16.msra.mxu0 %v2477
    %2836 = vmatpush.bf16.msra.mxu0 %v2475
    %2837 = vmatpush.bf16.msra.mxu0 %v2473
    %2838 = vmatpush.bf16.msra.mxu0 %v2471
    %2839 = vmatmul.bf16.gmra.mxu0 %v2335
    %v2840 = vpop.f32.mrf.mxu0
    %v2841 = vadd.f32 %v2419, %v2840
    %v2842 = vpop.f32.mrf.mxu0
    %v2843 = vadd.f32 %v2419, %v2842
    %2844 = vmatmul.bf16.gmra.mxu0 %v2336
    %v2845 = vpop.f32.mrf.mxu0
    %v2846 = vadd.f32 %v2419, %v2845
    %v2847 = vpop.f32.mrf.mxu0
    %v2848 = vadd.f32 %v2419, %v2847
    %2849 = vmatmul.bf16.gmra.mxu0 %v2337
    %v2850 = vpop.f32.mrf.mxu0
    %v2851 = vadd.f32 %v2419, %v2850
    %v2852 = vpop.f32.mrf.mxu0
    %v2853 = vadd.f32 %v2419, %v2852
    %2854 = vmatmul.bf16.gmra.mxu0 %v2338
    %v2855 = vpop.f32.mrf.mxu0
    %v2856 = vadd.f32 %v2419, %v2855
    %v2857 = vpop.f32.mrf.mxu0
    %v2858 = vadd.f32 %v2419, %v2857
    %2859 = vmatmul.bf16.gmra.mxu0 %v2339
    %v2860 = vpop.f32.mrf.mxu0
    %v2861 = vadd.f32 %v2419, %v2860
    %v2862 = vpop.f32.mrf.mxu0
    %v2863 = vadd.f32 %v2419, %v2862
    %2864 = vmatmul.bf16.gmra.mxu0 %v2340
    %v2865 = vpop.f32.mrf.mxu0
    %v2866 = vadd.f32 %v2419, %v2865
    %v2867 = vpop.f32.mrf.mxu0
    %v2868 = vadd.f32 %v2419, %v2867
    %2869 = vmatmul.bf16.gmra.mxu0 %v2341
    %v2870 = vpop.f32.mrf.mxu0
    %v2871 = vadd.f32 %v2419, %v2870
    %v2872 = vpop.f32.mrf.mxu0
    %v2873 = vadd.f32 %v2419, %v2872
    %2874 = vmatmul.bf16.gmra.mxu0 %v2342
    %v2875 = vpop.f32.mrf.mxu0
    %v2876 = vadd.f32 %v2419, %v2875
    %v2877 = vpop.f32.mrf.mxu0
    %v2878 = vadd.f32 %v2419, %v2877
    %2879 = vmatmul.bf16.gmra.mxu0 %v2343
    %v2880 = vpop.f32.mrf.mxu0
    %v2881 = vadd.f32 %v2419, %v2880
    %v2882 = vpop.f32.mrf.mxu0
    %v2883 = vadd.f32 %v2419, %v2882
    %2884 = vmatmul.bf16.gmra.mxu0 %v2344
    %v2885 = vpop.f32.mrf.mxu0
    %v2886 = vadd.f32 %v2419, %v2885
    %v2887 = vpop.f32.mrf.mxu0
    %v2888 = vadd.f32 %v2419, %v2887
    %2889 = vmatmul.bf16.gmra.mxu0 %v2345
    %v2890 = vpop.f32.mrf.mxu0
    %v2891 = vadd.f32 %v2419, %v2890
    %v2892 = vpop.f32.mrf.mxu0
    %v2893 = vadd.f32 %v2419, %v2892
    %2894 = vmatmul.bf16.gmra.mxu0 %v2346
    %v2895 = vpop.f32.mrf.mxu0
    %v2896 = vadd.f32 %v2419, %v2895
    %v2897 = vpop.f32.mrf.mxu0
    %v2898 = vadd.f32 %v2419, %v2897
    %2899 = vmatmul.bf16.gmra.mxu0 %v2347
    %v2900 = vpop.f32.mrf.mxu0
    %v2901 = vadd.f32 %v2419, %v2900
    %v2902 = vpop.f32.mrf.mxu0
    %v2903 = vadd.f32 %v2419, %v2902
    %2904 = vmatmul.bf16.gmra.mxu0 %v2348
    %v2905 = vpop.f32.mrf.mxu0
    %v2906 = vadd.f32 %v2419, %v2905
    %v2907 = vpop.f32.mrf.mxu0
    %v2908 = vadd.f32 %v2419, %v2907
    %2909 = vmatmul.bf16.gmra.mxu0 %v2349
    %v2910 = vpop.f32.mrf.mxu0
    %v2911 = vadd.f32 %v2419, %v2910
    %v2912 = vpop.f32.mrf.mxu0
    %v2913 = vadd.f32 %v2419, %v2912
    %2914 = vmatmul.bf16.gmra.mxu0 %v2350
    %v2915 = vpop.f32.mrf.mxu0
    %v2916 = vadd.f32 %v2419, %v2915
    %v2917 = vpop.f32.mrf.mxu0
    %v2918 = vadd.f32 %v2419, %v2917
    %2919 = vmatmul.bf16.gmra.mxu0 %v2351
    %v2920 = vpop.f32.mrf.mxu0
    %v2921 = vadd.f32 %v2419, %v2920
    %v2922 = vpop.f32.mrf.mxu0
    %v2923 = vadd.f32 %v2419, %v2922
    %2924 = vmatmul.bf16.gmra.mxu0 %v2352
    %v2925 = vpop.f32.mrf.mxu0
    %v2926 = vadd.f32 %v2419, %v2925
    %v2927 = vpop.f32.mrf.mxu0
    %v2928 = vadd.f32 %v2419, %v2927
    %2929 = vmatmul.bf16.gmra.mxu0 %v2353
    %v2930 = vpop.f32.mrf.mxu0
    %v2931 = vadd.f32 %v2419, %v2930
    %v2932 = vpop.f32.mrf.mxu0
    %v2933 = vadd.f32 %v2419, %v2932
    %2934 = vmatmul.bf16.gmra.mxu0 %v2354
    %v2935 = vpop.f32.mrf.mxu0
    %v2936 = vadd.f32 %v2419, %v2935
    %v2937 = vpop.f32.mrf.mxu0
    %v2938 = vadd.f32 %v2419, %v2937
    %2939 = vmatmul.bf16.gmra.mxu0 %v2355
    %v2940 = vpop.f32.mrf.mxu0
    %v2941 = vadd.f32 %v2419, %v2940
    %v2942 = vpop.f32.mrf.mxu0
    %v2943 = vadd.f32 %v2419, %v2942
    %2944 = vmatmul.bf16.gmra.mxu0 %v2356
    %v2945 = vpop.f32.mrf.mxu0
    %v2946 = vadd.f32 %v2419, %v2945
    %v2947 = vpop.f32.mrf.mxu0
    %v2948 = vadd.f32 %v2419, %v2947
    %2949 = vmatmul.bf16.gmra.mxu0 %v2357
    %v2950 = vpop.f32.mrf.mxu0
    %v2951 = vadd.f32 %v2419, %v2950
    %v2952 = vpop.f32.mrf.mxu0
    %v2953 = vadd.f32 %v2419, %v2952
    %2954 = vmatmul.bf16.gmra.mxu0 %v2358
    %v2955 = vpop.f32.mrf.mxu0
    %v2956 = vadd.f32 %v2419, %v2955
    %v2957 = vpop.f32.mrf.mxu0
    %v2958 = vadd.f32 %v2419, %v2957
    %2959 = vmatmul.bf16.gmra.mxu0 %v2359
    %v2960 = vpop.f32.mrf.mxu0
    %v2961 = vadd.f32 %v2419, %v2960
    %v2962 = vpop.f32.mrf.mxu0
    %v2963 = vadd.f32 %v2419, %v2962
    %2964 = vmatmul.bf16.gmra.mxu0 %v2360
    %v2965 = vpop.f32.mrf.mxu0
    %v2966 = vadd.f32 %v2419, %v2965
    %v2967 = vpop.f32.mrf.mxu0
    %v2968 = vadd.f32 %v2419, %v2967
    %2969 = vmatmul.bf16.gmra.mxu0 %v2361
    %v2970 = vpop.f32.mrf.mxu0
    %v2971 = vadd.f32 %v2419, %v2970
    %v2972 = vpop.f32.mrf.mxu0
    %v2973 = vadd.f32 %v2419, %v2972
    %2974 = vmatmul.bf16.gmra.mxu0 %v2362
    %v2975 = vpop.f32.mrf.mxu0
    %v2976 = vadd.f32 %v2419, %v2975
    %v2977 = vpop.f32.mrf.mxu0
    %v2978 = vadd.f32 %v2419, %v2977
    %2979 = vmatmul.bf16.gmra.mxu0 %v2363
    %v2980 = vpop.f32.mrf.mxu0
    %v2981 = vadd.f32 %v2419, %v2980
    %v2982 = vpop.f32.mrf.mxu0
    %v2983 = vadd.f32 %v2419, %v2982
    %2984 = vmatmul.bf16.gmra.mxu0 %v2364
    %v2985 = vpop.f32.mrf.mxu0
    %v2986 = vadd.f32 %v2419, %v2985
    %v2987 = vpop.f32.mrf.mxu0
    %v2988 = vadd.f32 %v2419, %v2987
    %2989 = vmatmul.bf16.gmra.mxu0 %v2365
    %v2990 = vpop.f32.mrf.mxu0
    %v2991 = vadd.f32 %v2419, %v2990
    %v2992 = vpop.f32.mrf.mxu0
    %v2993 = vadd.f32 %v2419, %v2992
    %2994 = vmatmul.bf16.gmra.mxu0 %v2366
    %v2995 = vpop.f32.mrf.mxu0
    %v2996 = vadd.f32 %v2419, %v2995
    %v2997 = vpop.f32.mrf.mxu0
    %v2998 = vadd.f32 %v2419, %v2997
    %2999 = vmatmul.bf16.gmra.mxu0 %v2367
    %v3000 = vpop.f32.mrf.mxu0
    %v3001 = vadd.f32 %v2419, %v3000
    %v3002 = vpop.f32.mrf.mxu0
    %v3003 = vadd.f32 %v2419, %v3002
    %3004 = vmatmul.bf16.gmra.mxu0 %v2368
    %v3005 = vpop.f32.mrf.mxu0
    %v3006 = vadd.f32 %v2419, %v3005
    %v3007 = vpop.f32.mrf.mxu0
    %v3008 = vadd.f32 %v2419, %v3007
    %3009 = vmatmul.bf16.gmra.mxu0 %v2369
    %v3010 = vpop.f32.mrf.mxu0
    %v3011 = vadd.f32 %v2419, %v3010
    %v3012 = vpop.f32.mrf.mxu0
    %v3013 = vadd.f32 %v2419, %v3012
    %3014 = vmatmul.bf16.gmra.mxu0 %v2370
    %v3015 = vpop.f32.mrf.mxu0
    %v3016 = vadd.f32 %v2419, %v3015
    %v3017 = vpop.f32.mrf.mxu0
    %v3018 = vadd.f32 %v2419, %v3017
    %3019 = vmatmul.bf16.gmra.mxu0 %v2371
    %v3020 = vpop.f32.mrf.mxu0
    %v3021 = vadd.f32 %v2419, %v3020
    %v3022 = vpop.f32.mrf.mxu0
    %v3023 = vadd.f32 %v2419, %v3022
    %3024 = vmatmul.bf16.gmra.mxu0 %v2372
    %v3025 = vpop.f32.mrf.mxu0
    %v3026 = vadd.f32 %v2419, %v3025
    %v3027 = vpop.f32.mrf.mxu0
    %v3028 = vadd.f32 %v2419, %v3027
    %3029 = vmatmul.bf16.gmra.mxu0 %v2373
    %v3030 = vpop.f32.mrf.mxu0
    %v3031 = vadd.f32 %v2419, %v3030
    %v3032 = vpop.f32.mrf.mxu0
    %v3033 = vadd.f32 %v2419, %v3032
    %3034 = vmatmul.bf16.gmra.mxu0 %v2374
    %v3035 = vpop.f32.mrf.mxu0
    %v3036 = vadd.f32 %v2419, %v3035
    %v3037 = vpop.f32.mrf.mxu0
    %v3038 = vadd.f32 %v2419, %v3037
    %3039 = vmatmul.bf16.gmra.mxu0 %v2375
    %v3040 = vpop.f32.mrf.mxu0
    %v3041 = vadd.f32 %v2419, %v3040
    %v3042 = vpop.f32.mrf.mxu0
    %v3043 = vadd.f32 %v2419, %v3042
    %3044 = vmatmul.bf16.gmra.mxu0 %v2376
    %v3045 = vpop.f32.mrf.mxu0
    %v3046 = vadd.f32 %v2419, %v3045
    %v3047 = vpop.f32.mrf.mxu0
    %v3048 = vadd.f32 %v2419, %v3047
    %3049 = vmatmul.bf16.gmra.mxu0 %v2377
    %v3050 = vpop.f32.mrf.mxu0
    %v3051 = vadd.f32 %v2419, %v3050
    %v3052 = vpop.f32.mrf.mxu0
    %v3053 = vadd.f32 %v2419, %v3052
    %3054 = vmatmul.bf16.gmra.mxu0 %v2378
    %v3055 = vpop.f32.mrf.mxu0
    %v3056 = vadd.f32 %v2419, %v3055
    %v3057 = vpop.f32.mrf.mxu0
    %v3058 = vadd.f32 %v2419, %v3057
    %3059 = vmatmul.bf16.gmra.mxu0 %v2379
    %v3060 = vpop.f32.mrf.mxu0
    %v3061 = vadd.f32 %v2419, %v3060
    %v3062 = vpop.f32.mrf.mxu0
    %v3063 = vadd.f32 %v2419, %v3062
    %3064 = vmatmul.bf16.gmra.mxu0 %v2380
    %v3065 = vpop.f32.mrf.mxu0
    %v3066 = vadd.f32 %v2419, %v3065
    %v3067 = vpop.f32.mrf.mxu0
    %v3068 = vadd.f32 %v2419, %v3067
    %3069 = vmatmul.bf16.gmra.mxu0 %v2381
    %v3070 = vpop.f32.mrf.mxu0
    %v3071 = vadd.f32 %v2419, %v3070
    %v3072 = vpop.f32.mrf.mxu0
    %v3073 = vadd.f32 %v2419, %v3072
    %3074 = vmatmul.bf16.gmra.mxu0 %v2382
    %v3075 = vpop.f32.mrf.mxu0
    %v3076 = vadd.f32 %v2419, %v3075
    %v3077 = vpop.f32.mrf.mxu0
    %v3078 = vadd.f32 %v2419, %v3077
    %3079 = vmatmul.bf16.gmra.mxu0 %v2383
    %v3080 = vpop.f32.mrf.mxu0
    %v3081 = vadd.f32 %v2419, %v3080
    %v3082 = vpop.f32.mrf.mxu0
    %v3083 = vadd.f32 %v2419, %v3082
    %3084 = vmatmul.bf16.gmra.mxu0 %v2384
    %v3085 = vpop.f32.mrf.mxu0
    %v3086 = vadd.f32 %v2419, %v3085
    %v3087 = vpop.f32.mrf.mxu0
    %v3088 = vadd.f32 %v2419, %v3087
    %3089 = vmatmul.bf16.gmra.mxu0 %v2385
    %v3090 = vpop.f32.mrf.mxu0
    %v3091 = vadd.f32 %v2419, %v3090
    %v3092 = vpop.f32.mrf.mxu0
    %v3093 = vadd.f32 %v2419, %v3092
    %3094 = vmatmul.bf16.gmra.mxu0 %v2386
    %v3095 = vpop.f32.mrf.mxu0
    %v3096 = vadd.f32 %v2419, %v3095
    %v3097 = vpop.f32.mrf.mxu0
    %v3098 = vadd.f32 %v2419, %v3097
    %3099 = vmatmul.bf16.gmra.mxu0 %v2387
    %v3100 = vpop.f32.mrf.mxu0
    %v3101 = vadd.f32 %v2419, %v3100
    %v3102 = vpop.f32.mrf.mxu0
    %v3103 = vadd.f32 %v2419, %v3102
    %3104 = vmatmul.bf16.gmra.mxu0 %v2388
    %v3105 = vpop.f32.mrf.mxu0
    %v3106 = vadd.f32 %v2419, %v3105
    %v3107 = vpop.f32.mrf.mxu0
    %v3108 = vadd.f32 %v2419, %v3107
    %3109 = vmatmul.bf16.gmra.mxu0 %v2389
    %v3110 = vpop.f32.mrf.mxu0
    %v3111 = vadd.f32 %v2419, %v3110
    %v3112 = vpop.f32.mrf.mxu0
    %v3113 = vadd.f32 %v2419, %v3112
    %3114 = vmatmul.bf16.gmra.mxu0 %v2390
    %v3115 = vpop.f32.mrf.mxu0
    %v3116 = vadd.f32 %v2419, %v3115
    %v3117 = vpop.f32.mrf.mxu0
    %v3118 = vadd.f32 %v2419, %v3117
    %3119 = vmatmul.bf16.gmra.mxu0 %v2391
    %v3120 = vpop.f32.mrf.mxu0
    %v3121 = vadd.f32 %v2419, %v3120
    %v3122 = vpop.f32.mrf.mxu0
    %v3123 = vadd.f32 %v2419, %v3122
    %3124 = vmatmul.bf16.gmra.mxu0 %v2392
    %v3125 = vpop.f32.mrf.mxu0
    %v3126 = vadd.f32 %v2419, %v3125
    %v3127 = vpop.f32.mrf.mxu0
    %v3128 = vadd.f32 %v2419, %v3127
    %3129 = vmatmul.bf16.gmra.mxu0 %v2393
    %v3130 = vpop.f32.mrf.mxu0
    %v3131 = vadd.f32 %v2419, %v3130
    %v3132 = vpop.f32.mrf.mxu0
    %v3133 = vadd.f32 %v2419, %v3132
    %3134 = vmatmul.bf16.gmra.mxu0 %v2394
    %v3135 = vpop.f32.mrf.mxu0
    %v3136 = vadd.f32 %v2419, %v3135
    %v3137 = vpop.f32.mrf.mxu0
    %v3138 = vadd.f32 %v2419, %v3137
    %3139 = vmatmul.bf16.gmra.mxu0 %v2395
    %v3140 = vpop.f32.mrf.mxu0
    %v3141 = vadd.f32 %v2419, %v3140
    %v3142 = vpop.f32.mrf.mxu0
    %v3143 = vadd.f32 %v2419, %v3142
    %3144 = vmatmul.bf16.gmra.mxu0 %v2396
    %v3145 = vpop.f32.mrf.mxu0
    %v3146 = vadd.f32 %v2419, %v3145
    %v3147 = vpop.f32.mrf.mxu0
    %v3148 = vadd.f32 %v2419, %v3147
    %3149 = vmatmul.bf16.gmra.mxu0 %v2397
    %v3150 = vpop.f32.mrf.mxu0
    %v3151 = vadd.f32 %v2419, %v3150
    %v3152 = vpop.f32.mrf.mxu0
    %v3153 = vadd.f32 %v2419, %v3152
    %3154 = vmatmul.bf16.gmra.mxu0 %v2398
    %v3155 = vpop.f32.mrf.mxu0
    %v3156 = vadd.f32 %v2419, %v3155
    %v3157 = vpop.f32.mrf.mxu0
    %v3158 = vadd.f32 %v2419, %v3157
    %3159 = vdwg.mxu0
    %v3160 = vmax.f32 %v2512, 0.0
    %v3161 = vmax.f32 %v2841, 0.0
    %v3162 = vmax.f32 %v2514, 0.0
    %v3163 = vmax.f32 %v2843, 0.0
    %v3164 = vmax.f32 %v2517, 0.0
    %v3165 = vmax.f32 %v2846, 0.0
    %v3166 = vmax.f32 %v2519, 0.0
    %v3167 = vmax.f32 %v2848, 0.0
    %v3168 = vmax.f32 %v2522, 0.0
    %v3169 = vmax.f32 %v2851, 0.0
    %v3170 = vmax.f32 %v2524, 0.0
    %v3171 = vmax.f32 %v2853, 0.0
    %v3172 = vmax.f32 %v2527, 0.0
    %v3173 = vmax.f32 %v2856, 0.0
    %v3174 = vmax.f32 %v2529, 0.0
    %v3175 = vmax.f32 %v2858, 0.0
    %v3176 = vmax.f32 %v2532, 0.0
    %v3177 = vmax.f32 %v2861, 0.0
    %v3178 = vmax.f32 %v2534, 0.0
    %v3179 = vmax.f32 %v2863, 0.0
    %v3180 = vmax.f32 %v2537, 0.0
    %v3181 = vmax.f32 %v2866, 0.0
    %v3182 = vmax.f32 %v2539, 0.0
    %v3183 = vmax.f32 %v2868, 0.0
    %v3184 = vmax.f32 %v2542, 0.0
    %v3185 = vmax.f32 %v2871, 0.0
    %v3186 = vmax.f32 %v2544, 0.0
    %v3187 = vmax.f32 %v2873, 0.0
    %v3188 = vmax.f32 %v2547, 0.0
    %v3189 = vmax.f32 %v2876, 0.0
    %v3190 = vmax.f32 %v2549, 0.0
    %v3191 = vmax.f32 %v2878, 0.0
    %v3192 = vmax.f32 %v2552, 0.0
    %v3193 = vmax.f32 %v2881, 0.0
    %v3194 = vmax.f32 %v2554, 0.0
    %v3195 = vmax.f32 %v2883, 0.0
    %v3196 = vmax.f32 %v2557, 0.0
    %v3197 = vmax.f32 %v2886, 0.0
    %v3198 = vmax.f32 %v2559, 0.0
    %v3199 = vmax.f32 %v2888, 0.0
    %v3200 = vmax.f32 %v2562, 0.0
    %v3201 = vmax.f32 %v2891, 0.0
    %v3202 = vmax.f32 %v2564, 0.0
    %v3203 = vmax.f32 %v2893, 0.0
    %v3204 = vmax.f32 %v2567, 0.0
    %v3205 = vmax.f32 %v2896, 0.0
    %v3206 = vmax.f32 %v2569, 0.0
    %v3207 = vmax.f32 %v2898, 0.0
    %v3208 = vmax.f32 %v2572, 0.0
    %v3209 = vmax.f32 %v2901, 0.0
    %v3210 = vmax.f32 %v2574, 0.0
    %v3211 = vmax.f32 %v2903, 0.0
    %v3212 = vmax.f32 %v2577, 0.0
    %v3213 = vmax.f32 %v2906, 0.0
    %v3214 = vmax.f32 %v2579, 0.0
    %v3215 = vmax.f32 %v2908, 0.0
    %v3216 = vmax.f32 %v2582, 0.0
    %v3217 = vmax.f32 %v2911, 0.0
    %v3218 = vmax.f32 %v2584, 0.0
    %v3219 = vmax.f32 %v2913, 0.0
    %v3220 = vmax.f32 %v2587, 0.0
    %v3221 = vmax.f32 %v2916, 0.0
    %v3222 = vmax.f32 %v2589, 0.0
    %v3223 = vmax.f32 %v2918, 0.0
    %v3224 = vmax.f32 %v2592, 0.0
    %v3225 = vmax.f32 %v2921, 0.0
    %v3226 = vmax.f32 %v2594, 0.0
    %v3227 = vmax.f32 %v2923, 0.0
    %v3228 = vmax.f32 %v2597, 0.0
    %v3229 = vmax.f32 %v2926, 0.0
    %v3230 = vmax.f32 %v2599, 0.0
    %v3231 = vmax.f32 %v2928, 0.0
    %v3232 = vmax.f32 %v2602, 0.0
    %v3233 = vmax.f32 %v2931, 0.0
    %v3234 = vmax.f32 %v2604, 0.0
    %v3235 = vmax.f32 %v2933, 0.0
    %v3236 = vmax.f32 %v2607, 0.0
    %v3237 = vmax.f32 %v2936, 0.0
    %v3238 = vmax.f32 %v2609, 0.0
    %v3239 = vmax.f32 %v2938, 0.0
    %v3240 = vmax.f32 %v2612, 0.0
    %v3241 = vmax.f32 %v2941, 0.0
    %v3242 = vmax.f32 %v2614, 0.0
    %v3243 = vmax.f32 %v2943, 0.0
    %v3244 = vmax.f32 %v2617, 0.0
    %v3245 = vmax.f32 %v2946, 0.0
    %v3246 = vmax.f32 %v2619, 0.0
    %v3247 = vmax.f32 %v2948, 0.0
    %v3248 = vmax.f32 %v2622, 0.0
    %v3249 = vmax.f32 %v2951, 0.0
    %v3250 = vmax.f32 %v2624, 0.0
    %v3251 = vmax.f32 %v2953, 0.0
    %v3252 = vmax.f32 %v2627, 0.0
    %v3253 = vmax.f32 %v2956, 0.0
    %v3254 = vmax.f32 %v2629, 0.0
    %v3255 = vmax.f32 %v2958, 0.0
    %v3256 = vmax.f32 %v2632, 0.0
    %v3257 = vmax.f32 %v2961, 0.0
    %v3258 = vmax.f32 %v2634, 0.0
    %v3259 = vmax.f32 %v2963, 0.0
    %v3260 = vmax.f32 %v2637, 0.0
    %v3261 = vmax.f32 %v2966, 0.0
    %v3262 = vmax.f32 %v2639, 0.0
    %v3263 = vmax.f32 %v2968, 0.0
    %v3264 = vmax.f32 %v2642, 0.0
    %v3265 = vmax.f32 %v2971, 0.0
    %v3266 = vmax.f32 %v2644, 0.0
    %v3267 = vmax.f32 %v2973, 0.0
    %v3268 = vmax.f32 %v2647, 0.0
    %v3269 = vmax.f32 %v2976, 0.0
    %v3270 = vmax.f32 %v2649, 0.0
    %v3271 = vmax.f32 %v2978, 0.0
    %v3272 = vmax.f32 %v2652, 0.0
    %v3273 = vmax.f32 %v2981, 0.0
    %v3274 = vmax.f32 %v2654, 0.0
    %v3275 = vmax.f32 %v2983, 0.0
    %v3276 = vmax.f32 %v2657, 0.0
    %v3277 = vmax.f32 %v2986, 0.0
    %v3278 = vmax.f32 %v2659, 0.0
    %v3279 = vmax.f32 %v2988, 0.0
    %v3280 = vmax.f32 %v2662, 0.0
    %v3281 = vmax.f32 %v2991, 0.0
    %v3282 = vmax.f32 %v2664, 0.0
    %v3283 = vmax.f32 %v2993, 0.0
    %v3284 = vmax.f32 %v2667, 0.0
    %v3285 = vmax.f32 %v2996, 0.0
    %v3286 = vmax.f32 %v2669, 0.0
    %v3287 = vmax.f32 %v2998, 0.0
    %v3288 = vmax.f32 %v2672, 0.0
    %v3289 = vmax.f32 %v3001, 0.0
    %v3290 = vmax.f32 %v2674, 0.0
    %v3291 = vmax.f32 %v3003, 0.0
    %v3292 = vmax.f32 %v2677, 0.0
    %v3293 = vmax.f32 %v3006, 0.0
    %v3294 = vmax.f32 %v2679, 0.0
    %v3295 = vmax.f32 %v3008, 0.0
    %v3296 = vmax.f32 %v2682, 0.0
    %v3297 = vmax.f32 %v3011, 0.0
    %v3298 = vmax.f32 %v2684, 0.0
    %v3299 = vmax.f32 %v3013, 0.0
    %v3300 = vmax.f32 %v2687, 0.0
    %v3301 = vmax.f32 %v3016, 0.0
    %v3302 = vmax.f32 %v2689, 0.0
    %v3303 = vmax.f32 %v3018, 0.0
    %v3304 = vmax.f32 %v2692, 0.0
    %v3305 = vmax.f32 %v3021, 0.0
    %v3306 = vmax.f32 %v2694, 0.0
    %v3307 = vmax.f32 %v3023, 0.0
    %v3308 = vmax.f32 %v2697, 0.0
    %v3309 = vmax.f32 %v3026, 0.0
    %v3310 = vmax.f32 %v2699, 0.0
    %v3311 = vmax.f32 %v3028, 0.0
    %v3312 = vmax.f32 %v2702, 0.0
    %v3313 = vmax.f32 %v3031, 0.0
    %v3314 = vmax.f32 %v2704, 0.0
    %v3315 = vmax.f32 %v3033, 0.0
    %v3316 = vmax.f32 %v2707, 0.0
    %v3317 = vmax.f32 %v3036, 0.0
    %v3318 = vmax.f32 %v2709, 0.0
    %v3319 = vmax.f32 %v3038, 0.0
    %v3320 = vmax.f32 %v2712, 0.0
    %v3321 = vmax.f32 %v3041, 0.0
    %v3322 = vmax.f32 %v2714, 0.0
    %v3323 = vmax.f32 %v3043, 0.0
    %v3324 = vmax.f32 %v2717, 0.0
    %v3325 = vmax.f32 %v3046, 0.0
    %v3326 = vmax.f32 %v2719, 0.0
    %v3327 = vmax.f32 %v3048, 0.0
    %v3328 = vmax.f32 %v2722, 0.0
    %v3329 = vmax.f32 %v3051, 0.0
    %v3330 = vmax.f32 %v2724, 0.0
    %v3331 = vmax.f32 %v3053, 0.0
    %v3332 = vmax.f32 %v2727, 0.0
    %v3333 = vmax.f32 %v3056, 0.0
    %v3334 = vmax.f32 %v2729, 0.0
    %v3335 = vmax.f32 %v3058, 0.0
    %v3336 = vmax.f32 %v2732, 0.0
    %v3337 = vmax.f32 %v3061, 0.0
    %v3338 = vmax.f32 %v2734, 0.0
    %v3339 = vmax.f32 %v3063, 0.0
    %v3340 = vmax.f32 %v2737, 0.0
    %v3341 = vmax.f32 %v3066, 0.0
    %v3342 = vmax.f32 %v2739, 0.0
    %v3343 = vmax.f32 %v3068, 0.0
    %v3344 = vmax.f32 %v2742, 0.0
    %v3345 = vmax.f32 %v3071, 0.0
    %v3346 = vmax.f32 %v2744, 0.0
    %v3347 = vmax.f32 %v3073, 0.0
    %v3348 = vmax.f32 %v2747, 0.0
    %v3349 = vmax.f32 %v3076, 0.0
    %v3350 = vmax.f32 %v2749, 0.0
    %v3351 = vmax.f32 %v3078, 0.0
    %v3352 = vmax.f32 %v2752, 0.0
    %v3353 = vmax.f32 %v3081, 0.0
    %v3354 = vmax.f32 %v2754, 0.0
    %v3355 = vmax.f32 %v3083, 0.0
    %v3356 = vmax.f32 %v2757, 0.0
    %v3357 = vmax.f32 %v3086, 0.0
    %v3358 = vmax.f32 %v2759, 0.0
    %v3359 = vmax.f32 %v3088, 0.0
    %v3360 = vmax.f32 %v2762, 0.0
    %v3361 = vmax.f32 %v3091, 0.0
    %v3362 = vmax.f32 %v2764, 0.0
    %v3363 = vmax.f32 %v3093, 0.0
    %v3364 = vmax.f32 %v2767, 0.0
    %v3365 = vmax.f32 %v3096, 0.0
    %v3366 = vmax.f32 %v2769, 0.0
    %v3367 = vmax.f32 %v3098, 0.0
    %v3368 = vmax.f32 %v2772, 0.0
    %v3369 = vmax.f32 %v3101, 0.0
    %v3370 = vmax.f32 %v2774, 0.0
    %v3371 = vmax.f32 %v3103, 0.0
    %v3372 = vmax.f32 %v2777, 0.0
    %v3373 = vmax.f32 %v3106, 0.0
    %v3374 = vmax.f32 %v2779, 0.0
    %v3375 = vmax.f32 %v3108, 0.0
    %v3376 = vmax.f32 %v2782, 0.0
    %v3377 = vmax.f32 %v3111, 0.0
    %v3378 = vmax.f32 %v2784, 0.0
    %v3379 = vmax.f32 %v3113, 0.0
    %v3380 = vmax.f32 %v2787, 0.0
    %v3381 = vmax.f32 %v3116, 0.0
    %v3382 = vmax.f32 %v2789, 0.0
    %v3383 = vmax.f32 %v3118, 0.0
    %v3384 = vmax.f32 %v2792, 0.0
    %v3385 = vmax.f32 %v3121, 0.0
    %v3386 = vmax.f32 %v2794, 0.0
    %v3387 = vmax.f32 %v3123, 0.0
    %v3388 = vmax.f32 %v2797, 0.0
    %v3389 = vmax.f32 %v3126, 0.0
    %v3390 = vmax.f32 %v2799, 0.0
    %v3391 = vmax.f32 %v3128, 0.0
    %v3392 = vmax.f32 %v2802, 0.0
    %v3393 = vmax.f32 %v3131, 0.0
    %v3394 = vmax.f32 %v2804, 0.0
    %v3395 = vmax.f32 %v3133, 0.0
    %v3396 = vmax.f32 %v2807, 0.0
    %v3397 = vmax.f32 %v3136, 0.0
    %v3398 = vmax.f32 %v2809, 0.0
    %v3399 = vmax.f32 %v3138, 0.0
    %v3400 = vmax.f32 %v2812, 0.0
    %v3401 = vmax.f32 %v3141, 0.0
    %v3402 = vmax.f32 %v2814, 0.0
    %v3403 = vmax.f32 %v3143, 0.0
    %v3404 = vmax.f32 %v2817, 0.0
    %v3405 = vmax.f32 %v3146, 0.0
    %v3406 = vmax.f32 %v2819, 0.0
    %v3407 = vmax.f32 %v3148, 0.0
    %v3408 = vmax.f32 %v2822, 0.0
    %v3409 = vmax.f32 %v3151, 0.0
    %v3410 = vmax.f32 %v2824, 0.0
    %v3411 = vmax.f32 %v3153, 0.0
    %v3412 = vmax.f32 %v2827, 0.0
    %v3413 = vmax.f32 %v3156, 0.0
    %v3414 = vmax.f32 %v2829, 0.0
    %v3415 = vmax.f32 %v3158, 0.0
    %v3416 = vmax.f32 %v3160, %v3162
    %v3417 = vmax.f32 %v3416, %v3164
    %v3418 = vmax.f32 %v3417, %v3166
    %v3419 = vmax.f32 %v3418, %v3168
    %v3420 = vmax.f32 %v3419, %v3170
    %v3421 = vmax.f32 %v3420, %v3172
    %v3422 = vmax.f32 %v3421, %v3174
    %v3423 = vmax.f32 %v3422, %v3176
    %v3424 = vmax.f32 %v3423, %v3178
    %v3425 = vmax.f32 %v3424, %v3180
    %v3426 = vmax.f32 %v3425, %v3182
    %v3427 = vmax.f32 %v3426, %v3184
    %v3428 = vmax.f32 %v3427, %v3186
    %v3429 = vmax.f32 %v3428, %v3188
    %v3430 = vmax.f32 %v3429, %v3190
    %v3431 = vrot.slane %v3430, 4
    %v3432 = vmax.f32 %v3430, %v3431
    %v3433 = vrot.slane %v3432, 2
    %v3434 = vmax.f32 %v3432, %v3433
    %v3435 = vrot.slane %v3434, 1
    %v3436 = vmax.f32 %v3434, %v3435
    %v3437 = vmax.f32 %v3161, %v3163
    %v3438 = vmax.f32 %v3437, %v3165
    %v3439 = vmax.f32 %v3438, %v3167
    %v3440 = vmax.f32 %v3439, %v3169
    %v3441 = vmax.f32 %v3440, %v3171
    %v3442 = vmax.f32 %v3441, %v3173
    %v3443 = vmax.f32 %v3442, %v3175
    %v3444 = vmax.f32 %v3443, %v3177
    %v3445 = vmax.f32 %v3444, %v3179
    %v3446 = vmax.f32 %v3445, %v3181
    %v3447 = vmax.f32 %v3446, %v3183
    %v3448 = vmax.f32 %v3447, %v3185
    %v3449 = vmax.f32 %v3448, %v3187
    %v3450 = vmax.f32 %v3449, %v3189
    %v3451 = vmax.f32 %v3450, %v3191
    %v3452 = vrot.slane %v3451, 4
    %v3453 = vmax.f32 %v3451, %v3452
    %v3454 = vrot.slane %v3453, 2
    %v3455 = vmax.f32 %v3453, %v3454
    %v3456 = vrot.slane %v3455, 1
    %v3457 = vmax.f32 %v3455, %v3456
    %v3458 = vmax.f32 %v3192, %v3194
    %v3459 = vmax.f32 %v3458, %v3196
    %v3460 = vmax.f32 %v3459, %v3198
    %v3461 = vmax.f32 %v3460, %v3200
    %v3462 = vmax.f32 %v3461, %v3202
    %v3463 = vmax.f32 %v3462, %v3204
    %v3464 = vmax.f32 %v3463, %v3206
    %v3465 = vmax.f32 %v3464, %v3208
    %v3466 = vmax.f32 %v3465, %v3210
    %v3467 = vmax.f32 %v3466, %v3212
    %v3468 = vmax.f32 %v3467, %v3214
    %v3469 = vmax.f32 %v3468, %v3216
    %v3470 = vmax.f32 %v3469, %v3218
    %v3471 = vmax.f32 %v3470, %v3220
    %v3472 = vmax.f32 %v3471, %v3222
    %v3473 = vrot.slane %v3472, 4
    %v3474 = vmax.f32 %v3472, %v3473
    %v3475 = vrot.slane %v3474, 2
    %v3476 = vmax.f32 %v3474, %v3475
    %v3477 = vrot.slane %v3476, 1
    %v3478 = vmax.f32 %v3476, %v3477
    %v3479 = vmax.f32 %v3193, %v3195
    %v3480 = vmax.f32 %v3479, %v3197
    %v3481 = vmax.f32 %v3480, %v3199
    %v3482 = vmax.f32 %v3481, %v3201
    %v3483 = vmax.f32 %v3482, %v3203
    %v3484 = vmax.f32 %v3483, %v3205
    %v3485 = vmax.f32 %v3484, %v3207
    %v3486 = vmax.f32 %v3485, %v3209
    %v3487 = vmax.f32 %v3486, %v3211
    %v3488 = vmax.f32 %v3487, %v3213
    %v3489 = vmax.f32 %v3488, %v3215
    %v3490 = vmax.f32 %v3489, %v3217
    %v3491 = vmax.f32 %v3490, %v3219
    %v3492 = vmax.f32 %v3491, %v3221
    %v3493 = vmax.f32 %v3492, %v3223
    %v3494 = vrot.slane %v3493, 4
    %v3495 = vmax.f32 %v3493, %v3494
    %v3496 = vrot.slane %v3495, 2
    %v3497 = vmax.f32 %v3495, %v3496
    %v3498 = vrot.slane %v3497, 1
    %v3499 = vmax.f32 %v3497, %v3498
    %v3500 = vmax.f32 %v3224, %v3226
    %v3501 = vmax.f32 %v3500, %v3228
    %v3502 = vmax.f32 %v3501, %v3230
    %v3503 = vmax.f32 %v3502, %v3232
    %v3504 = vmax.f32 %v3503, %v3234
    %v3505 = vmax.f32 %v3504, %v3236
    %v3506 = vmax.f32 %v3505, %v3238
    %v3507 = vmax.f32 %v3506, %v3240
    %v3508 = vmax.f32 %v3507, %v3242
    %v3509 = vmax.f32 %v3508, %v3244
    %v3510 = vmax.f32 %v3509, %v3246
    %v3511 = vmax.f32 %v3510, %v3248
    %v3512 = vmax.f32 %v3511, %v3250
    %v3513 = vmax.f32 %v3512, %v3252
    %v3514 = vmax.f32 %v3513, %v3254
    %v3515 = vrot.slane %v3514, 4
    %v3516 = vmax.f32 %v3514, %v3515
    %v3517 = vrot.slane %v3516, 2
    %v3518 = vmax.f32 %v3516, %v3517
    %v3519 = vrot.slane %v3518, 1
    %v3520 = vmax.f32 %v3518, %v3519
    %v3521 = vmax.f32 %v3225, %v3227
    %v3522 = vmax.f32 %v3521, %v3229
    %v3523 = vmax.f32 %v3522, %v3231
    %v3524 = vmax.f32 %v3523, %v3233
    %v3525 = vmax.f32 %v3524, %v3235
    %v3526 = vmax.f32 %v3525, %v3237
    %v3527 = vmax.f32 %v3526, %v3239
    %v3528 = vmax.f32 %v3527, %v3241
    %v3529 = vmax.f32 %v3528, %v3243
    %v3530 = vmax.f32 %v3529, %v3245
    %v3531 = vmax.f32 %v3530, %v3247
    %v3532 = vmax.f32 %v3531, %v3249
    %v3533 = vmax.f32 %v3532, %v3251
    %v3534 = vmax.f32 %v3533, %v3253
    %v3535 = vmax.f32 %v3534, %v3255
    %v3536 = vrot.slane %v3535, 4
    %v3537 = vmax.f32 %v3535, %v3536
    %v3538 = vrot.slane %v3537, 2
    %v3539 = vmax.f32 %v3537, %v3538
    %v3540 = vrot.slane %v3539, 1
    %v3541 = vmax.f32 %v3539, %v3540
    %v3542 = vmax.f32 %v3256, %v3258
    %v3543 = vmax.f32 %v3542, %v3260
    %v3544 = vmax.f32 %v3543, %v3262
    %v3545 = vmax.f32 %v3544, %v3264
    %v3546 = vmax.f32 %v3545, %v3266
    %v3547 = vmax.f32 %v3546, %v3268
    %v3548 = vmax.f32 %v3547, %v3270
    %v3549 = vmax.f32 %v3548, %v3272
    %v3550 = vmax.f32 %v3549, %v3274
    %v3551 = vmax.f32 %v3550, %v3276
    %v3552 = vmax.f32 %v3551, %v3278
    %v3553 = vmax.f32 %v3552, %v3280
    %v3554 = vmax.f32 %v3553, %v3282
    %v3555 = vmax.f32 %v3554, %v3284
    %v3556 = vmax.f32 %v3555, %v3286
    %v3557 = vrot.slane %v3556, 4
    %v3558 = vmax.f32 %v3556, %v3557
    %v3559 = vrot.slane %v3558, 2
    %v3560 = vmax.f32 %v3558, %v3559
    %v3561 = vrot.slane %v3560, 1
    %v3562 = vmax.f32 %v3560, %v3561
    %v3563 = vmax.f32 %v3257, %v3259
    %v3564 = vmax.f32 %v3563, %v3261
    %v3565 = vmax.f32 %v3564, %v3263
    %v3566 = vmax.f32 %v3565, %v3265
    %v3567 = vmax.f32 %v3566, %v3267
    %v3568 = vmax.f32 %v3567, %v3269
    %v3569 = vmax.f32 %v3568, %v3271
    %v3570 = vmax.f32 %v3569, %v3273
    %v3571 = vmax.f32 %v3570, %v3275
    %v3572 = vmax.f32 %v3571, %v3277
    %v3573 = vmax.f32 %v3572, %v3279
    %v3574 = vmax.f32 %v3573, %v3281
    %v3575 = vmax.f32 %v3574, %v3283
    %v3576 = vmax.f32 %v3575, %v3285
    %v3577 = vmax.f32 %v3576, %v3287
    %v3578 = vrot.slane %v3577, 4
    %v3579 = vmax.f32 %v3577, %v3578
    %v3580 = vrot.slane %v3579, 2
    %v3581 = vmax.f32 %v3579, %v3580
    %v3582 = vrot.slane %v3581, 1
    %v3583 = vmax.f32 %v3581, %v3582
    %v3584 = vmax.f32 %v3288, %v3290
    %v3585 = vmax.f32 %v3584, %v3292
    %v3586 = vmax.f32 %v3585, %v3294
    %v3587 = vmax.f32 %v3586, %v3296
    %v3588 = vmax.f32 %v3587, %v3298
    %v3589 = vmax.f32 %v3588, %v3300
    %v3590 = vmax.f32 %v3589, %v3302
    %v3591 = vmax.f32 %v3590, %v3304
    %v3592 = vmax.f32 %v3591, %v3306
    %v3593 = vmax.f32 %v3592, %v3308
    %v3594 = vmax.f32 %v3593, %v3310
    %v3595 = vmax.f32 %v3594, %v3312
    %v3596 = vmax.f32 %v3595, %v3314
    %v3597 = vmax.f32 %v3596, %v3316
    %v3598 = vmax.f32 %v3597, %v3318
    %v3599 = vrot.slane %v3598, 4
    %v3600 = vmax.f32 %v3598, %v3599
    %v3601 = vrot.slane %v3600, 2
    %v3602 = vmax.f32 %v3600, %v3601
    %v3603 = vrot.slane %v3602, 1
    %v3604 = vmax.f32 %v3602, %v3603
    %v3605 = vmax.f32 %v3289, %v3291
    %v3606 = vmax.f32 %v3605, %v3293
    %v3607 = vmax.f32 %v3606, %v3295
    %v3608 = vmax.f32 %v3607, %v3297
    %v3609 = vmax.f32 %v3608, %v3299
    %v3610 = vmax.f32 %v3609, %v3301
    %v3611 = vmax.f32 %v3610, %v3303
    %v3612 = vmax.f32 %v3611, %v3305
    %v3613 = vmax.f32 %v3612, %v3307
    %v3614 = vmax.f32 %v3613, %v3309
    %v3615 = vmax.f32 %v3614, %v3311
    %v3616 = vmax.f32 %v3615, %v3313
    %v3617 = vmax.f32 %v3616, %v3315
    %v3618 = vmax.f32 %v3617, %v3317
    %v3619 = vmax.f32 %v3618, %v3319
    %v3620 = vrot.slane %v3619, 4
    %v3621 = vmax.f32 %v3619, %v3620
    %v3622 = vrot.slane %v3621, 2
    %v3623 = vmax.f32 %v3621, %v3622
    %v3624 = vrot.slane %v3623, 1
    %v3625 = vmax.f32 %v3623, %v3624
    %v3626 = vmax.f32 %v3320, %v3322
    %v3627 = vmax.f32 %v3626, %v3324
    %v3628 = vmax.f32 %v3627, %v3326
    %v3629 = vmax.f32 %v3628, %v3328
    %v3630 = vmax.f32 %v3629, %v3330
    %v3631 = vmax.f32 %v3630, %v3332
    %v3632 = vmax.f32 %v3631, %v3334
    %v3633 = vmax.f32 %v3632, %v3336
    %v3634 = vmax.f32 %v3633, %v3338
    %v3635 = vmax.f32 %v3634, %v3340
    %v3636 = vmax.f32 %v3635, %v3342
    %v3637 = vmax.f32 %v3636, %v3344
    %v3638 = vmax.f32 %v3637, %v3346
    %v3639 = vmax.f32 %v3638, %v3348
    %v3640 = vmax.f32 %v3639, %v3350
    %v3641 = vrot.slane %v3640, 4
    %v3642 = vmax.f32 %v3640, %v3641
    %v3643 = vrot.slane %v3642, 2
    %v3644 = vmax.f32 %v3642, %v3643
    %v3645 = vrot.slane %v3644, 1
    %v3646 = vmax.f32 %v3644, %v3645
    %v3647 = vmax.f32 %v3321, %v3323
    %v3648 = vmax.f32 %v3647, %v3325
    %v3649 = vmax.f32 %v3648, %v3327
    %v3650 = vmax.f32 %v3649, %v3329
    %v3651 = vmax.f32 %v3650, %v3331
    %v3652 = vmax.f32 %v3651, %v3333
    %v3653 = vmax.f32 %v3652, %v3335
    %v3654 = vmax.f32 %v3653, %v3337
    %v3655 = vmax.f32 %v3654, %v3339
    %v3656 = vmax.f32 %v3655, %v3341
    %v3657 = vmax.f32 %v3656, %v3343
    %v3658 = vmax.f32 %v3657, %v3345
    %v3659 = vmax.f32 %v3658, %v3347
    %v3660 = vmax.f32 %v3659, %v3349
    %v3661 = vmax.f32 %v3660, %v3351
    %v3662 = vrot.slane %v3661, 4
    %v3663 = vmax.f32 %v3661, %v3662
    %v3664 = vrot.slane %v3663, 2
    %v3665 = vmax.f32 %v3663, %v3664
    %v3666 = vrot.slane %v3665, 1
    %v3667 = vmax.f32 %v3665, %v3666
    %v3668 = vmax.f32 %v3352, %v3354
    %v3669 = vmax.f32 %v3668, %v3356
    %v3670 = vmax.f32 %v3669, %v3358
    %v3671 = vmax.f32 %v3670, %v3360
    %v3672 = vmax.f32 %v3671, %v3362
    %v3673 = vmax.f32 %v3672, %v3364
    %v3674 = vmax.f32 %v3673, %v3366
    %v3675 = vmax.f32 %v3674, %v3368
    %v3676 = vmax.f32 %v3675, %v3370
    %v3677 = vmax.f32 %v3676, %v3372
    %v3678 = vmax.f32 %v3677, %v3374
    %v3679 = vmax.f32 %v3678, %v3376
    %v3680 = vmax.f32 %v3679, %v3378
    %v3681 = vmax.f32 %v3680, %v3380
    %v3682 = vmax.f32 %v3681, %v3382
    %v3683 = vrot.slane %v3682, 4
    %v3684 = vmax.f32 %v3682, %v3683
    %v3685 = vrot.slane %v3684, 2
    %v3686 = vmax.f32 %v3684, %v3685
    %v3687 = vrot.slane %v3686, 1
    %v3688 = vmax.f32 %v3686, %v3687
    %v3689 = vmax.f32 %v3353, %v3355
    %v3690 = vmax.f32 %v3689, %v3357
    %v3691 = vmax.f32 %v3690, %v3359
    %v3692 = vmax.f32 %v3691, %v3361
    %v3693 = vmax.f32 %v3692, %v3363
    %v3694 = vmax.f32 %v3693, %v3365
    %v3695 = vmax.f32 %v3694, %v3367
    %v3696 = vmax.f32 %v3695, %v3369
    %v3697 = vmax.f32 %v3696, %v3371
    %v3698 = vmax.f32 %v3697, %v3373
    %v3699 = vmax.f32 %v3698, %v3375
    %v3700 = vmax.f32 %v3699, %v3377
    %v3701 = vmax.f32 %v3700, %v3379
    %v3702 = vmax.f32 %v3701, %v3381
    %v3703 = vmax.f32 %v3702, %v3383
    %v3704 = vrot.slane %v3703, 4
    %v3705 = vmax.f32 %v3703, %v3704
    %v3706 = vrot.slane %v3705, 2
    %v3707 = vmax.f32 %v3705, %v3706
    %v3708 = vrot.slane %v3707, 1
    %v3709 = vmax.f32 %v3707, %v3708
    %v3710 = vmax.f32 %v3384, %v3386
    %v3711 = vmax.f32 %v3710, %v3388
    %v3712 = vmax.f32 %v3711, %v3390
    %v3713 = vmax.f32 %v3712, %v3392
    %v3714 = vmax.f32 %v3713, %v3394
    %v3715 = vmax.f32 %v3714, %v3396
    %v3716 = vmax.f32 %v3715, %v3398
    %v3717 = vmax.f32 %v3716, %v3400
    %v3718 = vmax.f32 %v3717, %v3402
    %v3719 = vmax.f32 %v3718, %v3404
    %v3720 = vmax.f32 %v3719, %v3406
    %v3721 = vmax.f32 %v3720, %v3408
    %v3722 = vmax.f32 %v3721, %v3410
    %v3723 = vmax.f32 %v3722, %v3412
    %v3724 = vmax.f32 %v3723, %v3414
    %v3725 = vrot.slane %v3724, 4
    %v3726 = vmax.f32 %v3724, %v3725
    %v3727 = vrot.slane %v3726, 2
    %v3728 = vmax.f32 %v3726, %v3727
    %v3729 = vrot.slane %v3728, 1
    %v3730 = vmax.f32 %v3728, %v3729
    %v3731 = vmax.f32 %v3385, %v3387
    %v3732 = vmax.f32 %v3731, %v3389
    %v3733 = vmax.f32 %v3732, %v3391
    %v3734 = vmax.f32 %v3733, %v3393
    %v3735 = vmax.f32 %v3734, %v3395
    %v3736 = vmax.f32 %v3735, %v3397
    %v3737 = vmax.f32 %v3736, %v3399
    %v3738 = vmax.f32 %v3737, %v3401
    %v3739 = vmax.f32 %v3738, %v3403
    %v3740 = vmax.f32 %v3739, %v3405
    %v3741 = vmax.f32 %v3740, %v3407
    %v3742 = vmax.f32 %v3741, %v3409
    %v3743 = vmax.f32 %v3742, %v3411
    %v3744 = vmax.f32 %v3743, %v3413
    %v3745 = vmax.f32 %v3744, %v3415
    %v3746 = vrot.slane %v3745, 4
    %v3747 = vmax.f32 %v3745, %v3746
    %v3748 = vrot.slane %v3747, 2
    %v3749 = vmax.f32 %v3747, %v3748
    %v3750 = vrot.slane %v3749, 1
    %v3751 = vmax.f32 %v3749, %v3750
    %v3752 = vpack.c.bf16 %v3436, %v3436
    %v3753 = vpack.c.bf16 %v3457, %v3457
    %v3754 = vpack.c.bf16 %v3478, %v3478
    %v3755 = vpack.c.bf16 %v3499, %v3499
    %v3756 = vpack.c.bf16 %v3520, %v3520
    %v3757 = vpack.c.bf16 %v3541, %v3541
    %v3758 = vpack.c.bf16 %v3562, %v3562
    %v3759 = vpack.c.bf16 %v3583, %v3583
    %v3760 = vpack.c.bf16 %v3604, %v3604
    %v3761 = vpack.c.bf16 %v3625, %v3625
    %v3762 = vpack.c.bf16 %v3646, %v3646
    %v3763 = vpack.c.bf16 %v3667, %v3667
    %v3764 = vpack.c.bf16 %v3688, %v3688
    %v3765 = vpack.c.bf16 %v3709, %v3709
    %v3766 = vpack.c.bf16 %v3730, %v3730
    %v3767 = vpack.c.bf16 %v3751, %v3751
    %v3768 = vld [vmem:[#allocation2] sm:$0xf]
    %v3769 = vld [vmem:[#allocation2 + $0x4] sm:$0xf]
    %v3770 = vld [vmem:[#allocation2 + $0x8] sm:$0xf]
    %v3771 = vld [vmem:[#allocation2 + $0xc] sm:$0xf]
    %v3772 = vld [vmem:[#allocation2 + $0x10] sm:$0xf]
    %v3773 = vld [vmem:[#allocation2 + $0x14] sm:$0xf]
    %v3774 = vld [vmem:[#allocation2 + $0x18] sm:$0xf]
    %v3775 = vld [vmem:[#allocation2 + $0x1c] sm:$0xf]
    %v3776 = vld [vmem:[#allocation2 + $0x20] sm:$0xf]
    %v3777 = vld [vmem:[#allocation2 + $0x24] sm:$0xf]
    %v3778 = vld [vmem:[#allocation2 + $0x28] sm:$0xf]
    %v3779 = vld [vmem:[#allocation2 + $0x2c] sm:$0xf]
    %v3780 = vld [vmem:[#allocation2 + $0x30] sm:$0xf]
    %v3781 = vld [vmem:[#allocation2 + $0x34] sm:$0xf]
    %v3782 = vld [vmem:[#allocation2 + $0x38] sm:$0xf]
    %v3783 = vld [vmem:[#allocation2 + $0x3c] sm:$0xf]
    %v3784 = vld [vmem:[#allocation2 + $0x40] sm:$0xf]
    %v3785 = vld [vmem:[#allocation2 + $0x44] sm:$0xf]
    %v3786 = vld [vmem:[#allocation2 + $0x48] sm:$0xf]
    %v3787 = vld [vmem:[#allocation2 + $0x4c] sm:$0xf]
    %v3788 = vld [vmem:[#allocation2 + $0x50] sm:$0xf]
    %v3789 = vld [vmem:[#allocation2 + $0x54] sm:$0xf]
    %v3790 = vld [vmem:[#allocation2 + $0x58] sm:$0xf]
    %v3791 = vld [vmem:[#allocation2 + $0x5c] sm:$0xf]
    %v3792 = vld [vmem:[#allocation2 + $0x60] sm:$0xf]
    %v3793 = vld [vmem:[#allocation2 + $0x64] sm:$0xf]
    %v3794 = vld [vmem:[#allocation2 + $0x68] sm:$0xf]
    %v3795 = vld [vmem:[#allocation2 + $0x6c] sm:$0xf]
    %v3796 = vld [vmem:[#allocation2 + $0x70] sm:$0xf]
    %v3797 = vld [vmem:[#allocation2 + $0x74] sm:$0xf]
    %v3798 = vld [vmem:[#allocation2 + $0x78] sm:$0xf]
    %v3799 = vld [vmem:[#allocation2 + $0x7c] sm:$0xf]
    %v3800 = vld [vmem:[%s8 + $0x4] ss:$0 sm:$0xff]
    %v3817 = vunpack.c.l.b16 %v3752
    %v3818 = vunpack.c.l.b16 %v3753
    %v3819 = vunpack.c.l.b16 %v3754
    %v3820 = vunpack.c.l.b16 %v3755
    %v3821 = vunpack.c.l.b16 %v3756
    %v3822 = vunpack.c.l.b16 %v3757
    %v3823 = vunpack.c.l.b16 %v3758
    %v3824 = vunpack.c.l.b16 %v3759
    %v3825 = vunpack.c.l.b16 %v3760
    %v3826 = vunpack.c.l.b16 %v3761
    %v3827 = vunpack.c.l.b16 %v3762
    %v3828 = vunpack.c.l.b16 %v3763
    %v3829 = vunpack.c.l.b16 %v3764
    %v3830 = vunpack.c.l.b16 %v3765
    %v3831 = vunpack.c.l.b16 %v3766
    %v3832 = vunpack.c.l.b16 %v3767
    %vm3833 = vcmask 1041409
    %v3834 = vsel %vm3833, %v3819, %v3817
    %vm3835 = vcmask 1042434
    %v3836 = vsel %vm3835, %v3821, %v3834
    %vm3837 = vcmask 1043459
    %v3838 = vsel %vm3837, %v3823, %v3836
    %vm3839 = vcmask 1044484
    %v3840 = vsel %vm3839, %v3825, %v3838
    %vm3841 = vcmask 1045509
    %v3842 = vsel %vm3841, %v3827, %v3840
    %vm3843 = vcmask 1046534
    %v3844 = vsel %vm3843, %v3829, %v3842
    %vm3845 = vcmask 1047559
    %v3846 = vsel %vm3845, %v3831, %v3844
    %v3847 = vsel %vm3833, %v3820, %v3818
    %v3848 = vsel %vm3835, %v3822, %v3847
    %v3849 = vsel %vm3837, %v3824, %v3848
    %v3850 = vsel %vm3839, %v3826, %v3849
    %v3851 = vsel %vm3841, %v3828, %v3850
    %v3852 = vsel %vm3843, %v3830, %v3851
    %v3853 = vsel %vm3845, %v3832, %v3852
    %v3854 = vpack.c.b16 %v3846, %v3846
    %v3855 = vpack.c.b16 %v3853, %v3853
    %v3890 = vunpack.c.l.b16 %v3768
    %v3891 = vunpack.c.l.b16 %v3769
    %v3892 = vunpack.c.l.b16 %v3770
    %v3893 = vunpack.c.l.b16 %v3771
    %v3894 = vunpack.c.l.b16 %v3772
    %v3895 = vunpack.c.l.b16 %v3773
    %v3896 = vunpack.c.l.b16 %v3774
    %v3897 = vunpack.c.l.b16 %v3775
    %v3898 = vunpack.c.l.b16 %v3776
    %v3899 = vunpack.c.l.b16 %v3777
    %v3900 = vunpack.c.l.b16 %v3778
    %v3901 = vunpack.c.l.b16 %v3779
    %v3902 = vunpack.c.l.b16 %v3780
    %v3903 = vunpack.c.l.b16 %v3781
    %v3904 = vunpack.c.l.b16 %v3782
    %v3905 = vunpack.c.l.b16 %v3783
    %v3906 = vunpack.c.l.b16 %v3784
    %v3907 = vunpack.c.l.b16 %v3785
    %v3908 = vunpack.c.l.b16 %v3786
    %v3909 = vunpack.c.l.b16 %v3787
    %v3910 = vunpack.c.l.b16 %v3788
    %v3911 = vunpack.c.l.b16 %v3789
    %v3912 = vunpack.c.l.b16 %v3790
    %v3913 = vunpack.c.l.b16 %v3791
    %v3914 = vunpack.c.l.b16 %v3792
    %v3915 = vunpack.c.l.b16 %v3793
    %v3916 = vunpack.c.l.b16 %v3794
    %v3917 = vunpack.c.l.b16 %v3795
    %v3918 = vunpack.c.l.b16 %v3796
    %v3919 = vunpack.c.l.b16 %v3797
    %v3920 = vunpack.c.l.b16 %v3798
    %v3921 = vunpack.c.l.b16 %v3799
    %v3922 = vpack.c.b16 %v3891, %v3890
    %v3923 = vpack.c.b16 %v3893, %v3892
    %v3924 = vpack.c.b16 %v3895, %v3894
    %v3925 = vpack.c.b16 %v3897, %v3896
    %v3926 = vpack.c.b16 %v3899, %v3898
    %v3927 = vpack.c.b16 %v3901, %v3900
    %v3928 = vpack.c.b16 %v3903, %v3902
    %v3929 = vpack.c.b16 %v3905, %v3904
    %v3930 = vpack.c.b16 %v3907, %v3906
    %v3931 = vpack.c.b16 %v3909, %v3908
    %v3932 = vpack.c.b16 %v3911, %v3910
    %v3933 = vpack.c.b16 %v3913, %v3912
    %v3934 = vpack.c.b16 %v3915, %v3914
    %v3935 = vpack.c.b16 %v3917, %v3916
    %v3936 = vpack.c.b16 %v3919, %v3918
    %v3937 = vpack.c.b16 %v3921, %v3920
    %3954 = vmatpush.bf16.msra.mxu0 %v3929
    %3955 = vmatpush.bf16.msra.mxu0 %v3928
    %3956 = vmatpush.bf16.msra.mxu0 %v3927
    %3957 = vmatpush.bf16.msra.mxu0 %v3926
    %3958 = vmatpush.bf16.msra.mxu0 %v3925
    %3959 = vmatpush.bf16.msra.mxu0 %v3924
    %3960 = vmatpush.bf16.msra.mxu0 %v3923
    %3961 = vmatpush.bf16.msra.mxu0 %v3922
    %3962 = vmatmul.bf16.gmra.mxu0 %v3854
    %v3963 = vpop.f32.mrf.mxu0
    %v3964 = vadd.f32 %v3800, %v3963
    %v3965 = vpop.f32.mrf.mxu0
    %3966 = vdwg.mxu0
    %3967 = vmatpush.bf16.msra.mxu0 %v3937
    %3968 = vmatpush.bf16.msra.mxu0 %v3936
    %3969 = vmatpush.bf16.msra.mxu0 %v3935
    %3970 = vmatpush.bf16.msra.mxu0 %v3934
    %3971 = vmatpush.bf16.msra.mxu0 %v3933
    %3972 = vmatpush.bf16.msra.mxu0 %v3932
    %3973 = vmatpush.bf16.msra.mxu0 %v3931
    %3974 = vmatpush.bf16.msra.mxu0 %v3930
    %3975 = vmatmul.bf16.gmra.mxu0 %v3855
    %v3976 = vpop.f32.mrf.mxu0
    %v3977 = vadd.f32 %v3964, %v3976
    %v3978 = vpop.f32.mrf.mxu0
    %3979 = vdwg.mxu0
    %v3980 = vmax.f32 %v3977, 0.0
    %v3981 = vpack.c.bf16 %v3980, %v3980
    %v3982 = vld [vmem:[%s6] sm:$0xf]
    %v3983 = vld [vmem:[%s6 + $0x4] sm:$0xf]
    %v3984 = vld [vmem:[%s6 + $0x8] sm:$0xf]
    %v3985 = vld [vmem:[%s6 + $0xc] sm:$0xf]
    %v3986 = vld [vmem:[%s6 + $0x10] sm:$0xf]
    %v3987 = vld [vmem:[%s6 + $0x14] sm:$0xf]
    %v3988 = vld [vmem:[%s6 + $0x18] sm:$0xf]
    %v3989 = vld [vmem:[%s6 + $0x1c] sm:$0xf]
    %v3990 = vld [vmem:[%s6 + $0x20] sm:$0xf]
    %v3991 = vld [vmem:[%s6 + $0x24] sm:$0xf]
    %v3992 = vld [vmem:[%s6 + $0x28] sm:$0xf]
    %v3993 = vld [vmem:[%s6 + $0x2c] sm:$0xf]
    %v3994 = vld [vmem:[%s6 + $0x30] sm:$0xf]
    %v3995 = vld [vmem:[%s6 + $0x34] sm:$0xf]
    %v3996 = vld [vmem:[%s6 + $0x38] sm:$0xf]
    %v3997 = vld [vmem:[%s6 + $0x3c] sm:$0xf]
    %v3998 = vld [vmem:[%s8 + $0x5] ss:$0 sm:$0xff]
    %v4015 = vunpack.c.l.b16 %v3982
    %v4016 = vunpack.c.l.b16 %v3983
    %v4017 = vunpack.c.l.b16 %v3984
    %v4018 = vunpack.c.l.b16 %v3985
    %v4019 = vunpack.c.l.b16 %v3986
    %v4020 = vunpack.c.l.b16 %v3987
    %v4021 = vunpack.c.l.b16 %v3988
    %v4022 = vunpack.c.l.b16 %v3989
    %v4023 = vunpack.c.l.b16 %v3990
    %v4024 = vunpack.c.l.b16 %v3991
    %v4025 = vunpack.c.l.b16 %v3992
    %v4026 = vunpack.c.l.b16 %v3993
    %v4027 = vunpack.c.l.b16 %v3994
    %v4028 = vunpack.c.l.b16 %v3995
    %v4029 = vunpack.c.l.b16 %v3996
    %v4030 = vunpack.c.l.b16 %v3997
    %v4031 = vpack.c.b16 %v4016, %v4015
    %v4032 = vpack.c.b16 %v4018, %v4017
    %v4033 = vpack.c.b16 %v4020, %v4019
    %v4034 = vpack.c.b16 %v4022, %v4021
    %v4035 = vpack.c.b16 %v4024, %v4023
    %v4036 = vpack.c.b16 %v4026, %v4025
    %v4037 = vpack.c.b16 %v4028, %v4027
    %v4038 = vpack.c.b16 %v4030, %v4029
    %4047 = vmatpush.bf16.msra.mxu0 %v4038
    %4048 = vmatpush.bf16.msra.mxu0 %v4037
    %4049 = vmatpush.bf16.msra.mxu0 %v4036
    %4050 = vmatpush.bf16.msra.mxu0 %v4035
    %4051 = vmatpush.bf16.msra.mxu0 %v4034
    %4052 = vmatpush.bf16.msra.mxu0 %v4033
    %4053 = vmatpush.bf16.msra.mxu0 %v4032
    %4054 = vmatpush.bf16.msra.mxu0 %v4031
    %4055 = vmatmul.bf16.gmra.mxu0 %v3981
    %v4056 = vpop.f32.mrf.mxu0
    %v4057 = vadd.f32 %v3998, %v4056
    %v4058 = vpop.f32.mrf.mxu0
    %4059 = vdwg.mxu0
    %v4060 = vmax.f32 %v4057, 0.0
    %v4061 = vpack.c.bf16 %v4060, %v4060
    %v4062 = vld [vmem:[%s7] sm:$0xf]
    %v4063 = vld [vmem:[%s7 + $0x4] sm:$0xf]
    %v4064 = vld [vmem:[%s7 + $0x8] sm:$0xf]
    %v4065 = vld [vmem:[%s7 + $0xc] sm:$0xf]
    %v4066 = vld [vmem:[%s7 + $0x10] sm:$0xf]
    %v4067 = vld [vmem:[%s7 + $0x14] sm:$0xf]
    %v4068 = vld [vmem:[%s7 + $0x18] sm:$0xf]
    %v4069 = vld [vmem:[%s7 + $0x1c] sm:$0xf]
    %v4070 = vld [vmem:[%s8 + $0x6] ss:$0 sm:$0xff]
    %v4079 = vunpack.c.l.b16 %v4062
    %v4080 = vunpack.c.l.b16 %v4063
    %v4081 = vunpack.c.l.b16 %v4064
    %v4082 = vunpack.c.l.b16 %v4065
    %v4083 = vunpack.c.l.b16 %v4066
    %v4084 = vunpack.c.l.b16 %v4067
    %v4085 = vunpack.c.l.b16 %v4068
    %v4086 = vunpack.c.l.b16 %v4069
    %v4087 = vpack.c.b16 %v4080, %v4079
    %v4088 = vpack.c.b16 %v4082, %v4081
    %v4089 = vpack.c.b16 %v4084, %v4083
    %v4090 = vpack.c.b16 %v4086, %v4085
    %v4096 = vsel %vm939, %v4061, 0
    %4098 = vmatpush.bf16.msra.mxu0 0
    %4099 = vmatpush.bf16.msra.mxu0 0
    %4100 = vmatpush.bf16.msra.mxu0 0
    %4101 = vmatpush.bf16.msra.mxu0 0
    %4102 = vmatpush.bf16.msra.mxu0 %v4090
    %4103 = vmatpush.bf16.msra.mxu0 %v4089
    %4104 = vmatpush.bf16.msra.mxu0 %v4088
    %4105 = vmatpush.bf16.msra.mxu0 %v4087
    %4106 = vmatmul.bf16.gmra.mxu0 %v4096
    %v4107 = vpop.f32.mrf.mxu0
    %v4108 = vadd.f32 %v4070, %v4107
    %v4109 = vpop.f32.mrf.mxu0
    %4110 = vdwg.mxu0
    %4111 = vst [vmem:[#allocation5] sm:$0xff] %v4108
    // Predicated region
    $region42: #{meshnet_forward.1} parent=1 // pred_check
      _
    $region43: #{meshnet_forward.1} parent=1 // pred_check_branch
      %4113 = sbr.rel (0) target = $region45
    $region44: #{meshnet_forward.1} parent=1 // pred_region
      %4115 = vsyncadd [#allocation4], 0
      %s4117 = sshll.u32 [#allocation5], 4
      %s4118 = int_to_ptr.vmem [resolvable:$true] %s4117
      %s4119 = sshll.u32 %s9, 4
      %s4120 = int_to_ptr.hbm [resolvable:$true] %s4119
      %4122 = dma.vmem_to_hbm [thread:$0]  %s4118, 128, %s4120, [#allocation4]
    $region45: #{meshnet_forward.1} parent=1 // pred_fallthru
      _
    // Predicated region
    $region46: #{meshnet_forward.1} parent=1 // pred_check
      _
    $region47: #{meshnet_forward.1} parent=1 // pred_check_branch
      %4124 = sbr.rel (0) target = $region49
    $region48: #{meshnet_forward.1} parent=1 // pred_region
      %4126 = dma.done [#allocation4], 128
    $region49: #{meshnet_forward.1} parent=1 // pred_fallthru
      _
    %4127 = vsyncpa [#allocation3], 1
    %4128 = vsyncpa [#allocation4], 1

</llo_original>
